<compile_context>
chip_gen: v7x
topology: tpu7x:2x2x1
jax: 0.10.0
libtpu: 0.0.40
codegen_flags: <defaults>
</compile_context>

<pallas_src>
import jax
import jax.numpy as jnp
from jax.experimental import pallas as pl
from jax.experimental.pallas import tpu as pltpu

CLAMP = 2.0  # FrEIA-style soft clamp on the coupling scale (tanh variant)


# ---------------------------------------------------------------------------
# Fused kernel: one permutation-folded coupling block per grid step.  The INN
# state (z_ref) and the lane-partial log-Jacobian (lj_ref) are resident output
# blocks (constant index maps) carried across grid steps.
# ---------------------------------------------------------------------------
def _fused_kernel(x_ref, cond_ref,
                  w1xa_ref, w1ca_ref, sc1a_ref, b1a_ref, w2a_ref, sc2a_ref, b2a_ref,
                  w1xb_ref, w1cb_ref, sc1b_ref, b1b_ref, w2b_ref, sc2b_ref, b2b_ref,
                  z_ref, lj_ref):
    i = pl.program_id(0)
    D = z_ref.shape[1]

    @pl.when(i == 0)
    def _init():
        z_ref[...] = x_ref[...]                 # state <- flattened x
        lj_ref[...] = jnp.zeros_like(lj_ref)    # lane-partial log-J accumulator

    v = z_ref[...]                              # [Bp, D] f32 (carried state)
    cond_b = cond_ref[...].astype(jnp.bfloat16)  # [Bp, F]

    def half_update(v_in, w1x_r, w1c_r, sc1_r, b1_r, w2_r, sc2_r, b2_r):
        # h = relu((v @ W1x_q + cond @ W1c_q) * scale1 + b1)
        #   int8 weights are exact when cast to bf16; per-column scale is applied
        #   once on the small [Bp, hidden] result (dequant folded into epilogue).
        h = (jnp.dot(v_in.astype(jnp.bfloat16), w1x_r[...].astype(jnp.bfloat16),
                     preferred_element_type=jnp.float32)
             + jnp.dot(cond_b, w1c_r[...].astype(jnp.bfloat16),
                       preferred_element_type=jnp.float32))
        h = jnp.maximum(h * sc1_r[...] + b1_r[...], 0.0)          # [Bp, hidden] f32
        a = jnp.dot(h.astype(jnp.bfloat16), w2_r[...].astype(jnp.bfloat16),
                    preferred_element_type=jnp.float32)
        a = a * sc2_r[...] + b2_r[...]                            # [Bp, 2D] f32
        # s/t are scattered to full width D (0 at untouched coords; tanh(0)=0,
        # exp(0)=1 -> skip path exact, and int8 keeps those entries exactly 0).
        s = CLAMP * jnp.tanh(a[:, :D] * (1.0 / CLAMP))
        t = a[:, D:]
        return v_in * jnp.exp(s) + t, s

    v_mid, s_a = half_update(v, w1xa_ref, w1ca_ref, sc1a_ref, b1a_ref,
                             w2a_ref, sc2a_ref, b2a_ref)
    v_new, s_b = half_update(v_mid, w1xb_ref, w1cb_ref, sc1b_ref, b1b_ref,
                             w2b_ref, sc2b_ref, b2b_ref)

    z_ref[...] = v_new                          # carried state, written every step
    lj_ref[...] = lj_ref[...] + s_a + s_b       # lane-local partial sums (VPU adds)


# ---------------------------------------------------------------------------
# Conditioning network (tiny; hoisted to plain XLA per the performance review)
# ---------------------------------------------------------------------------
def cond_features(c_nchw, kp):
    B = c_nchw.shape[0]
    c = c_nchw.reshape(B, c_nchw.shape[1], -1).astype(jnp.float32)
    pooled = jnp.mean(c, axis=-1)                                   # global avg pool
    h = jnp.maximum(pooled @ kp["wc1"] + kp["bc1"], 0.0)
    return jnp.maximum(h @ kp["wc2"] + kp["bc2"], 0.0)              # [B, F]


# ---------------------------------------------------------------------------
# SketchINN.forward(x, c) equivalent:  z, log|det J| = model(x, c=cond_net(c))
# ---------------------------------------------------------------------------
def sketch_inn_forward(x_nchw, c_nchw, params):
    # TODO(synk): rev=True (inverse pass), intermediate_outputs and
    # log_jacobian(run_forward=False) of ReversibleGraphNet are not implemented.
    kp = params["kernel"]
    nb, D, hidden = kp["W1xA"].shape
    F = kp["W1cA"].shape[1]
    twoD = 2 * D

    B = x_nchw.shape[0]
    Bp = ((B + 15) // 16) * 16                   # pad batch to bf16 sublane tile

    x = x_nchw.reshape(B, -1).astype(jnp.float32)
    x_pad = jnp.zeros((Bp, D), jnp.float32).at[:B].set(x)

    cond = cond_features(c_nchw, kp)
    cond_pad = jnp.zeros((Bp, F), jnp.float32).at[:B].set(cond)

    def const_spec(shape):
        return pl.BlockSpec(shape, lambda i, _n=len(shape): (0,) * _n)

    def blk_spec(shape):
        return pl.BlockSpec((None,) + shape, lambda i, _n=len(shape): (i,) + (0,) * _n)

    in_specs = [
        const_spec((Bp, D)),            # x_pad
        const_spec((Bp, F)),            # cond_pad
        blk_spec((D, hidden)),          # W1xA (int8)
        blk_spec((F, hidden)),          # W1cA (int8)
        blk_spec((1, hidden)),          # sc1A
        blk_spec((1, hidden)),          # b1A
        blk_spec((hidden, twoD)),       # W2A  (int8)
        blk_spec((1, twoD)),            # sc2A
        blk_spec((1, twoD)),            # b2A
        blk_spec((D, hidden)),          # W1xB (int8)
        blk_spec((F, hidden)),          # W1cB (int8)
        blk_spec((1, hidden)),          # sc1B
        blk_spec((1, hidden)),          # b1B
        blk_spec((hidden, twoD)),       # W2B  (int8)
        blk_spec((1, twoD)),            # sc2B
        blk_spec((1, twoD)),            # b2B
    ]
    out_shape = (jax.ShapeDtypeStruct((Bp, D), jnp.float32),   # z (carried state)
                 jax.ShapeDtypeStruct((Bp, D), jnp.float32))   # lane-partial log-J
    out_specs = (const_spec((Bp, D)), const_spec((Bp, D)))

    z_pad, lj_pad = pl.pallas_call(
        _fused_kernel,
        out_shape=out_shape,
        grid=(nb,),
        in_specs=in_specs,
        out_specs=out_specs,
        compiler_params=pltpu.CompilerParams(
            dimension_semantics=("arbitrary",)),   # blocks sequential (state carry)
    )(x_pad, cond_pad,
      kp["W1xA"], kp["W1cA"], kp["sc1A"], kp["b1A"], kp["W2A"], kp["sc2A"], kp["b2A"],
      kp["W1xB"], kp["W1cB"], kp["sc1B"], kp["b1B"], kp["W2B"], kp["sc2B"], kp["b2B"])

    # State is carried in original-coordinate order; reorder once to the last
    # block's ordering.  Single cross-lane reduction of the partial log-J here.
    z = z_pad[:B][:, kp["sigma_final"]]
    logj = jnp.sum(lj_pad[:B], axis=-1, keepdims=True)
    return z, logj


# ---------------------------------------------------------------------------
# Parameter init (deterministic; mimics `p.data = 0.02 * torch.randn_like(p)`)
# ---------------------------------------------------------------------------
def init_params(key, *, D, Cc, F, Hc, hidden, n_blocks):
    def randn(k, shape):
        return 0.02 * jax.random.normal(k, shape, jnp.float32)

    keys = jax.random.split(key, 4 + n_blocks)
    params = {
        "cond": {
            "wc1": randn(keys[0], (Cc, Hc)),
            "bc1": randn(keys[1], (1, Hc)),
            "wc2": randn(keys[2], (Hc, F)),
            "bc2": randn(keys[3], (1, F)),
        },
        "blocks": [],
    }
    D1 = D // 2
    D2 = D - D1
    for bi in range(n_blocks):
        ks = jax.random.split(keys[4 + bi], 9)
        params["blocks"].append({
            "perm": jax.random.permutation(ks[0], D),          # FrEIA PermuteRandom
            "wa1": randn(ks[1], (D2 + F, hidden)),
            "ba1": randn(ks[2], (1, hidden)),
            "wa2": randn(ks[3], (hidden, 2 * D1)),
            "ba2": randn(ks[4], (1, 2 * D1)),
            "wb1": randn(ks[5], (D1 + F, hidden)),
            "bb1": randn(ks[6], (1, hidden)),
            "wb2": randn(ks[7], (hidden, 2 * D2)),
            "bb2": randn(ks[8], (1, 2 * D2)),
        })
    return params


def _quantize_per_column(w):
    """Symmetric int8 quantization with a per-output-column f32 scale.
    Exact-zero entries (the permutation scatter) stay exactly zero."""
    maxabs = jnp.max(jnp.abs(w), axis=0, keepdims=True)
    scale = jnp.where(maxabs > 0.0, maxabs / 127.0, 1.0)
    q = jnp.clip(jnp.round(w / scale), -127.0, 127.0).astype(jnp.int8)
    return q, scale.astype(jnp.float32)


def fold_params(raw, *, D, F):
    """Fold the fixed per-block permutations into zero-scattered weight rows /
    columns (state carried in original coordinate order -> runtime kernel is
    gather/concat free), split W1 into x / cond parts, and quantize all coupling
    weights to int8 with per-column scales.  Biases & scales stay f32."""
    D1 = D // 2
    D2 = D - D1
    sigma = jnp.arange(D)
    keys = ["W1xA", "W1cA", "sc1A", "b1A", "W2A", "sc2A", "b2A",
            "W1xB", "W1cB", "sc1B", "b1B", "W2B", "sc2B", "b2B"]
    acc = {k: [] for k in keys}
    for blk in raw["blocks"]:
        hidden = blk["wa1"].shape[1]
        sigma = sigma[blk["perm"]]                 # sigma_k = sigma_{k-1} o perm_k
        mA = sigma[:D1]                            # original coords of x1/y1 half
        mB = sigma[D1:]                            # original coords of x2/y2 half

        # subnet A: s2,t2 = f(x2, cond); x2-rows scattered to mB, outputs to mA
        W1a = jnp.zeros((D + F, hidden), jnp.float32)
        W1a = W1a.at[mB, :].set(blk["wa1"][:D2])
        W1a = W1a.at[D:, :].set(blk["wa1"][D2:])
        W2a = jnp.zeros((hidden, 2 * D), jnp.float32)
        W2a = W2a.at[:, mA].set(blk["wa2"][:, :D1])
        W2a = W2a.at[:, D + mA].set(blk["wa2"][:, D1:])
        b2a = jnp.zeros((1, 2 * D), jnp.float32)
        b2a = b2a.at[0, mA].set(blk["ba2"][0, :D1])
        b2a = b2a.at[0, D + mA].set(blk["ba2"][0, D1:])

        # subnet B: s1,t1 = f(y1, cond); y1-rows scattered to mA, outputs to mB
        W1b = jnp.zeros((D + F, hidden), jnp.float32)
        W1b = W1b.at[mA, :].set(blk["wb1"][:D1])
        W1b = W1b.at[D:, :].set(blk["wb1"][D1:])
        W2b = jnp.zeros((hidden, 2 * D), jnp.float32)
        W2b = W2b.at[:, mB].set(blk["wb2"][:, :D2])
        W2b = W2b.at[:, D + mB].set(blk["wb2"][:, D2:])
        b2b = jnp.zeros((1, 2 * D), jnp.float32)
        b2b = b2b.at[0, mB].set(blk["bb2"][0, :D2])
        b2b = b2b.at[0, D + mB].set(blk["bb2"][0, D2:])

        q1a, s1a = _quantize_per_column(W1a)
        q2a, s2a = _quantize_per_column(W2a)
        q1b, s1b = _quantize_per_column(W1b)
        q2b, s2b = _quantize_per_column(W2b)

        acc["W1xA"].append(q1a[:D]); acc["W1cA"].append(q1a[D:])
        acc["sc1A"].append(s1a);     acc["b1A"].append(blk["ba1"])
        acc["W2A"].append(q2a);      acc["sc2A"].append(s2a); acc["b2A"].append(b2a)
        acc["W1xB"].append(q1b[:D]); acc["W1cB"].append(q1b[D:])
        acc["sc1B"].append(s1b);     acc["b1B"].append(blk["bb1"])
        acc["W2B"].append(q2b);      acc["sc2B"].append(s2b); acc["b2B"].append(b2b)

    out = {k: jnp.stack(v) for k, v in acc.items()}
    out.update({"wc1": raw["cond"]["wc1"], "bc1": raw["cond"]["bc1"],
                "wc2": raw["cond"]["wc2"], "bc2": raw["cond"]["bc2"],
                "sigma_final": sigma})
    return out


# ---------------------------------------------------------------------------
# References
# ---------------------------------------------------------------------------
def reference_forward(x_nchw, c_nchw, raw):
    """Original (unfused, explicit-permutation, f32) algorithm."""
    B = x_nchw.shape[0]
    z = x_nchw.reshape(B, -1).astype(jnp.float32)
    c = c_nchw.reshape(B, c_nchw.shape[1], -1).astype(jnp.float32)
    pooled = jnp.mean(c, axis=-1)
    h = jnp.maximum(pooled @ raw["cond"]["wc1"] + raw["cond"]["bc1"], 0.0)
    cond = jnp.maximum(h @ raw["cond"]["wc2"] + raw["cond"]["bc2"], 0.0)
    logj = jnp.zeros((B, 1), jnp.float32)
    for blk in raw["blocks"]:
        z = z[:, blk["perm"]]
        D1 = z.shape[1] // 2
        D2 = z.shape[1] - D1
        x1, x2 = z[:, :D1], z[:, D1:]
        ha = jnp.maximum(jnp.concatenate([x2, cond], -1) @ blk["wa1"] + blk["ba1"], 0.0)
        a = ha @ blk["wa2"] + blk["ba2"]
        s2 = CLAMP * jnp.tanh(a[:, :D1] / CLAMP); t2 = a[:, D1:]
        y1 = x1 * jnp.exp(s2) + t2
        hb = jnp.maximum(jnp.concatenate([y1, cond], -1) @ blk["wb1"] + blk["bb1"], 0.0)
        b = hb @ blk["wb2"] + blk["bb2"]
        s1 = CLAMP * jnp.tanh(b[:, :D2] / CLAMP); t1 = b[:, D2:]
        y2 = x2 * jnp.exp(s1) + t1
        z = jnp.concatenate([y1, y2], -1)
        logj = logj + jnp.sum(s2, -1, keepdims=True) + jnp.sum(s1, -1, keepdims=True)
    return z, logj


def dequant_reference_forward(x_nchw, c_nchw, kp):
    """f32 replay of exactly the kernel's math (folded perms, dequantized int8
    weights) -- differences vs. the Pallas kernel are bf16-activation only."""
    B = x_nchw.shape[0]
    v = x_nchw.reshape(B, -1).astype(jnp.float32)
    cond = cond_features(c_nchw, kp)
    D = v.shape[1]
    lj = jnp.zeros((B, 1), jnp.float32)
    nb = kp["W1xA"].shape[0]
    for k in range(nb):
        for p in ("A", "B"):
            h = jnp.maximum(
                (v @ kp["W1x" + p][k].astype(jnp.float32)
                 + cond @ kp["W1c" + p][k].astype(jnp.float32)) * kp["sc1" + p][k]
                + kp["b1" + p][k], 0.0)
            a = (h @ kp["W2" + p][k].astype(jnp.float32)) * kp["sc2" + p][k] + kp["b2" + p][k]
            s = CLAMP * jnp.tanh(a[:, :D] / CLAMP)
            t = a[:, D:]
            v = v * jnp.exp(s) + t
            lj = lj + jnp.sum(s, axis=-1, keepdims=True)
    return v[:, kp["sigma_final"]], lj


if __name__ == "__main__":
    key = jax.random.PRNGKey(0)
    kx, kc, kprm = jax.random.split(key, 3)

    B, C, H, W = 2, 4, 16, 16          # data transformed by the INN
    Cc = 4                             # condition ("sketch") channels
    D = C * H * W                      # 1024
    F, Hc, hidden, n_blocks = 128, 128, 256, 3

    x = jax.random.normal(kx, (B, C, H, W), jnp.float32)
    c = jax.random.normal(kc, (B, Cc, H, W), jnp.float32)

    raw = init_params(kprm, D=D, Cc=Cc, F=F, Hc=Hc, hidden=hidden, n_blocks=n_blocks)
    params = {"kernel": fold_params(raw, D=D, F=F)}

    fwd = jax.jit(sketch_inn_forward)
    z, logj = fwd(x, c, params)
    jax.block_until_ready((z, logj))

    assert z.shape == (B, D), z.shape
    assert logj.shape == (B, 1), logj.shape
    assert bool(jnp.all(jnp.isfinite(z))) and bool(jnp.all(jnp.isfinite(logj)))

    # (1) Tight check vs. an f32 replay of exactly the kernel's math (dequantized
    #     int8 weights) -- only bf16-activation rounding differs.
    z_dq, lj_dq = dequant_reference_forward(x, c, params["kernel"])
    assert float(jnp.max(jnp.abs(z - z_dq))) < 0.1, float(jnp.max(jnp.abs(z - z_dq)))
    assert float(jnp.max(jnp.abs(logj - lj_dq))) < 0.5, float(jnp.max(jnp.abs(logj - lj_dq)))

    # (2) Sanity check vs. the original float algorithm (adds int8 quant error).
    z_ref, logj_ref = reference_forward(x, c, raw)
    assert float(jnp.max(jnp.abs(z - z_ref))) < 0.25, float(jnp.max(jnp.abs(z - z_ref)))
    assert float(jnp.max(jnp.abs(logj - logj_ref))) < 2.0, float(jnp.max(jnp.abs(logj - logj_ref)))

    print("KERNEL_OK")
</pallas_src>

<mosaic_0001>
module attributes {stable_mosaic.version = 11 : i64} {
  func.func @_fused_kernel(%arg0: i32, %arg1: memref<16x1024xf32, #tpu.memory_space<vmem>>, %arg2: memref<16x128xf32, #tpu.memory_space<vmem>>, %arg3: memref<1x1024x256xi8, #tpu.memory_space<vmem>>, %arg4: memref<1x128x256xi8, #tpu.memory_space<vmem>>, %arg5: memref<1x1x256xf32, #tpu.memory_space<vmem>>, %arg6: memref<1x1x256xf32, #tpu.memory_space<vmem>>, %arg7: memref<1x256x2048xi8, #tpu.memory_space<vmem>>, %arg8: memref<1x1x2048xf32, #tpu.memory_space<vmem>>, %arg9: memref<1x1x2048xf32, #tpu.memory_space<vmem>>, %arg10: memref<1x1024x256xi8, #tpu.memory_space<vmem>>, %arg11: memref<1x128x256xi8, #tpu.memory_space<vmem>>, %arg12: memref<1x1x256xf32, #tpu.memory_space<vmem>>, %arg13: memref<1x1x256xf32, #tpu.memory_space<vmem>>, %arg14: memref<1x256x2048xi8, #tpu.memory_space<vmem>>, %arg15: memref<1x1x2048xf32, #tpu.memory_space<vmem>>, %arg16: memref<1x1x2048xf32, #tpu.memory_space<vmem>>, %arg17: memref<16x1024xf32, #tpu.memory_space<vmem>>, %arg18: memref<16x1024xf32, #tpu.memory_space<vmem>>) attributes {dimension_semantics = [#tpu.dimension_semantics<arbitrary>], iteration_bounds = array<i64: 3>, scalar_prefetch = 0 : i64, scratch_operands = 0 : i64, tpu.core_type = #tpu.core_type<tc>, window_params = [{pipeline_mode = #tpu.pipeline_mode<synchronous>, transform_indices = @transform_0, window_bounds = array<i64: 16, 1024>}, {pipeline_mode = #tpu.pipeline_mode<synchronous>, transform_indices = @transform_1, window_bounds = array<i64: 16, 128>}, {transform_indices = @transform_2, window_bounds = array<i64: 1, 1024, 256>}, {transform_indices = @transform_3, window_bounds = array<i64: 1, 128, 256>}, {transform_indices = @transform_4, window_bounds = array<i64: 1, 1, 256>}, {transform_indices = @transform_5, window_bounds = array<i64: 1, 1, 256>}, {transform_indices = @transform_6, window_bounds = array<i64: 1, 256, 2048>}, {transform_indices = @transform_7, window_bounds = array<i64: 1, 1, 2048>}, {transform_indices = @transform_8, window_bounds = array<i64: 1, 1, 2048>}, {transform_indices = @transform_9, window_bounds = array<i64: 1, 1024, 256>}, {transform_indices = @transform_10, window_bounds = array<i64: 1, 128, 256>}, {transform_indices = @transform_11, window_bounds = array<i64: 1, 1, 256>}, {transform_indices = @transform_12, window_bounds = array<i64: 1, 1, 256>}, {transform_indices = @transform_13, window_bounds = array<i64: 1, 256, 2048>}, {transform_indices = @transform_14, window_bounds = array<i64: 1, 1, 2048>}, {transform_indices = @transform_15, window_bounds = array<i64: 1, 1, 2048>}, {pipeline_mode = #tpu.pipeline_mode<synchronous>, transform_indices = @transform_16, window_bounds = array<i64: 16, 1024>}, {pipeline_mode = #tpu.pipeline_mode<synchronous>, transform_indices = @transform_17, window_bounds = array<i64: 16, 1024>}]} {
    %c0_i32 = arith.constant 0 : i32
    %0 = arith.cmpi eq, %arg0, %c0_i32 : i32
    %1 = arith.extui %0 : i1 to i32
    %c0_i32_0 = arith.constant 0 : i32
    %2 = arith.cmpi ne, %1, %c0_i32_0 : i32
    scf.if %2 {
      %c0_63 = arith.constant 0 : index
      %c0_64 = arith.constant 0 : index
      %97 = vector.load %arg1[%c0_63, %c0_64] : memref<16x1024xf32, #tpu.memory_space<vmem>>, vector<16x1024xf32>
      %c0_65 = arith.constant 0 : index
      %c0_66 = arith.constant 0 : index
      %98 = vector.load %arg17[%c0_65, %c0_66] : memref<16x1024xf32, #tpu.memory_space<vmem>>, vector<16x1024xf32>
      tpu.vector_store %arg17[%c0_65, %c0_66], %97 {strides = array<i32>} : memref<16x1024xf32, #tpu.memory_space<vmem>>, vector<16x1024xf32>,
      %cst_67 = arith.constant 0.000000e+00 : f32
      %99 = vector.broadcast %cst_67 : f32 to vector<16x1024xf32>
      %c0_68 = arith.constant 0 : index
      %c0_69 = arith.constant 0 : index
      %100 = vector.load %arg18[%c0_68, %c0_69] : memref<16x1024xf32, #tpu.memory_space<vmem>>, vector<16x1024xf32>
      tpu.vector_store %arg18[%c0_68, %c0_69], %99 {strides = array<i32>} : memref<16x1024xf32, #tpu.memory_space<vmem>>, vector<16x1024xf32>,
    } else {
    }
    %c0 = arith.constant 0 : index
    %c0_1 = arith.constant 0 : index
    %3 = vector.load %arg17[%c0, %c0_1] : memref<16x1024xf32, #tpu.memory_space<vmem>>, vector<16x1024xf32>
    %c0_2 = arith.constant 0 : index
    %c0_3 = arith.constant 0 : index
    %4 = vector.load %arg2[%c0_2, %c0_3] : memref<16x128xf32, #tpu.memory_space<vmem>>, vector<16x128xf32>
    %5 = arith.truncf %4 : vector<16x128xf32> to vector<16x128xbf16>
    %6 = arith.truncf %3 : vector<16x1024xf32> to vector<16x1024xbf16>
    %c0_4 = arith.constant 0 : index
    %c0_5 = arith.constant 0 : index
    %c0_6 = arith.constant 0 : index
    %7 = vector.load %arg3[%c0_4, %c0_5, %c0_6] : memref<1x1024x256xi8, #tpu.memory_space<vmem>>, vector<1x1024x256xi8>
    %8 = vector.shape_cast %7 : vector<1x1024x256xi8> to vector<1024x256xi8>
    %9 = arith.sitofp %8 : vector<1024x256xi8> to vector<1024x256xbf16>
    %cst = arith.constant dense<0.000000e+00> : vector<16x256xf32>
    %10 = tpu.matmul %6, %9, %cst {dimension_numbers = #tpu.dot_dimension_numbers<[1], [0], [0], [1], [0, 0, 1, 1], [], []>} : vector<16x1024xbf16>, vector<1024x256xbf16>, vector<16x256xf32> -> vector<16x256xf32>
    %c0_7 = arith.constant 0 : index
    %c0_8 = arith.constant 0 : index
    %c0_9 = arith.constant 0 : index
    %11 = vector.load %arg4[%c0_7, %c0_8, %c0_9] : memref<1x128x256xi8, #tpu.memory_space<vmem>>, vector<1x128x256xi8>
    %12 = vector.shape_cast %11 : vector<1x128x256xi8> to vector<128x256xi8>
    %13 = arith.sitofp %12 : vector<128x256xi8> to vector<128x256xbf16>
    %cst_10 = arith.constant dense<0.000000e+00> : vector<16x256xf32>
    %14 = tpu.matmul %5, %13, %cst_10 {dimension_numbers = #tpu.dot_dimension_numbers<[1], [0], [0], [1], [0, 0, 1, 1], [], []>} : vector<16x128xbf16>, vector<128x256xbf16>, vector<16x256xf32> -> vector<16x256xf32>
    %15 = arith.addf %10, %14 : vector<16x256xf32>
    %c0_11 = arith.constant 0 : index
    %c0_12 = arith.constant 0 : index
    %c0_13 = arith.constant 0 : index
    %16 = vector.load %arg5[%c0_11, %c0_12, %c0_13] : memref<1x1x256xf32, #tpu.memory_space<vmem>>, vector<1x1x256xf32>
    %17 = vector.shape_cast %16 : vector<1x1x256xf32> to vector<1x256xf32>
    %18 = vector.broadcast %17 : vector<1x256xf32> to vector<16x256xf32>
    %19 = arith.mulf %15, %18 : vector<16x256xf32>
    %c0_14 = arith.constant 0 : index
    %c0_15 = arith.constant 0 : index
    %c0_16 = arith.constant 0 : index
    %20 = vector.load %arg6[%c0_14, %c0_15, %c0_16] : memref<1x1x256xf32, #tpu.memory_space<vmem>>, vector<1x1x256xf32>
    %21 = vector.shape_cast %20 : vector<1x1x256xf32> to vector<1x256xf32>
    %22 = vector.broadcast %21 : vector<1x256xf32> to vector<16x256xf32>
    %23 = arith.addf %19, %22 : vector<16x256xf32>
    %cst_17 = arith.constant 0.000000e+00 : f32
    %24 = vector.broadcast %cst_17 : f32 to vector<16x256xf32>
    %25 = arith.maximumf %23, %24 : vector<16x256xf32>
    %26 = arith.truncf %25 : vector<16x256xf32> to vector<16x256xbf16>
    %c0_18 = arith.constant 0 : index
    %c0_19 = arith.constant 0 : index
    %c0_20 = arith.constant 0 : index
    %27 = vector.load %arg7[%c0_18, %c0_19, %c0_20] : memref<1x256x2048xi8, #tpu.memory_space<vmem>>, vector<1x256x2048xi8>
    %28 = vector.shape_cast %27 : vector<1x256x2048xi8> to vector<256x2048xi8>
    %29 = arith.sitofp %28 : vector<256x2048xi8> to vector<256x2048xbf16>
    %cst_21 = arith.constant dense<0.000000e+00> : vector<16x2048xf32>
    %30 = tpu.matmul %26, %29, %cst_21 {dimension_numbers = #tpu.dot_dimension_numbers<[1], [0], [0], [1], [0, 0, 1, 1], [], []>} : vector<16x256xbf16>, vector<256x2048xbf16>, vector<16x2048xf32> -> vector<16x2048xf32>
    %c0_22 = arith.constant 0 : index
    %c0_23 = arith.constant 0 : index
    %c0_24 = arith.constant 0 : index
    %31 = vector.load %arg8[%c0_22, %c0_23, %c0_24] : memref<1x1x2048xf32, #tpu.memory_space<vmem>>, vector<1x1x2048xf32>
    %32 = vector.shape_cast %31 : vector<1x1x2048xf32> to vector<1x2048xf32>
    %33 = vector.broadcast %32 : vector<1x2048xf32> to vector<16x2048xf32>
    %34 = arith.mulf %30, %33 : vector<16x2048xf32>
    %c0_25 = arith.constant 0 : index
    %c0_26 = arith.constant 0 : index
    %c0_27 = arith.constant 0 : index
    %35 = vector.load %arg9[%c0_25, %c0_26, %c0_27] : memref<1x1x2048xf32, #tpu.memory_space<vmem>>, vector<1x1x2048xf32>
    %36 = vector.shape_cast %35 : vector<1x1x2048xf32> to vector<1x2048xf32>
    %37 = vector.broadcast %36 : vector<1x2048xf32> to vector<16x2048xf32>
    %38 = arith.addf %34, %37 : vector<16x2048xf32>
    %39 = vector.extract_strided_slice %38 {offsets = [0, 0], sizes = [16, 1024], strides = [1, 1]} : vector<16x2048xf32> to vector<16x1024xf32>
    %cst_28 = arith.constant 5.000000e-01 : f32
    %40 = vector.broadcast %cst_28 : f32 to vector<16x1024xf32>
    %41 = arith.mulf %39, %40 : vector<16x1024xf32>
    %42 = math.tanh %41 : vector<16x1024xf32>
    %cst_29 = arith.constant 2.000000e+00 : f32
    %43 = vector.broadcast %cst_29 : f32 to vector<16x1024xf32>
    %44 = arith.mulf %43, %42 : vector<16x1024xf32>
    %45 = vector.extract_strided_slice %38 {offsets = [0, 1024], sizes = [16, 1024], strides = [1, 1]} : vector<16x2048xf32> to vector<16x1024xf32>
    %46 = math.exp %44 : vector<16x1024xf32>
    %47 = arith.mulf %3, %46 : vector<16x1024xf32>
    %48 = arith.addf %47, %45 : vector<16x1024xf32>
    %49 = arith.truncf %48 : vector<16x1024xf32> to vector<16x1024xbf16>
    %c0_30 = arith.constant 0 : index
    %c0_31 = arith.constant 0 : index
    %c0_32 = arith.constant 0 : index
    %50 = vector.load %arg10[%c0_30, %c0_31, %c0_32] : memref<1x1024x256xi8, #tpu.memory_space<vmem>>, vector<1x1024x256xi8>
    %51 = vector.shape_cast %50 : vector<1x1024x256xi8> to vector<1024x256xi8>
    %52 = arith.sitofp %51 : vector<1024x256xi8> to vector<1024x256xbf16>
    %cst_33 = arith.constant dense<0.000000e+00> : vector<16x256xf32>
    %53 = tpu.matmul %49, %52, %cst_33 {dimension_numbers = #tpu.dot_dimension_numbers<[1], [0], [0], [1], [0, 0, 1, 1], [], []>} : vector<16x1024xbf16>, vector<1024x256xbf16>, vector<16x256xf32> -> vector<16x256xf32>
    %c0_34 = arith.constant 0 : index
    %c0_35 = arith.constant 0 : index
    %c0_36 = arith.constant 0 : index
    %54 = vector.load %arg11[%c0_34, %c0_35, %c0_36] : memref<1x128x256xi8, #tpu.memory_space<vmem>>, vector<1x128x256xi8>
    %55 = vector.shape_cast %54 : vector<1x128x256xi8> to vector<128x256xi8>
    %56 = arith.sitofp %55 : vector<128x256xi8> to vector<128x256xbf16>
    %cst_37 = arith.constant dense<0.000000e+00> : vector<16x256xf32>
    %57 = tpu.matmul %5, %56, %cst_37 {dimension_numbers = #tpu.dot_dimension_numbers<[1], [0], [0], [1], [0, 0, 1, 1], [], []>} : vector<16x128xbf16>, vector<128x256xbf16>, vector<16x256xf32> -> vector<16x256xf32>
    %58 = arith.addf %53, %57 : vector<16x256xf32>
    %c0_38 = arith.constant 0 : index
    %c0_39 = arith.constant 0 : index
    %c0_40 = arith.constant 0 : index
    %59 = vector.load %arg12[%c0_38, %c0_39, %c0_40] : memref<1x1x256xf32, #tpu.memory_space<vmem>>, vector<1x1x256xf32>
    %60 = vector.shape_cast %59 : vector<1x1x256xf32> to vector<1x256xf32>
    %61 = vector.broadcast %60 : vector<1x256xf32> to vector<16x256xf32>
    %62 = arith.mulf %58, %61 : vector<16x256xf32>
    %c0_41 = arith.constant 0 : index
    %c0_42 = arith.constant 0 : index
    %c0_43 = arith.constant 0 : index
    %63 = vector.load %arg13[%c0_41, %c0_42, %c0_43] : memref<1x1x256xf32, #tpu.memory_space<vmem>>, vector<1x1x256xf32>
    %64 = vector.shape_cast %63 : vector<1x1x256xf32> to vector<1x256xf32>
    %65 = vector.broadcast %64 : vector<1x256xf32> to vector<16x256xf32>
    %66 = arith.addf %62, %65 : vector<16x256xf32>
    %cst_44 = arith.constant 0.000000e+00 : f32
    %67 = vector.broadcast %cst_44 : f32 to vector<16x256xf32>
    %68 = arith.maximumf %66, %67 : vector<16x256xf32>
    %69 = arith.truncf %68 : vector<16x256xf32> to vector<16x256xbf16>
    %c0_45 = arith.constant 0 : index
    %c0_46 = arith.constant 0 : index
    %c0_47 = arith.constant 0 : index
    %70 = vector.load %arg14[%c0_45, %c0_46, %c0_47] : memref<1x256x2048xi8, #tpu.memory_space<vmem>>, vector<1x256x2048xi8>
    %71 = vector.shape_cast %70 : vector<1x256x2048xi8> to vector<256x2048xi8>
    %72 = arith.sitofp %71 : vector<256x2048xi8> to vector<256x2048xbf16>
    %cst_48 = arith.constant dense<0.000000e+00> : vector<16x2048xf32>
    %73 = tpu.matmul %69, %72, %cst_48 {dimension_numbers = #tpu.dot_dimension_numbers<[1], [0], [0], [1], [0, 0, 1, 1], [], []>} : vector<16x256xbf16>, vector<256x2048xbf16>, vector<16x2048xf32> -> vector<16x2048xf32>
    %c0_49 = arith.constant 0 : index
    %c0_50 = arith.constant 0 : index
    %c0_51 = arith.constant 0 : index
    %74 = vector.load %arg15[%c0_49, %c0_50, %c0_51] : memref<1x1x2048xf32, #tpu.memory_space<vmem>>, vector<1x1x2048xf32>
    %75 = vector.shape_cast %74 : vector<1x1x2048xf32> to vector<1x2048xf32>
    %76 = vector.broadcast %75 : vector<1x2048xf32> to vector<16x2048xf32>
    %77 = arith.mulf %73, %76 : vector<16x2048xf32>
    %c0_52 = arith.constant 0 : index
    %c0_53 = arith.constant 0 : index
    %c0_54 = arith.constant 0 : index
    %78 = vector.load %arg16[%c0_52, %c0_53, %c0_54] : memref<1x1x2048xf32, #tpu.memory_space<vmem>>, vector<1x1x2048xf32>
    %79 = vector.shape_cast %78 : vector<1x1x2048xf32> to vector<1x2048xf32>
    %80 = vector.broadcast %79 : vector<1x2048xf32> to vector<16x2048xf32>
    %81 = arith.addf %77, %80 : vector<16x2048xf32>
    %82 = vector.extract_strided_slice %81 {offsets = [0, 0], sizes = [16, 1024], strides = [1, 1]} : vector<16x2048xf32> to vector<16x1024xf32>
    %cst_55 = arith.constant 5.000000e-01 : f32
    %83 = vector.broadcast %cst_55 : f32 to vector<16x1024xf32>
    %84 = arith.mulf %82, %83 : vector<16x1024xf32>
    %85 = math.tanh %84 : vector<16x1024xf32>
    %cst_56 = arith.constant 2.000000e+00 : f32
    %86 = vector.broadcast %cst_56 : f32 to vector<16x1024xf32>
    %87 = arith.mulf %86, %85 : vector<16x1024xf32>
    %88 = vector.extract_strided_slice %81 {offsets = [0, 1024], sizes = [16, 1024], strides = [1, 1]} : vector<16x2048xf32> to vector<16x1024xf32>
    %89 = math.exp %87 : vector<16x1024xf32>
    %90 = arith.mulf %48, %89 : vector<16x1024xf32>
    %91 = arith.addf %90, %88 : vector<16x1024xf32>
    %c0_57 = arith.constant 0 : index
    %c0_58 = arith.constant 0 : index
    %92 = vector.load %arg17[%c0_57, %c0_58] : memref<16x1024xf32, #tpu.memory_space<vmem>>, vector<16x1024xf32>
    tpu.vector_store %arg17[%c0_57, %c0_58], %91 {strides = array<i32>} : memref<16x1024xf32, #tpu.memory_space<vmem>>, vector<16x1024xf32>,
    %c0_59 = arith.constant 0 : index
    %c0_60 = arith.constant 0 : index
    %93 = vector.load %arg18[%c0_59, %c0_60] : memref<16x1024xf32, #tpu.memory_space<vmem>>, vector<16x1024xf32>
    %94 = arith.addf %93, %44 : vector<16x1024xf32>
    %95 = arith.addf %94, %87 : vector<16x1024xf32>
    %c0_61 = arith.constant 0 : index
    %c0_62 = arith.constant 0 : index
    %96 = vector.load %arg18[%c0_61, %c0_62] : memref<16x1024xf32, #tpu.memory_space<vmem>>, vector<16x1024xf32>
    tpu.vector_store %arg18[%c0_61, %c0_62], %95 {strides = array<i32>} : memref<16x1024xf32, #tpu.memory_space<vmem>>, vector<16x1024xf32>,
    return
  }
  func.func @transform_0(%arg0: i32) -> (i32, i32) {
    %c0_i32 = arith.constant 0 : i32
    %c0_i32_0 = arith.constant 0 : i32
    %c0_i32_1 = arith.constant 0 : i32
    return %c0_i32, %c0_i32_0 : i32, i32
  }
  func.func @transform_1(%arg0: i32) -> (i32, i32) {
    %c0_i32 = arith.constant 0 : i32
    %c0_i32_0 = arith.constant 0 : i32
    %c0_i32_1 = arith.constant 0 : i32
    return %c0_i32, %c0_i32_0 : i32, i32
  }
  func.func @transform_2(%arg0: i32) -> (i32, i32, i32) {
    %c0_i32 = arith.constant 0 : i32
    %c0_i32_0 = arith.constant 0 : i32
    %c0_i32_1 = arith.constant 0 : i32
    return %arg0, %c0_i32, %c0_i32_0 : i32, i32, i32
  }
  func.func @transform_3(%arg0: i32) -> (i32, i32, i32) {
    %c0_i32 = arith.constant 0 : i32
    %c0_i32_0 = arith.constant 0 : i32
    %c0_i32_1 = arith.constant 0 : i32
    return %arg0, %c0_i32, %c0_i32_0 : i32, i32, i32
  }
  func.func @transform_4(%arg0: i32) -> (i32, i32, i32) {
    %c0_i32 = arith.constant 0 : i32
    %c0_i32_0 = arith.constant 0 : i32
    %c0_i32_1 = arith.constant 0 : i32
    return %arg0, %c0_i32, %c0_i32_0 : i32, i32, i32
  }
  func.func @transform_5(%arg0: i32) -> (i32, i32, i32) {
    %c0_i32 = arith.constant 0 : i32
    %c0_i32_0 = arith.constant 0 : i32
    %c0_i32_1 = arith.constant 0 : i32
    return %arg0, %c0_i32, %c0_i32_0 : i32, i32, i32
  }
  func.func @transform_6(%arg0: i32) -> (i32, i32, i32) {
    %c0_i32 = arith.constant 0 : i32
    %c0_i32_0 = arith.constant 0 : i32
    %c0_i32_1 = arith.constant 0 : i32
    return %arg0, %c0_i32, %c0_i32_0 : i32, i32, i32
  }
  func.func @transform_7(%arg0: i32) -> (i32, i32, i32) {
    %c0_i32 = arith.constant 0 : i32
    %c0_i32_0 = arith.constant 0 : i32
    %c0_i32_1 = arith.constant 0 : i32
    return %arg0, %c0_i32, %c0_i32_0 : i32, i32, i32
  }
  func.func @transform_8(%arg0: i32) -> (i32, i32, i32) {
    %c0_i32 = arith.constant 0 : i32
    %c0_i32_0 = arith.constant 0 : i32
    %c0_i32_1 = arith.constant 0 : i32
    return %arg0, %c0_i32, %c0_i32_0 : i32, i32, i32
  }
  func.func @transform_9(%arg0: i32) -> (i32, i32, i32) {
    %c0_i32 = arith.constant 0 : i32
    %c0_i32_0 = arith.constant 0 : i32
    %c0_i32_1 = arith.constant 0 : i32
    return %arg0, %c0_i32, %c0_i32_0 : i32, i32, i32
  }
  func.func @transform_10(%arg0: i32) -> (i32, i32, i32) {
    %c0_i32 = arith.constant 0 : i32
    %c0_i32_0 = arith.constant 0 : i32
    %c0_i32_1 = arith.constant 0 : i32
    return %arg0, %c0_i32, %c0_i32_0 : i32, i32, i32
  }
  func.func @transform_11(%arg0: i32) -> (i32, i32, i32) {
    %c0_i32 = arith.constant 0 : i32
    %c0_i32_0 = arith.constant 0 : i32
    %c0_i32_1 = arith.constant 0 : i32
    return %arg0, %c0_i32, %c0_i32_0 : i32, i32, i32
  }
  func.func @transform_12(%arg0: i32) -> (i32, i32, i32) {
    %c0_i32 = arith.constant 0 : i32
    %c0_i32_0 = arith.constant 0 : i32
    %c0_i32_1 = arith.constant 0 : i32
    return %arg0, %c0_i32, %c0_i32_0 : i32, i32, i32
  }
  func.func @transform_13(%arg0: i32) -> (i32, i32, i32) {
    %c0_i32 = arith.constant 0 : i32
    %c0_i32_0 = arith.constant 0 : i32
    %c0_i32_1 = arith.constant 0 : i32
    return %arg0, %c0_i32, %c0_i32_0 : i32, i32, i32
  }
  func.func @transform_14(%arg0: i32) -> (i32, i32, i32) {
    %c0_i32 = arith.constant 0 : i32
    %c0_i32_0 = arith.constant 0 : i32
    %c0_i32_1 = arith.constant 0 : i32
    return %arg0, %c0_i32, %c0_i32_0 : i32, i32, i32
  }
  func.func @transform_15(%arg0: i32) -> (i32, i32, i32) {
    %c0_i32 = arith.constant 0 : i32
    %c0_i32_0 = arith.constant 0 : i32
    %c0_i32_1 = arith.constant 0 : i32
    return %arg0, %c0_i32, %c0_i32_0 : i32, i32, i32
  }
  func.func @transform_16(%arg0: i32) -> (i32, i32) {
    %c0_i32 = arith.constant 0 : i32
    %c0_i32_0 = arith.constant 0 : i32
    %c0_i32_1 = arith.constant 0 : i32
    return %c0_i32, %c0_i32_0 : i32, i32
  }
  func.func @transform_17(%arg0: i32) -> (i32, i32) {
    %c0_i32 = arith.constant 0 : i32
    %c0_i32_0 = arith.constant 0 : i32
    %c0_i32_1 = arith.constant 0 : i32
    return %c0_i32, %c0_i32_0 : i32, i32
  }
}

</mosaic_0001>

<llo_original>
// kernel: sketch_inn_forward.1
$region0: #{sketch_inn_forward.1}
  #allocation0 [shape = 'u32[]', space=smem, size = 0x4, offset = 0x4, fixed_abs, tag = 'smem constant byte address 0x4 - core index']
  #allocation1 [shape = 'u32[144,128]{1,0:T(1,128)}', space=vmem, size = 0x12000, scoped, tag = 'internal scratch']
  %s0 = inlined_call_operand.vmem [shape: f32[16,1024], index: 0, kind: input, shape index: {}]
  %s1 = inlined_call_operand.vmem [shape: f32[16,128], index: 1, kind: input, shape index: {}]
  %s2 = inlined_call_operand.hbm [shape: s8[3,1024,256], index: 2, kind: input, shape index: {}]
  %s3 = inlined_call_operand.hbm [shape: s8[3,128,256], index: 3, kind: input, shape index: {}]
  %s4 = inlined_call_operand.hbm [shape: f32[3,1,256], index: 4, kind: input, shape index: {}]
  %s5 = inlined_call_operand.hbm [shape: f32[3,1,256], index: 5, kind: input, shape index: {}]
  %s6 = inlined_call_operand.hbm [shape: s8[3,256,2048], index: 6, kind: input, shape index: {}]
  %s7 = inlined_call_operand.hbm [shape: f32[3,1,2048], index: 7, kind: input, shape index: {}]
  %s8 = inlined_call_operand.hbm [shape: f32[3,1,2048], index: 8, kind: input, shape index: {}]
  %s9 = inlined_call_operand.hbm [shape: s8[3,1024,256], index: 9, kind: input, shape index: {}]
  %s10 = inlined_call_operand.hbm [shape: s8[3,128,256], index: 10, kind: input, shape index: {}]
  %s11 = inlined_call_operand.hbm [shape: f32[3,1,256], index: 11, kind: input, shape index: {}]
  %s12 = inlined_call_operand.hbm [shape: f32[3,1,256], index: 12, kind: input, shape index: {}]
  %s13 = inlined_call_operand.hbm [shape: s8[3,256,2048], index: 13, kind: input, shape index: {}]
  %s14 = inlined_call_operand.hbm [shape: f32[3,1,2048], index: 14, kind: input, shape index: {}]
  %s15 = inlined_call_operand.hbm [shape: f32[3,1,2048], index: 15, kind: input, shape index: {}]
  %s16 = inlined_call_operand.vmem [shape: f32[16,1024], index: 16, kind: output, shape index: {0}]
  %s17 = inlined_call_operand.vmem [shape: f32[16,1024], index: 17, kind: output, shape index: {1}]
  %18 = xla_tuple %s16, %s17
  %s19 = sld [smem:[#allocation0]]
  $region165: #{sketch_inn_forward.1} parent=0
    _
  %s21 = ssub.s32 1, %s19
  %s22 = scalar_select 0, %s21, %s19
  $region1: #{sketch_inn_forward.1} parent=0
    #allocation2 [shape = 'u8[524288]{0}', space=vmem, size = 0x80000, scoped, tag = 'input window, operand 2']
    #allocation3 [shape = 's32[2]{0}', space=sflag, size = 0x8, scoped, tag = 'scoped memory for sketch_inn_forward.1']
    #allocation4 [shape = 'u8[65536]{0}', space=vmem, size = 0x10000, scoped, tag = 'input window, operand 3']
    #allocation5 [shape = 's32[2]{0}', space=sflag, size = 0x8, scoped, tag = 'scoped memory for sketch_inn_forward.1']
    #allocation6 [shape = 'u8[2048]{0}', space=vmem, size = 0x800, scoped, tag = 'input window, operand 4']
    #allocation7 [shape = 'u8[2048]{0}', space=vmem, size = 0x800, scoped, tag = 'input window, operand 5']
    #allocation8 [shape = 's32[2]{0}', space=sflag, size = 0x8, scoped, tag = 'scoped memory for sketch_inn_forward.1']
    #allocation9 [shape = 'u8[1048576]{0}', space=vmem, size = 0x100000, scoped, tag = 'input window, operand 6']
    #allocation10 [shape = 'u8[16384]{0}', space=vmem, size = 0x4000, scoped, tag = 'input window, operand 7']
    #allocation11 [shape = 's32[2]{0}', space=sflag, size = 0x8, scoped, tag = 'scoped memory for sketch_inn_forward.1']
    #allocation12 [shape = 'u8[16384]{0}', space=vmem, size = 0x4000, scoped, tag = 'input window, operand 8']
    #allocation13 [shape = 'u8[524288]{0}', space=vmem, size = 0x80000, scoped, tag = 'input window, operand 9']
    #allocation14 [shape = 's32[2]{0}', space=sflag, size = 0x8, scoped, tag = 'scoped memory for sketch_inn_forward.1']
    #allocation15 [shape = 'u8[65536]{0}', space=vmem, size = 0x10000, scoped, tag = 'input window, operand 10']
    #allocation16 [shape = 'u8[2048]{0}', space=vmem, size = 0x800, scoped, tag = 'input window, operand 11']
    #allocation17 [shape = 's32[2]{0}', space=sflag, size = 0x8, scoped, tag = 'scoped memory for sketch_inn_forward.1']
    #allocation18 [shape = 'u8[2048]{0}', space=vmem, size = 0x800, scoped, tag = 'input window, operand 12']
    #allocation19 [shape = 'u8[1048576]{0}', space=vmem, size = 0x100000, scoped, tag = 'input window, operand 13']
    #allocation20 [shape = 's32[2]{0}', space=sflag, size = 0x8, scoped, tag = 'scoped memory for sketch_inn_forward.1']
    #allocation21 [shape = 'u8[16384]{0}', space=vmem, size = 0x4000, scoped, tag = 'input window, operand 14']
    #allocation22 [shape = 'u8[16384]{0}', space=vmem, size = 0x4000, scoped, tag = 'input window, operand 15']
    #allocation23 [shape = 's32[2]{0}', space=sflag, size = 0x8, scoped, tag = 'scoped memory for sketch_inn_forward.1']
    %23 = vsyncpa [#allocation3], 0
    %s24 = scalar_lea.sflag [#allocation3], 1
    %25 = vsyncpa %s24, 0
    %26 = vsyncpa [#allocation5], 0
    %s27 = scalar_lea.sflag [#allocation5], 1
    %28 = vsyncpa %s27, 0
    %29 = vsyncpa [#allocation8], 0
    %s30 = scalar_lea.sflag [#allocation8], 1
    %31 = vsyncpa %s30, 0
    %32 = vsyncpa [#allocation11], 0
    %s33 = scalar_lea.sflag [#allocation11], 1
    %34 = vsyncpa %s33, 0
    %35 = vsyncpa [#allocation14], 0
    %s36 = scalar_lea.sflag [#allocation14], 1
    %37 = vsyncpa %s36, 0
    %38 = vsyncpa [#allocation17], 0
    %s39 = scalar_lea.sflag [#allocation17], 1
    %40 = vsyncpa %s39, 0
    %41 = vsyncpa [#allocation20], 0
    %s42 = scalar_lea.sflag [#allocation20], 1
    %43 = vsyncpa %s42, 0
    %44 = vsyncpa [#allocation23], 0
    %s45 = scalar_lea.sflag [#allocation23], 1
    %46 = vsyncpa %s45, 0
    loop: start=0, step=1, limit=5
    $region2: #{sketch_inn_forward.1} parent=1 // loop_pre_header
      _
    $region3: #{sketch_inn_forward.1} parent=1 // loop_header
      %s48 = sphi 0, %s52
      %p49 = scmp.ge.s32.totalorder %s48, 5
      %s56 = sphi 0, %s56
      %s58 = sphi 0, %s56
      %s59 = sphi 0, %s58
      %s73 = sphi 0, %s59
      %s77 = sphi 0, %s77
      %s79 = sphi 0, %s77
      %s80 = sphi 0, %s79
      %s94 = sphi 0, %s80
      %s100 = sphi 0, %s102
      %s103 = sphi 0, %s100
      %s104 = sphi 0, %s103
      %s120 = sphi 0, %s104
      %s126 = sphi 0, %s128
      %s129 = sphi 0, %s126
      %s130 = sphi 0, %s129
      %s146 = sphi 0, %s130
      %s152 = sphi 0, %s154
      %s155 = sphi 0, %s152
      %s156 = sphi 0, %s155
      %s172 = sphi 0, %s156
      %s178 = sphi 0, %s180
      %s181 = sphi 0, %s178
      %s182 = sphi 0, %s181
      %s198 = sphi 0, %s182
      %s204 = sphi 0, %s206
      %s207 = sphi 0, %s204
      %s208 = sphi 0, %s207
      %s224 = sphi 0, %s208
      %s230 = sphi 0, %s232
      %s233 = sphi 0, %s230
      %s234 = sphi 0, %s233
      %s250 = sphi 0, %s234
      %s256 = sphi 0, %s258
      %s259 = sphi 0, %s256
      %s260 = sphi 0, %s259
      %s276 = sphi 0, %s260
      %s282 = sphi 0, %s284
      %s285 = sphi 0, %s282
      %s286 = sphi 0, %s285
      %s302 = sphi 0, %s286
      %s308 = sphi 0, %s310
      %s311 = sphi 0, %s308
      %s312 = sphi 0, %s311
      %s328 = sphi 0, %s312
      %s334 = sphi 0, %s336
      %s337 = sphi 0, %s334
      %s338 = sphi 0, %s337
      %s354 = sphi 0, %s338
      %s360 = sphi 0, %s362
      %s363 = sphi 0, %s360
      %s364 = sphi 0, %s363
      %s380 = sphi 0, %s364
      %s386 = sphi 0, %s388
      %s389 = sphi 0, %s386
      %s390 = sphi 0, %s389
      %s406 = sphi 0, %s390
      %s412 = sphi 0, %s414
      %s415 = sphi 0, %s412
      %s416 = sphi 0, %s415
      %s432 = sphi 0, %s416
      %s438 = sphi 0, %s440
      %s441 = sphi 0, %s438
      %s442 = sphi 0, %s441
      %s458 = sphi 0, %s442
      %s462 = sphi 0, %s462
      %s464 = sphi 0, %s462
      %s465 = sphi 0, %s464
      %s479 = sphi 0, %s465
      %s483 = sphi 0, %s483
      %s485 = sphi 0, %s483
      %s486 = sphi 0, %s485
      %s500 = sphi 0, %s486
    $region4: #{sketch_inn_forward.1} parent=1 // loop_header_branch
      %51 = sbr.rel (%p49) target = $region8
    $region5: #{sketch_inn_forward.1} parent=1 // loop_body
      %s53 = ssub.s32 %s48, 1
      %s54 = ssub.s32 %s48, 2
      %s55 = sadd.s32 %s48, 1
      %s57 = sadd.s32 %s56, 1
      %p60 = scmp.eq.s32.totalorder %s48, 2
      %p61 = scmp.ne.s32.totalorder %s56, %s58
      %p62 = scmp.eq.s32.totalorder %s48, 0
      %p63 = por %p61, %p62
      %p64 = scmp.ne.s32.totalorder %s56, %s58
      %p65 = scmp.eq.s32.totalorder %s53, 2
      %p66 = por %p64, %p65
      %p67 = scmp.ne.s32.totalorder %s58, %s59
      %p68 = scmp.eq.s32.totalorder %s53, 0
      %p69 = por %p67, %p68
      %p70 = scmp.ne.s32.totalorder %s58, %s59
      %p71 = scmp.eq.s32.totalorder %s54, 2
      %p72 = por %p70, %p71
      %p74 = scmp.ne.s32.totalorder %s59, %s73
      %p75 = scmp.eq.s32.totalorder %s54, 0
      %p76 = por %p74, %p75
      %s78 = sadd.s32 %s77, 1
      %p81 = scmp.eq.s32.totalorder %s48, 2
      %p82 = scmp.ne.s32.totalorder %s77, %s79
      %p83 = scmp.eq.s32.totalorder %s48, 0
      %p84 = por %p82, %p83
      %p85 = scmp.ne.s32.totalorder %s77, %s79
      %p86 = scmp.eq.s32.totalorder %s53, 2
      %p87 = por %p85, %p86
      %p88 = scmp.ne.s32.totalorder %s79, %s80
      %p89 = scmp.eq.s32.totalorder %s53, 0
      %p90 = por %p88, %p89
      %p91 = scmp.ne.s32.totalorder %s79, %s80
      %p92 = scmp.eq.s32.totalorder %s54, 2
      %p93 = por %p91, %p92
      %p95 = scmp.ne.s32.totalorder %s80, %s94
      %p96 = scmp.eq.s32.totalorder %s54, 0
      %p97 = por %p95, %p96
      %s98 = ssub.s32 %s48, %s55
      %p99 = scmp.eq.s32.totalorder %s98, 0
      %s101 = sadd.s32 %s100, 1
      %s102 = scalar_select %p99, %s100, %s101
      %p105 = pneg %p99
      %p106 = scmp.eq.s32.totalorder %s48, 2
      %p107 = por %p105, %p106
      %p108 = scmp.ne.s32.totalorder %s100, %s103
      %p109 = scmp.eq.s32.totalorder %s48, 0
      %p110 = por %p108, %p109
      %p111 = scmp.ne.s32.totalorder %s100, %s103
      %p112 = scmp.eq.s32.totalorder %s53, 2
      %p113 = por %p111, %p112
      %p114 = scmp.ne.s32.totalorder %s103, %s104
      %p115 = scmp.eq.s32.totalorder %s53, 0
      %p116 = por %p114, %p115
      %p117 = scmp.ne.s32.totalorder %s103, %s104
      %p118 = scmp.eq.s32.totalorder %s54, 2
      %p119 = por %p117, %p118
      %p121 = scmp.ne.s32.totalorder %s104, %s120
      %p122 = scmp.eq.s32.totalorder %s54, 0
      %p123 = por %p121, %p122
      %s124 = ssub.s32 %s48, %s55
      %p125 = scmp.eq.s32.totalorder %s124, 0
      %s127 = sadd.s32 %s126, 1
      %s128 = scalar_select %p125, %s126, %s127
      %p131 = pneg %p125
      %p132 = scmp.eq.s32.totalorder %s48, 2
      %p133 = por %p131, %p132
      %p134 = scmp.ne.s32.totalorder %s126, %s129
      %p135 = scmp.eq.s32.totalorder %s48, 0
      %p136 = por %p134, %p135
      %p137 = scmp.ne.s32.totalorder %s126, %s129
      %p138 = scmp.eq.s32.totalorder %s53, 2
      %p139 = por %p137, %p138
      %p140 = scmp.ne.s32.totalorder %s129, %s130
      %p141 = scmp.eq.s32.totalorder %s53, 0
      %p142 = por %p140, %p141
      %p143 = scmp.ne.s32.totalorder %s129, %s130
      %p144 = scmp.eq.s32.totalorder %s54, 2
      %p145 = por %p143, %p144
      %p147 = scmp.ne.s32.totalorder %s130, %s146
      %p148 = scmp.eq.s32.totalorder %s54, 0
      %p149 = por %p147, %p148
      %s150 = ssub.s32 %s48, %s55
      %p151 = scmp.eq.s32.totalorder %s150, 0
      %s153 = sadd.s32 %s152, 1
      %s154 = scalar_select %p151, %s152, %s153
      %p157 = pneg %p151
      %p158 = scmp.eq.s32.totalorder %s48, 2
      %p159 = por %p157, %p158
      %p160 = scmp.ne.s32.totalorder %s152, %s155
      %p161 = scmp.eq.s32.totalorder %s48, 0
      %p162 = por %p160, %p161
      %p163 = scmp.ne.s32.totalorder %s152, %s155
      %p164 = scmp.eq.s32.totalorder %s53, 2
      %p165 = por %p163, %p164
      %p166 = scmp.ne.s32.totalorder %s155, %s156
      %p167 = scmp.eq.s32.totalorder %s53, 0
      %p168 = por %p166, %p167
      %p169 = scmp.ne.s32.totalorder %s155, %s156
      %p170 = scmp.eq.s32.totalorder %s54, 2
      %p171 = por %p169, %p170
      %p173 = scmp.ne.s32.totalorder %s156, %s172
      %p174 = scmp.eq.s32.totalorder %s54, 0
      %p175 = por %p173, %p174
      %s176 = ssub.s32 %s48, %s55
      %p177 = scmp.eq.s32.totalorder %s176, 0
      %s179 = sadd.s32 %s178, 1
      %s180 = scalar_select %p177, %s178, %s179
      %p183 = pneg %p177
      %p184 = scmp.eq.s32.totalorder %s48, 2
      %p185 = por %p183, %p184
      %p186 = scmp.ne.s32.totalorder %s178, %s181
      %p187 = scmp.eq.s32.totalorder %s48, 0
      %p188 = por %p186, %p187
      %p189 = scmp.ne.s32.totalorder %s178, %s181
      %p190 = scmp.eq.s32.totalorder %s53, 2
      %p191 = por %p189, %p190
      %p192 = scmp.ne.s32.totalorder %s181, %s182
      %p193 = scmp.eq.s32.totalorder %s53, 0
      %p194 = por %p192, %p193
      %p195 = scmp.ne.s32.totalorder %s181, %s182
      %p196 = scmp.eq.s32.totalorder %s54, 2
      %p197 = por %p195, %p196
      %p199 = scmp.ne.s32.totalorder %s182, %s198
      %p200 = scmp.eq.s32.totalorder %s54, 0
      %p201 = por %p199, %p200
      %s202 = ssub.s32 %s48, %s55
      %p203 = scmp.eq.s32.totalorder %s202, 0
      %s205 = sadd.s32 %s204, 1
      %s206 = scalar_select %p203, %s204, %s205
      %p209 = pneg %p203
      %p210 = scmp.eq.s32.totalorder %s48, 2
      %p211 = por %p209, %p210
      %p212 = scmp.ne.s32.totalorder %s204, %s207
      %p213 = scmp.eq.s32.totalorder %s48, 0
      %p214 = por %p212, %p213
      %p215 = scmp.ne.s32.totalorder %s204, %s207
      %p216 = scmp.eq.s32.totalorder %s53, 2
      %p217 = por %p215, %p216
      %p218 = scmp.ne.s32.totalorder %s207, %s208
      %p219 = scmp.eq.s32.totalorder %s53, 0
      %p220 = por %p218, %p219
      %p221 = scmp.ne.s32.totalorder %s207, %s208
      %p222 = scmp.eq.s32.totalorder %s54, 2
      %p223 = por %p221, %p222
      %p225 = scmp.ne.s32.totalorder %s208, %s224
      %p226 = scmp.eq.s32.totalorder %s54, 0
      %p227 = por %p225, %p226
      %s228 = ssub.s32 %s48, %s55
      %p229 = scmp.eq.s32.totalorder %s228, 0
      %s231 = sadd.s32 %s230, 1
      %s232 = scalar_select %p229, %s230, %s231
      %p235 = pneg %p229
      %p236 = scmp.eq.s32.totalorder %s48, 2
      %p237 = por %p235, %p236
      %p238 = scmp.ne.s32.totalorder %s230, %s233
      %p239 = scmp.eq.s32.totalorder %s48, 0
      %p240 = por %p238, %p239
      %p241 = scmp.ne.s32.totalorder %s230, %s233
      %p242 = scmp.eq.s32.totalorder %s53, 2
      %p243 = por %p241, %p242
      %p244 = scmp.ne.s32.totalorder %s233, %s234
      %p245 = scmp.eq.s32.totalorder %s53, 0
      %p246 = por %p244, %p245
      %p247 = scmp.ne.s32.totalorder %s233, %s234
      %p248 = scmp.eq.s32.totalorder %s54, 2
      %p249 = por %p247, %p248
      %p251 = scmp.ne.s32.totalorder %s234, %s250
      %p252 = scmp.eq.s32.totalorder %s54, 0
      %p253 = por %p251, %p252
      %s254 = ssub.s32 %s48, %s55
      %p255 = scmp.eq.s32.totalorder %s254, 0
      %s257 = sadd.s32 %s256, 1
      %s258 = scalar_select %p255, %s256, %s257
      %p261 = pneg %p255
      %p262 = scmp.eq.s32.totalorder %s48, 2
      %p263 = por %p261, %p262
      %p264 = scmp.ne.s32.totalorder %s256, %s259
      %p265 = scmp.eq.s32.totalorder %s48, 0
      %p266 = por %p264, %p265
      %p267 = scmp.ne.s32.totalorder %s256, %s259
      %p268 = scmp.eq.s32.totalorder %s53, 2
      %p269 = por %p267, %p268
      %p270 = scmp.ne.s32.totalorder %s259, %s260
      %p271 = scmp.eq.s32.totalorder %s53, 0
      %p272 = por %p270, %p271
      %p273 = scmp.ne.s32.totalorder %s259, %s260
      %p274 = scmp.eq.s32.totalorder %s54, 2
      %p275 = por %p273, %p274
      %p277 = scmp.ne.s32.totalorder %s260, %s276
      %p278 = scmp.eq.s32.totalorder %s54, 0
      %p279 = por %p277, %p278
      %s280 = ssub.s32 %s48, %s55
      %p281 = scmp.eq.s32.totalorder %s280, 0
      %s283 = sadd.s32 %s282, 1
      %s284 = scalar_select %p281, %s282, %s283
      %p287 = pneg %p281
      %p288 = scmp.eq.s32.totalorder %s48, 2
      %p289 = por %p287, %p288
      %p290 = scmp.ne.s32.totalorder %s282, %s285
      %p291 = scmp.eq.s32.totalorder %s48, 0
      %p292 = por %p290, %p291
      %p293 = scmp.ne.s32.totalorder %s282, %s285
      %p294 = scmp.eq.s32.totalorder %s53, 2
      %p295 = por %p293, %p294
      %p296 = scmp.ne.s32.totalorder %s285, %s286
      %p297 = scmp.eq.s32.totalorder %s53, 0
      %p298 = por %p296, %p297
      %p299 = scmp.ne.s32.totalorder %s285, %s286
      %p300 = scmp.eq.s32.totalorder %s54, 2
      %p301 = por %p299, %p300
      %p303 = scmp.ne.s32.totalorder %s286, %s302
      %p304 = scmp.eq.s32.totalorder %s54, 0
      %p305 = por %p303, %p304
      %s306 = ssub.s32 %s48, %s55
      %p307 = scmp.eq.s32.totalorder %s306, 0
      %s309 = sadd.s32 %s308, 1
      %s310 = scalar_select %p307, %s308, %s309
      %p313 = pneg %p307
      %p314 = scmp.eq.s32.totalorder %s48, 2
      %p315 = por %p313, %p314
      %p316 = scmp.ne.s32.totalorder %s308, %s311
      %p317 = scmp.eq.s32.totalorder %s48, 0
      %p318 = por %p316, %p317
      %p319 = scmp.ne.s32.totalorder %s308, %s311
      %p320 = scmp.eq.s32.totalorder %s53, 2
      %p321 = por %p319, %p320
      %p322 = scmp.ne.s32.totalorder %s311, %s312
      %p323 = scmp.eq.s32.totalorder %s53, 0
      %p324 = por %p322, %p323
      %p325 = scmp.ne.s32.totalorder %s311, %s312
      %p326 = scmp.eq.s32.totalorder %s54, 2
      %p327 = por %p325, %p326
      %p329 = scmp.ne.s32.totalorder %s312, %s328
      %p330 = scmp.eq.s32.totalorder %s54, 0
      %p331 = por %p329, %p330
      %s332 = ssub.s32 %s48, %s55
      %p333 = scmp.eq.s32.totalorder %s332, 0
      %s335 = sadd.s32 %s334, 1
      %s336 = scalar_select %p333, %s334, %s335
      %p339 = pneg %p333
      %p340 = scmp.eq.s32.totalorder %s48, 2
      %p341 = por %p339, %p340
      %p342 = scmp.ne.s32.totalorder %s334, %s337
      %p343 = scmp.eq.s32.totalorder %s48, 0
      %p344 = por %p342, %p343
      %p345 = scmp.ne.s32.totalorder %s334, %s337
      %p346 = scmp.eq.s32.totalorder %s53, 2
      %p347 = por %p345, %p346
      %p348 = scmp.ne.s32.totalorder %s337, %s338
      %p349 = scmp.eq.s32.totalorder %s53, 0
      %p350 = por %p348, %p349
      %p351 = scmp.ne.s32.totalorder %s337, %s338
      %p352 = scmp.eq.s32.totalorder %s54, 2
      %p353 = por %p351, %p352
      %p355 = scmp.ne.s32.totalorder %s338, %s354
      %p356 = scmp.eq.s32.totalorder %s54, 0
      %p357 = por %p355, %p356
      %s358 = ssub.s32 %s48, %s55
      %p359 = scmp.eq.s32.totalorder %s358, 0
      %s361 = sadd.s32 %s360, 1
      %s362 = scalar_select %p359, %s360, %s361
      %p365 = pneg %p359
      %p366 = scmp.eq.s32.totalorder %s48, 2
      %p367 = por %p365, %p366
      %p368 = scmp.ne.s32.totalorder %s360, %s363
      %p369 = scmp.eq.s32.totalorder %s48, 0
      %p370 = por %p368, %p369
      %p371 = scmp.ne.s32.totalorder %s360, %s363
      %p372 = scmp.eq.s32.totalorder %s53, 2
      %p373 = por %p371, %p372
      %p374 = scmp.ne.s32.totalorder %s363, %s364
      %p375 = scmp.eq.s32.totalorder %s53, 0
      %p376 = por %p374, %p375
      %p377 = scmp.ne.s32.totalorder %s363, %s364
      %p378 = scmp.eq.s32.totalorder %s54, 2
      %p379 = por %p377, %p378
      %p381 = scmp.ne.s32.totalorder %s364, %s380
      %p382 = scmp.eq.s32.totalorder %s54, 0
      %p383 = por %p381, %p382
      %s384 = ssub.s32 %s48, %s55
      %p385 = scmp.eq.s32.totalorder %s384, 0
      %s387 = sadd.s32 %s386, 1
      %s388 = scalar_select %p385, %s386, %s387
      %p391 = pneg %p385
      %p392 = scmp.eq.s32.totalorder %s48, 2
      %p393 = por %p391, %p392
      %p394 = scmp.ne.s32.totalorder %s386, %s389
      %p395 = scmp.eq.s32.totalorder %s48, 0
      %p396 = por %p394, %p395
      %p397 = scmp.ne.s32.totalorder %s386, %s389
      %p398 = scmp.eq.s32.totalorder %s53, 2
      %p399 = por %p397, %p398
      %p400 = scmp.ne.s32.totalorder %s389, %s390
      %p401 = scmp.eq.s32.totalorder %s53, 0
      %p402 = por %p400, %p401
      %p403 = scmp.ne.s32.totalorder %s389, %s390
      %p404 = scmp.eq.s32.totalorder %s54, 2
      %p405 = por %p403, %p404
      %p407 = scmp.ne.s32.totalorder %s390, %s406
      %p408 = scmp.eq.s32.totalorder %s54, 0
      %p409 = por %p407, %p408
      %s410 = ssub.s32 %s48, %s55
      %p411 = scmp.eq.s32.totalorder %s410, 0
      %s413 = sadd.s32 %s412, 1
      %s414 = scalar_select %p411, %s412, %s413
      %p417 = pneg %p411
      %p418 = scmp.eq.s32.totalorder %s48, 2
      %p419 = por %p417, %p418
      %p420 = scmp.ne.s32.totalorder %s412, %s415
      %p421 = scmp.eq.s32.totalorder %s48, 0
      %p422 = por %p420, %p421
      %p423 = scmp.ne.s32.totalorder %s412, %s415
      %p424 = scmp.eq.s32.totalorder %s53, 2
      %p425 = por %p423, %p424
      %p426 = scmp.ne.s32.totalorder %s415, %s416
      %p427 = scmp.eq.s32.totalorder %s53, 0
      %p428 = por %p426, %p427
      %p429 = scmp.ne.s32.totalorder %s415, %s416
      %p430 = scmp.eq.s32.totalorder %s54, 2
      %p431 = por %p429, %p430
      %p433 = scmp.ne.s32.totalorder %s416, %s432
      %p434 = scmp.eq.s32.totalorder %s54, 0
      %p435 = por %p433, %p434
      %s436 = ssub.s32 %s48, %s55
      %p437 = scmp.eq.s32.totalorder %s436, 0
      %s439 = sadd.s32 %s438, 1
      %s440 = scalar_select %p437, %s438, %s439
      %p443 = pneg %p437
      %p444 = scmp.eq.s32.totalorder %s48, 2
      %p445 = por %p443, %p444
      %p446 = scmp.ne.s32.totalorder %s438, %s441
      %p447 = scmp.eq.s32.totalorder %s48, 0
      %p448 = por %p446, %p447
      %p449 = scmp.ne.s32.totalorder %s438, %s441
      %p450 = scmp.eq.s32.totalorder %s53, 2
      %p451 = por %p449, %p450
      %p452 = scmp.ne.s32.totalorder %s441, %s442
      %p453 = scmp.eq.s32.totalorder %s53, 0
      %p454 = por %p452, %p453
      %p455 = scmp.ne.s32.totalorder %s441, %s442
      %p456 = scmp.eq.s32.totalorder %s54, 2
      %p457 = por %p455, %p456
      %p459 = scmp.ne.s32.totalorder %s442, %s458
      %p460 = scmp.eq.s32.totalorder %s54, 0
      %p461 = por %p459, %p460
      %s463 = sadd.s32 %s462, 1
      %p466 = scmp.eq.s32.totalorder %s48, 2
      %p467 = scmp.ne.s32.totalorder %s462, %s464
      %p468 = scmp.eq.s32.totalorder %s48, 0
      %p469 = por %p467, %p468
      %p470 = scmp.ne.s32.totalorder %s462, %s464
      %p471 = scmp.eq.s32.totalorder %s53, 2
      %p472 = por %p470, %p471
      %p473 = scmp.ne.s32.totalorder %s464, %s465
      %p474 = scmp.eq.s32.totalorder %s53, 0
      %p475 = por %p473, %p474
      %p476 = scmp.ne.s32.totalorder %s464, %s465
      %p477 = scmp.eq.s32.totalorder %s54, 2
      %p478 = por %p476, %p477
      %p480 = scmp.ne.s32.totalorder %s465, %s479
      %p481 = scmp.eq.s32.totalorder %s54, 0
      %p482 = por %p480, %p481
      %s484 = sadd.s32 %s483, 1
      %p487 = scmp.eq.s32.totalorder %s48, 2
      %p488 = scmp.ne.s32.totalorder %s483, %s485
      %p489 = scmp.eq.s32.totalorder %s48, 0
      %p490 = por %p488, %p489
      %p491 = scmp.ne.s32.totalorder %s483, %s485
      %p492 = scmp.eq.s32.totalorder %s53, 2
      %p493 = por %p491, %p492
      %p494 = scmp.ne.s32.totalorder %s485, %s486
      %p495 = scmp.eq.s32.totalorder %s53, 0
      %p496 = por %p494, %p495
      %p497 = scmp.ne.s32.totalorder %s485, %s486
      %p498 = scmp.eq.s32.totalorder %s54, 2
      %p499 = por %p497, %p498
      %p501 = scmp.ne.s32.totalorder %s486, %s500
      %p502 = scmp.eq.s32.totalorder %s54, 0
      %p503 = por %p501, %p502
      %p504 = scmp.le.s32.totalorder 1, %s48
      %p505 = scmp.lt.s32.totalorder %s48, 4
      %p506 = pnand %p504, %p505
      %p507 = pneg %p506
      // Predicated region
      $region9: #{sketch_inn_forward.1} parent=5 // pred_check
        _
      $region10: #{sketch_inn_forward.1} parent=5 // pred_check_branch
        %509 = sbr.rel (%p506) target = $region12
      $region11: #{sketch_inn_forward.1} parent=5 // pred_region
        %s510 = ssub.s32 %s48, 1
        // Predicated region
        $region13: #{sketch_inn_forward.1} parent=11 // pred_check
          %p511 = pneg %p69
        $region14: #{sketch_inn_forward.1} parent=11 // pred_check_branch
          %513 = sbr.rel (%p511) target = $region16
        $region15: #{sketch_inn_forward.1} parent=11 // pred_region
          _
        $region16: #{sketch_inn_forward.1} parent=11 // pred_fallthru
          _
        // Predicated region
        $region17: #{sketch_inn_forward.1} parent=11 // pred_check
          %p514 = pneg %p90
        $region18: #{sketch_inn_forward.1} parent=11 // pred_check_branch
          %516 = sbr.rel (%p514) target = $region20
        $region19: #{sketch_inn_forward.1} parent=11 // pred_region
          _
        $region20: #{sketch_inn_forward.1} parent=11 // pred_fallthru
          _
      $region12: #{sketch_inn_forward.1} parent=5 // pred_fallthru
        _
      %p517 = scmp.lt.s32.totalorder %s48, 3
      // Predicated region
      $region21: #{sketch_inn_forward.1} parent=5 // pred_check
        %p518 = pneg %p517
      $region22: #{sketch_inn_forward.1} parent=5 // pred_check_branch
        %520 = sbr.rel (%p518) target = $region24
      $region23: #{sketch_inn_forward.1} parent=5 // pred_region
        // Predicated region
        $region25: #{sketch_inn_forward.1} parent=23 // pred_check
          %p521 = pneg %p110
        $region26: #{sketch_inn_forward.1} parent=23 // pred_check_branch
          %523 = sbr.rel (%p521) target = $region28
        $region27: #{sketch_inn_forward.1} parent=23 // pred_region
          %s524 = sand.u32 %s100, 1
          %s525 = scalar_lea.sflag [#allocation3], %s524
          %s526 = sand.u32 %s100, 1
          %s527 = smul.addr %s526, 512
          %s528 = scalar_lea.vmem [#allocation2], %s527
          %s530 = ssub.s32 8192, 8192
          %531 = vsyncadd %s525, %s530
          %s532 = smul.addr %s48, 64
          %s533 = smul.addr %s532, 128
          %s534 = scalar_lea.hbm %s2, %s533
          %s535 = sshll.u32 %s528, 4
          %s536 = int_to_ptr.vmem [resolvable:$true] %s535
          %541 = dma.hbm_to_vmem [thread:$0]  %s534, 8192, %s536, %s525, 256, 256, 16
        $region28: #{sketch_inn_forward.1} parent=23 // pred_fallthru
          _
        // Predicated region
        $region29: #{sketch_inn_forward.1} parent=23 // pred_check
          %p542 = pneg %p136
        $region30: #{sketch_inn_forward.1} parent=23 // pred_check_branch
          %544 = sbr.rel (%p542) target = $region32
        $region31: #{sketch_inn_forward.1} parent=23 // pred_region
          %s545 = sand.u32 %s48, 1
          %s546 = scalar_lea.sflag [#allocation5], %s545
          %s547 = sand.u32 %s126, 1
          %s548 = smul.addr %s547, 64
          %s549 = scalar_lea.vmem [#allocation4], %s548
          %s551 = ssub.s32 1024, 1024
          %552 = vsyncadd %s546, %s551
          %s553 = smul.addr %s48, 8
          %s554 = smul.addr %s553, 128
          %s555 = scalar_lea.hbm %s3, %s554
          %s556 = sshll.u32 %s549, 4
          %s557 = int_to_ptr.vmem [resolvable:$true] %s556
          %562 = dma.hbm_to_vmem [thread:$0]  %s555, 1024, %s557, %s546, 256, 256, 16
        $region32: #{sketch_inn_forward.1} parent=23 // pred_fallthru
          _
        // Predicated region
        $region33: #{sketch_inn_forward.1} parent=23 // pred_check
          %p563 = pneg %p162
        $region34: #{sketch_inn_forward.1} parent=23 // pred_check_branch
          %565 = sbr.rel (%p563) target = $region36
        $region35: #{sketch_inn_forward.1} parent=23 // pred_region
          %s566 = sand.u32 %s48, 1
          %s567 = scalar_lea.sflag [#allocation5], %s566
          %s568 = sand.u32 %s152, 1
          %s569 = smul.addr %s568, 2
          %s570 = scalar_lea.vmem [#allocation6], %s569
          %s572 = ssub.s32 32, 32
          %573 = vsyncadd %s567, %s572
          %s574 = smul.addr %s48, 2
          %s575 = smul.addr %s574, 16
          %s576 = scalar_lea.hbm %s4, %s575
          %s578 = sshll.u32 %s570, 4
          %s579 = int_to_ptr.vmem [resolvable:$true] %s578
          %581 = dma.hbm_to_vmem [thread:$0]  %s576, 32, %s579, %s567
        $region36: #{sketch_inn_forward.1} parent=23 // pred_fallthru
          _
        // Predicated region
        $region37: #{sketch_inn_forward.1} parent=23 // pred_check
          %p582 = pneg %p188
        $region38: #{sketch_inn_forward.1} parent=23 // pred_check_branch
          %584 = sbr.rel (%p582) target = $region40
        $region39: #{sketch_inn_forward.1} parent=23 // pred_region
          %s585 = sand.u32 %s48, 1
          %s586 = scalar_lea.sflag [#allocation8], %s585
          %s587 = sand.u32 %s178, 1
          %s588 = smul.addr %s587, 2
          %s589 = scalar_lea.vmem [#allocation7], %s588
          %s591 = ssub.s32 32, 32
          %592 = vsyncadd %s586, %s591
          %s593 = smul.addr %s48, 2
          %s594 = smul.addr %s593, 16
          %s595 = scalar_lea.hbm %s5, %s594
          %s597 = sshll.u32 %s589, 4
          %s598 = int_to_ptr.vmem [resolvable:$true] %s597
          %600 = dma.hbm_to_vmem [thread:$0]  %s595, 32, %s598, %s586
        $region40: #{sketch_inn_forward.1} parent=23 // pred_fallthru
          _
        // Predicated region
        $region41: #{sketch_inn_forward.1} parent=23 // pred_check
          %p601 = pneg %p214
        $region42: #{sketch_inn_forward.1} parent=23 // pred_check_branch
          %603 = sbr.rel (%p601) target = $region44
        $region43: #{sketch_inn_forward.1} parent=23 // pred_region
          %s604 = sand.u32 %s48, 1
          %s605 = scalar_lea.sflag [#allocation8], %s604
          %s606 = sand.u32 %s204, 1
          %s607 = smul.addr %s606, 1024
          %s608 = scalar_lea.vmem [#allocation9], %s607
          %s610 = ssub.s32 16384, 16384
          %611 = vsyncadd %s605, %s610
          %s612 = smul.addr %s48, 128
          %s613 = smul.addr %s612, 128
          %s614 = scalar_lea.hbm %s6, %s613
          %s615 = sshll.u32 %s608, 4
          %s616 = int_to_ptr.vmem [resolvable:$true] %s615
          %621 = dma.hbm_to_vmem [thread:$0]  %s614, 16384, %s616, %s605, 2048, 2048, 128
        $region44: #{sketch_inn_forward.1} parent=23 // pred_fallthru
          _
        // Predicated region
        $region45: #{sketch_inn_forward.1} parent=23 // pred_check
          %p622 = pneg %p240
        $region46: #{sketch_inn_forward.1} parent=23 // pred_check_branch
          %624 = sbr.rel (%p622) target = $region48
        $region47: #{sketch_inn_forward.1} parent=23 // pred_region
          %s625 = sand.u32 %s48, 1
          %s626 = scalar_lea.sflag [#allocation11], %s625
          %s627 = sand.u32 %s230, 1
          %s628 = smul.addr %s627, 16
          %s629 = scalar_lea.vmem [#allocation10], %s628
          %s631 = ssub.s32 256, 256
          %632 = vsyncadd %s626, %s631
          %s633 = smul.addr %s48, 16
          %s634 = smul.addr %s633, 16
          %s635 = scalar_lea.hbm %s7, %s634
          %s637 = sshll.u32 %s629, 4
          %s638 = int_to_ptr.vmem [resolvable:$true] %s637
          %640 = dma.hbm_to_vmem [thread:$0]  %s635, 256, %s638, %s626
        $region48: #{sketch_inn_forward.1} parent=23 // pred_fallthru
          _
        // Predicated region
        $region49: #{sketch_inn_forward.1} parent=23 // pred_check
          %p641 = pneg %p266
        $region50: #{sketch_inn_forward.1} parent=23 // pred_check_branch
          %643 = sbr.rel (%p641) target = $region52
        $region51: #{sketch_inn_forward.1} parent=23 // pred_region
          %s644 = sand.u32 %s48, 1
          %s645 = scalar_lea.sflag [#allocation11], %s644
          %s646 = sand.u32 %s256, 1
          %s647 = smul.addr %s646, 16
          %s648 = scalar_lea.vmem [#allocation12], %s647
          %s650 = ssub.s32 256, 256
          %651 = vsyncadd %s645, %s650
          %s652 = smul.addr %s48, 16
          %s653 = smul.addr %s652, 16
          %s654 = scalar_lea.hbm %s8, %s653
          %s656 = sshll.u32 %s648, 4
          %s657 = int_to_ptr.vmem [resolvable:$true] %s656
          %659 = dma.hbm_to_vmem [thread:$0]  %s654, 256, %s657, %s645
        $region52: #{sketch_inn_forward.1} parent=23 // pred_fallthru
          _
        // Predicated region
        $region53: #{sketch_inn_forward.1} parent=23 // pred_check
          %p660 = pneg %p292
        $region54: #{sketch_inn_forward.1} parent=23 // pred_check_branch
          %662 = sbr.rel (%p660) target = $region56
        $region55: #{sketch_inn_forward.1} parent=23 // pred_region
          %s663 = sand.u32 %s48, 1
          %s664 = scalar_lea.sflag [#allocation14], %s663
          %s665 = sand.u32 %s282, 1
          %s666 = smul.addr %s665, 512
          %s667 = scalar_lea.vmem [#allocation13], %s666
          %s669 = ssub.s32 8192, 8192
          %670 = vsyncadd %s664, %s669
          %s671 = smul.addr %s48, 64
          %s672 = smul.addr %s671, 128
          %s673 = scalar_lea.hbm %s9, %s672
          %s674 = sshll.u32 %s667, 4
          %s675 = int_to_ptr.vmem [resolvable:$true] %s674
          %680 = dma.hbm_to_vmem [thread:$0]  %s673, 8192, %s675, %s664, 256, 256, 16
        $region56: #{sketch_inn_forward.1} parent=23 // pred_fallthru
          _
        // Predicated region
        $region57: #{sketch_inn_forward.1} parent=23 // pred_check
          %p681 = pneg %p318
        $region58: #{sketch_inn_forward.1} parent=23 // pred_check_branch
          %683 = sbr.rel (%p681) target = $region60
        $region59: #{sketch_inn_forward.1} parent=23 // pred_region
          %s684 = sand.u32 %s48, 1
          %s685 = scalar_lea.sflag [#allocation14], %s684
          %s686 = sand.u32 %s308, 1
          %s687 = smul.addr %s686, 64
          %s688 = scalar_lea.vmem [#allocation15], %s687
          %s690 = ssub.s32 1024, 1024
          %691 = vsyncadd %s685, %s690
          %s692 = smul.addr %s48, 8
          %s693 = smul.addr %s692, 128
          %s694 = scalar_lea.hbm %s10, %s693
          %s695 = sshll.u32 %s688, 4
          %s696 = int_to_ptr.vmem [resolvable:$true] %s695
          %701 = dma.hbm_to_vmem [thread:$0]  %s694, 1024, %s696, %s685, 256, 256, 16
        $region60: #{sketch_inn_forward.1} parent=23 // pred_fallthru
          _
        // Predicated region
        $region61: #{sketch_inn_forward.1} parent=23 // pred_check
          %p702 = pneg %p344
        $region62: #{sketch_inn_forward.1} parent=23 // pred_check_branch
          %704 = sbr.rel (%p702) target = $region64
        $region63: #{sketch_inn_forward.1} parent=23 // pred_region
          %s705 = sand.u32 %s48, 1
          %s706 = scalar_lea.sflag [#allocation17], %s705
          %s707 = sand.u32 %s334, 1
          %s708 = smul.addr %s707, 2
          %s709 = scalar_lea.vmem [#allocation16], %s708
          %s711 = ssub.s32 32, 32
          %712 = vsyncadd %s706, %s711
          %s713 = smul.addr %s48, 2
          %s714 = smul.addr %s713, 16
          %s715 = scalar_lea.hbm %s11, %s714
          %s717 = sshll.u32 %s709, 4
          %s718 = int_to_ptr.vmem [resolvable:$true] %s717
          %720 = dma.hbm_to_vmem [thread:$0]  %s715, 32, %s718, %s706
        $region64: #{sketch_inn_forward.1} parent=23 // pred_fallthru
          _
        // Predicated region
        $region65: #{sketch_inn_forward.1} parent=23 // pred_check
          %p721 = pneg %p370
        $region66: #{sketch_inn_forward.1} parent=23 // pred_check_branch
          %723 = sbr.rel (%p721) target = $region68
        $region67: #{sketch_inn_forward.1} parent=23 // pred_region
          %s724 = sand.u32 %s48, 1
          %s725 = scalar_lea.sflag [#allocation17], %s724
          %s726 = sand.u32 %s360, 1
          %s727 = smul.addr %s726, 2
          %s728 = scalar_lea.vmem [#allocation18], %s727
          %s730 = ssub.s32 32, 32
          %731 = vsyncadd %s725, %s730
          %s732 = smul.addr %s48, 2
          %s733 = smul.addr %s732, 16
          %s734 = scalar_lea.hbm %s12, %s733
          %s736 = sshll.u32 %s728, 4
          %s737 = int_to_ptr.vmem [resolvable:$true] %s736
          %739 = dma.hbm_to_vmem [thread:$0]  %s734, 32, %s737, %s725
        $region68: #{sketch_inn_forward.1} parent=23 // pred_fallthru
          _
        // Predicated region
        $region69: #{sketch_inn_forward.1} parent=23 // pred_check
          %p740 = pneg %p396
        $region70: #{sketch_inn_forward.1} parent=23 // pred_check_branch
          %742 = sbr.rel (%p740) target = $region72
        $region71: #{sketch_inn_forward.1} parent=23 // pred_region
          %s743 = sand.u32 %s48, 1
          %s744 = scalar_lea.sflag [#allocation20], %s743
          %s745 = sand.u32 %s386, 1
          %s746 = smul.addr %s745, 1024
          %s747 = scalar_lea.vmem [#allocation19], %s746
          %s749 = ssub.s32 16384, 16384
          %750 = vsyncadd %s744, %s749
          %s751 = smul.addr %s48, 128
          %s752 = smul.addr %s751, 128
          %s753 = scalar_lea.hbm %s13, %s752
          %s754 = sshll.u32 %s747, 4
          %s755 = int_to_ptr.vmem [resolvable:$true] %s754
          %760 = dma.hbm_to_vmem [thread:$0]  %s753, 16384, %s755, %s744, 2048, 2048, 128
        $region72: #{sketch_inn_forward.1} parent=23 // pred_fallthru
          _
        // Predicated region
        $region73: #{sketch_inn_forward.1} parent=23 // pred_check
          %p761 = pneg %p422
        $region74: #{sketch_inn_forward.1} parent=23 // pred_check_branch
          %763 = sbr.rel (%p761) target = $region76
        $region75: #{sketch_inn_forward.1} parent=23 // pred_region
          %s764 = sand.u32 %s48, 1
          %s765 = scalar_lea.sflag [#allocation20], %s764
          %s766 = sand.u32 %s412, 1
          %s767 = smul.addr %s766, 16
          %s768 = scalar_lea.vmem [#allocation21], %s767
          %s770 = ssub.s32 256, 256
          %771 = vsyncadd %s765, %s770
          %s772 = smul.addr %s48, 16
          %s773 = smul.addr %s772, 16
          %s774 = scalar_lea.hbm %s14, %s773
          %s776 = sshll.u32 %s768, 4
          %s777 = int_to_ptr.vmem [resolvable:$true] %s776
          %779 = dma.hbm_to_vmem [thread:$0]  %s774, 256, %s777, %s765
        $region76: #{sketch_inn_forward.1} parent=23 // pred_fallthru
          _
        // Predicated region
        $region77: #{sketch_inn_forward.1} parent=23 // pred_check
          %p780 = pneg %p448
        $region78: #{sketch_inn_forward.1} parent=23 // pred_check_branch
          %782 = sbr.rel (%p780) target = $region80
        $region79: #{sketch_inn_forward.1} parent=23 // pred_region
          %s783 = sand.u32 %s438, 1
          %s784 = scalar_lea.sflag [#allocation23], %s783
          %s785 = sand.u32 %s438, 1
          %s786 = smul.addr %s785, 16
          %s787 = scalar_lea.vmem [#allocation22], %s786
          %s789 = ssub.s32 256, 256
          %790 = vsyncadd %s784, %s789
          %s791 = smul.addr %s48, 16
          %s792 = smul.addr %s791, 16
          %s793 = scalar_lea.hbm %s15, %s792
          %s795 = sshll.u32 %s787, 4
          %s796 = int_to_ptr.vmem [resolvable:$true] %s795
          %798 = dma.hbm_to_vmem [thread:$0]  %s793, 256, %s796, %s784
        $region80: #{sketch_inn_forward.1} parent=23 // pred_fallthru
          _
      $region24: #{sketch_inn_forward.1} parent=5 // pred_fallthru
        _
      %p799 = scmp.le.s32.totalorder 1, %s48
      %p800 = scmp.lt.s32.totalorder %s48, 4
      %p801 = pnand %p799, %p800
      %p802 = pneg %p801
      // Predicated region
      $region81: #{sketch_inn_forward.1} parent=5 // pred_check
        _
      $region82: #{sketch_inn_forward.1} parent=5 // pred_check_branch
        %804 = sbr.rel (%p801) target = $region84
      $region83: #{sketch_inn_forward.1} parent=5 // pred_region
        %s805 = ssub.s32 %s48, 1
        %s806 = sand.u32 %s103, 1
        %s807 = scalar_lea.sflag [#allocation3], %s806
        %s808 = sand.u32 %s103, 1
        %s809 = smul.addr %s808, 512
        %s810 = scalar_lea.vmem [#allocation2], %s809
        // Predicated region
        $region85: #{sketch_inn_forward.1} parent=83 // pred_check
          %p811 = pneg %p116
        $region86: #{sketch_inn_forward.1} parent=83 // pred_check_branch
          %813 = sbr.rel (%p811) target = $region88
        $region87: #{sketch_inn_forward.1} parent=83 // pred_region
          %814 = dma.done %s807, 8192
        $region88: #{sketch_inn_forward.1} parent=83 // pred_fallthru
          _
        %s815 = sand.u32 %s53, 1
        %s816 = scalar_lea.sflag [#allocation5], %s815
        %s817 = sand.u32 %s129, 1
        %s818 = smul.addr %s817, 64
        %s819 = scalar_lea.vmem [#allocation4], %s818
        // Predicated region
        $region89: #{sketch_inn_forward.1} parent=83 // pred_check
          %p820 = pneg %p142
        $region90: #{sketch_inn_forward.1} parent=83 // pred_check_branch
          %822 = sbr.rel (%p820) target = $region92
        $region91: #{sketch_inn_forward.1} parent=83 // pred_region
          %823 = dma.done %s816, 1024
        $region92: #{sketch_inn_forward.1} parent=83 // pred_fallthru
          _
        %s824 = sand.u32 %s53, 1
        %s825 = scalar_lea.sflag [#allocation5], %s824
        %s826 = sand.u32 %s155, 1
        %s827 = smul.addr %s826, 2
        %s828 = scalar_lea.vmem [#allocation6], %s827
        // Predicated region
        $region93: #{sketch_inn_forward.1} parent=83 // pred_check
          %p829 = pneg %p168
        $region94: #{sketch_inn_forward.1} parent=83 // pred_check_branch
          %831 = sbr.rel (%p829) target = $region96
        $region95: #{sketch_inn_forward.1} parent=83 // pred_region
          %832 = dma.done %s825, 32
        $region96: #{sketch_inn_forward.1} parent=83 // pred_fallthru
          _
        %s833 = sand.u32 %s53, 1
        %s834 = scalar_lea.sflag [#allocation8], %s833
        %s835 = sand.u32 %s181, 1
        %s836 = smul.addr %s835, 2
        %s837 = scalar_lea.vmem [#allocation7], %s836
        // Predicated region
        $region97: #{sketch_inn_forward.1} parent=83 // pred_check
          %p838 = pneg %p194
        $region98: #{sketch_inn_forward.1} parent=83 // pred_check_branch
          %840 = sbr.rel (%p838) target = $region100
        $region99: #{sketch_inn_forward.1} parent=83 // pred_region
          %841 = dma.done %s834, 32
        $region100: #{sketch_inn_forward.1} parent=83 // pred_fallthru
          _
        %s842 = sand.u32 %s53, 1
        %s843 = scalar_lea.sflag [#allocation8], %s842
        %s844 = sand.u32 %s207, 1
        %s845 = smul.addr %s844, 1024
        %s846 = scalar_lea.vmem [#allocation9], %s845
        // Predicated region
        $region101: #{sketch_inn_forward.1} parent=83 // pred_check
          %p847 = pneg %p220
        $region102: #{sketch_inn_forward.1} parent=83 // pred_check_branch
          %849 = sbr.rel (%p847) target = $region104
        $region103: #{sketch_inn_forward.1} parent=83 // pred_region
          %850 = dma.done %s843, 16384
        $region104: #{sketch_inn_forward.1} parent=83 // pred_fallthru
          _
        %s851 = sand.u32 %s53, 1
        %s852 = scalar_lea.sflag [#allocation11], %s851
        %s853 = sand.u32 %s233, 1
        %s854 = smul.addr %s853, 16
        %s855 = scalar_lea.vmem [#allocation10], %s854
        // Predicated region
        $region105: #{sketch_inn_forward.1} parent=83 // pred_check
          %p856 = pneg %p246
        $region106: #{sketch_inn_forward.1} parent=83 // pred_check_branch
          %858 = sbr.rel (%p856) target = $region108
        $region107: #{sketch_inn_forward.1} parent=83 // pred_region
          %859 = dma.done %s852, 256
        $region108: #{sketch_inn_forward.1} parent=83 // pred_fallthru
          _
        %s860 = sand.u32 %s53, 1
        %s861 = scalar_lea.sflag [#allocation11], %s860
        %s862 = sand.u32 %s259, 1
        %s863 = smul.addr %s862, 16
        %s864 = scalar_lea.vmem [#allocation12], %s863
        // Predicated region
        $region109: #{sketch_inn_forward.1} parent=83 // pred_check
          %p865 = pneg %p272
        $region110: #{sketch_inn_forward.1} parent=83 // pred_check_branch
          %867 = sbr.rel (%p865) target = $region112
        $region111: #{sketch_inn_forward.1} parent=83 // pred_region
          %868 = dma.done %s861, 256
        $region112: #{sketch_inn_forward.1} parent=83 // pred_fallthru
          _
        %s869 = sand.u32 %s53, 1
        %s870 = scalar_lea.sflag [#allocation14], %s869
        %s871 = sand.u32 %s285, 1
        %s872 = smul.addr %s871, 512
        %s873 = scalar_lea.vmem [#allocation13], %s872
        // Predicated region
        $region113: #{sketch_inn_forward.1} parent=83 // pred_check
          %p874 = pneg %p298
        $region114: #{sketch_inn_forward.1} parent=83 // pred_check_branch
          %876 = sbr.rel (%p874) target = $region116
        $region115: #{sketch_inn_forward.1} parent=83 // pred_region
          %877 = dma.done %s870, 8192
        $region116: #{sketch_inn_forward.1} parent=83 // pred_fallthru
          _
        %s878 = sand.u32 %s53, 1
        %s879 = scalar_lea.sflag [#allocation14], %s878
        %s880 = sand.u32 %s311, 1
        %s881 = smul.addr %s880, 64
        %s882 = scalar_lea.vmem [#allocation15], %s881
        // Predicated region
        $region117: #{sketch_inn_forward.1} parent=83 // pred_check
          %p883 = pneg %p324
        $region118: #{sketch_inn_forward.1} parent=83 // pred_check_branch
          %885 = sbr.rel (%p883) target = $region120
        $region119: #{sketch_inn_forward.1} parent=83 // pred_region
          %886 = dma.done %s879, 1024
        $region120: #{sketch_inn_forward.1} parent=83 // pred_fallthru
          _
        %s887 = sand.u32 %s53, 1
        %s888 = scalar_lea.sflag [#allocation17], %s887
        %s889 = sand.u32 %s337, 1
        %s890 = smul.addr %s889, 2
        %s891 = scalar_lea.vmem [#allocation16], %s890
        // Predicated region
        $region121: #{sketch_inn_forward.1} parent=83 // pred_check
          %p892 = pneg %p350
        $region122: #{sketch_inn_forward.1} parent=83 // pred_check_branch
          %894 = sbr.rel (%p892) target = $region124
        $region123: #{sketch_inn_forward.1} parent=83 // pred_region
          %895 = dma.done %s888, 32
        $region124: #{sketch_inn_forward.1} parent=83 // pred_fallthru
          _
        %s896 = sand.u32 %s53, 1
        %s897 = scalar_lea.sflag [#allocation17], %s896
        %s898 = sand.u32 %s363, 1
        %s899 = smul.addr %s898, 2
        %s900 = scalar_lea.vmem [#allocation18], %s899
        // Predicated region
        $region125: #{sketch_inn_forward.1} parent=83 // pred_check
          %p901 = pneg %p376
        $region126: #{sketch_inn_forward.1} parent=83 // pred_check_branch
          %903 = sbr.rel (%p901) target = $region128
        $region127: #{sketch_inn_forward.1} parent=83 // pred_region
          %904 = dma.done %s897, 32
        $region128: #{sketch_inn_forward.1} parent=83 // pred_fallthru
          _
        %s905 = sand.u32 %s53, 1
        %s906 = scalar_lea.sflag [#allocation20], %s905
        %s907 = sand.u32 %s389, 1
        %s908 = smul.addr %s907, 1024
        %s909 = scalar_lea.vmem [#allocation19], %s908
        // Predicated region
        $region129: #{sketch_inn_forward.1} parent=83 // pred_check
          %p910 = pneg %p402
        $region130: #{sketch_inn_forward.1} parent=83 // pred_check_branch
          %912 = sbr.rel (%p910) target = $region132
        $region131: #{sketch_inn_forward.1} parent=83 // pred_region
          %913 = dma.done %s906, 16384
        $region132: #{sketch_inn_forward.1} parent=83 // pred_fallthru
          _
        %s914 = sand.u32 %s53, 1
        %s915 = scalar_lea.sflag [#allocation20], %s914
        %s916 = sand.u32 %s415, 1
        %s917 = smul.addr %s916, 16
        %s918 = scalar_lea.vmem [#allocation21], %s917
        // Predicated region
        $region133: #{sketch_inn_forward.1} parent=83 // pred_check
          %p919 = pneg %p428
        $region134: #{sketch_inn_forward.1} parent=83 // pred_check_branch
          %921 = sbr.rel (%p919) target = $region136
        $region135: #{sketch_inn_forward.1} parent=83 // pred_region
          %922 = dma.done %s915, 256
        $region136: #{sketch_inn_forward.1} parent=83 // pred_fallthru
          _
        %s923 = sand.u32 %s441, 1
        %s924 = scalar_lea.sflag [#allocation23], %s923
        %s925 = sand.u32 %s441, 1
        %s926 = smul.addr %s925, 16
        %s927 = scalar_lea.vmem [#allocation22], %s926
        // Predicated region
        $region137: #{sketch_inn_forward.1} parent=83 // pred_check
          %p928 = pneg %p454
        $region138: #{sketch_inn_forward.1} parent=83 // pred_check_branch
          %930 = sbr.rel (%p928) target = $region140
        $region139: #{sketch_inn_forward.1} parent=83 // pred_region
          %931 = dma.done %s924, 256
        $region140: #{sketch_inn_forward.1} parent=83 // pred_fallthru
          _
        %p932 = pneg %p69
        %p933 = pneg %p66
        %p934 = pneg %p90
        %p935 = pneg %p87
        %s936 = sand.u32 %s103, 1
        %s937 = scalar_lea.sflag [#allocation3], %s936
        %s938 = sand.u32 %s103, 1
        %s939 = smul.addr %s938, 512
        %s940 = scalar_lea.vmem [#allocation2], %s939
        %p941 = pneg %p116
        %p942 = pneg %p113
        %s943 = sand.u32 %s53, 1
        %s944 = scalar_lea.sflag [#allocation5], %s943
        %s945 = sand.u32 %s129, 1
        %s946 = smul.addr %s945, 64
        %s947 = scalar_lea.vmem [#allocation4], %s946
        %p948 = pneg %p142
        %p949 = pneg %p139
        %s950 = sand.u32 %s53, 1
        %s951 = scalar_lea.sflag [#allocation5], %s950
        %s952 = sand.u32 %s155, 1
        %s953 = smul.addr %s952, 2
        %s954 = scalar_lea.vmem [#allocation6], %s953
        %p955 = pneg %p168
        %p956 = pneg %p165
        %s957 = sand.u32 %s53, 1
        %s958 = scalar_lea.sflag [#allocation8], %s957
        %s959 = sand.u32 %s181, 1
        %s960 = smul.addr %s959, 2
        %s961 = scalar_lea.vmem [#allocation7], %s960
        %p962 = pneg %p194
        %p963 = pneg %p191
        %s964 = sand.u32 %s53, 1
        %s965 = scalar_lea.sflag [#allocation8], %s964
        %s966 = sand.u32 %s207, 1
        %s967 = smul.addr %s966, 1024
        %s968 = scalar_lea.vmem [#allocation9], %s967
        %p969 = pneg %p220
        %p970 = pneg %p217
        %s971 = sand.u32 %s53, 1
        %s972 = scalar_lea.sflag [#allocation11], %s971
        %s973 = sand.u32 %s233, 1
        %s974 = smul.addr %s973, 16
        %s975 = scalar_lea.vmem [#allocation10], %s974
        %p976 = pneg %p246
        %p977 = pneg %p243
        %s978 = sand.u32 %s53, 1
        %s979 = scalar_lea.sflag [#allocation11], %s978
        %s980 = sand.u32 %s259, 1
        %s981 = smul.addr %s980, 16
        %s982 = scalar_lea.vmem [#allocation12], %s981
        %p983 = pneg %p272
        %p984 = pneg %p269
        %s985 = sand.u32 %s53, 1
        %s986 = scalar_lea.sflag [#allocation14], %s985
        %s987 = sand.u32 %s285, 1
        %s988 = smul.addr %s987, 512
        %s989 = scalar_lea.vmem [#allocation13], %s988
        %p990 = pneg %p298
        %p991 = pneg %p295
        %s992 = sand.u32 %s53, 1
        %s993 = scalar_lea.sflag [#allocation14], %s992
        %s994 = sand.u32 %s311, 1
        %s995 = smul.addr %s994, 64
        %s996 = scalar_lea.vmem [#allocation15], %s995
        %p997 = pneg %p324
        %p998 = pneg %p321
        %s999 = sand.u32 %s53, 1
        %s1000 = scalar_lea.sflag [#allocation17], %s999
        %s1001 = sand.u32 %s337, 1
        %s1002 = smul.addr %s1001, 2
        %s1003 = scalar_lea.vmem [#allocation16], %s1002
        %p1004 = pneg %p350
        %p1005 = pneg %p347
        %s1006 = sand.u32 %s53, 1
        %s1007 = scalar_lea.sflag [#allocation17], %s1006
        %s1008 = sand.u32 %s363, 1
        %s1009 = smul.addr %s1008, 2
        %s1010 = scalar_lea.vmem [#allocation18], %s1009
        %p1011 = pneg %p376
        %p1012 = pneg %p373
        %s1013 = sand.u32 %s53, 1
        %s1014 = scalar_lea.sflag [#allocation20], %s1013
        %s1015 = sand.u32 %s389, 1
        %s1016 = smul.addr %s1015, 1024
        %s1017 = scalar_lea.vmem [#allocation19], %s1016
        %p1018 = pneg %p402
        %p1019 = pneg %p399
        %s1020 = sand.u32 %s53, 1
        %s1021 = scalar_lea.sflag [#allocation20], %s1020
        %s1022 = sand.u32 %s415, 1
        %s1023 = smul.addr %s1022, 16
        %s1024 = scalar_lea.vmem [#allocation21], %s1023
        %p1025 = pneg %p428
        %p1026 = pneg %p425
        %s1027 = sand.u32 %s441, 1
        %s1028 = scalar_lea.sflag [#allocation23], %s1027
        %s1029 = sand.u32 %s441, 1
        %s1030 = smul.addr %s1029, 16
        %s1031 = scalar_lea.vmem [#allocation22], %s1030
        %p1032 = pneg %p454
        %p1033 = pneg %p451
        %p1034 = pneg %p475
        %p1035 = pneg %p472
        %p1036 = pneg %p496
        %p1037 = pneg %p493
        %p1039 = scmp.eq.s32.totalorder %s53, 0
        // Predicated region
        $region141: #{sketch_inn_forward.1} parent=83 // pred_check
          %p1040 = pneg %p1039
        $region142: #{sketch_inn_forward.1} parent=83 // pred_check_branch
          %1042 = sbr.rel (%p1040) target = $region144
        $region143: #{sketch_inn_forward.1} parent=83 // pred_region
          %v1043 = vld [vmem:[%s0] sm:$0xff]
          %v1044 = vld [vmem:[%s0 + $0x8] sm:$0xff]
          %v1045 = vld [vmem:[%s0 + $0x10] sm:$0xff]
          %v1046 = vld [vmem:[%s0 + $0x18] sm:$0xff]
          %v1047 = vld [vmem:[%s0 + $0x20] sm:$0xff]
          %v1048 = vld [vmem:[%s0 + $0x28] sm:$0xff]
          %v1049 = vld [vmem:[%s0 + $0x30] sm:$0xff]
          %v1050 = vld [vmem:[%s0 + $0x38] sm:$0xff]
          %v1051 = vld [vmem:[%s0 + $0x40] sm:$0xff]
          %v1052 = vld [vmem:[%s0 + $0x48] sm:$0xff]
          %v1053 = vld [vmem:[%s0 + $0x50] sm:$0xff]
          %v1054 = vld [vmem:[%s0 + $0x58] sm:$0xff]
          %v1055 = vld [vmem:[%s0 + $0x60] sm:$0xff]
          %v1056 = vld [vmem:[%s0 + $0x68] sm:$0xff]
          %v1057 = vld [vmem:[%s0 + $0x70] sm:$0xff]
          %v1058 = vld [vmem:[%s0 + $0x78] sm:$0xff]
          %1059 = vst [vmem:[%s16] sm:$0xff] %v1043
          %1060 = vst [vmem:[%s16 + $0x8] sm:$0xff] %v1044
          %1061 = vst [vmem:[%s16 + $0x10] sm:$0xff] %v1045
          %1062 = vst [vmem:[%s16 + $0x18] sm:$0xff] %v1046
          %1063 = vst [vmem:[%s16 + $0x20] sm:$0xff] %v1047
          %1064 = vst [vmem:[%s16 + $0x28] sm:$0xff] %v1048
          %1065 = vst [vmem:[%s16 + $0x30] sm:$0xff] %v1049
          %1066 = vst [vmem:[%s16 + $0x38] sm:$0xff] %v1050
          %1067 = vst [vmem:[%s16 + $0x40] sm:$0xff] %v1051
          %1068 = vst [vmem:[%s16 + $0x48] sm:$0xff] %v1052
          %1069 = vst [vmem:[%s16 + $0x50] sm:$0xff] %v1053
          %1070 = vst [vmem:[%s16 + $0x58] sm:$0xff] %v1054
          %1071 = vst [vmem:[%s16 + $0x60] sm:$0xff] %v1055
          %1072 = vst [vmem:[%s16 + $0x68] sm:$0xff] %v1056
          %1073 = vst [vmem:[%s16 + $0x70] sm:$0xff] %v1057
          %1074 = vst [vmem:[%s16 + $0x78] sm:$0xff] %v1058
          %1075 = vst [vmem:[%s17] sm:$0xff] 0.0
          %1076 = vst [vmem:[%s17 + $0x8] sm:$0xff] 0.0
          %1077 = vst [vmem:[%s17 + $0x10] sm:$0xff] 0.0
          %1078 = vst [vmem:[%s17 + $0x18] sm:$0xff] 0.0
          %1079 = vst [vmem:[%s17 + $0x20] sm:$0xff] 0.0
          %1080 = vst [vmem:[%s17 + $0x28] sm:$0xff] 0.0
          %1081 = vst [vmem:[%s17 + $0x30] sm:$0xff] 0.0
          %1082 = vst [vmem:[%s17 + $0x38] sm:$0xff] 0.0
          %1083 = vst [vmem:[%s17 + $0x40] sm:$0xff] 0.0
          %1084 = vst [vmem:[%s17 + $0x48] sm:$0xff] 0.0
          %1085 = vst [vmem:[%s17 + $0x50] sm:$0xff] 0.0
          %1086 = vst [vmem:[%s17 + $0x58] sm:$0xff] 0.0
          %1087 = vst [vmem:[%s17 + $0x60] sm:$0xff] 0.0
          %1088 = vst [vmem:[%s17 + $0x68] sm:$0xff] 0.0
          %1089 = vst [vmem:[%s17 + $0x70] sm:$0xff] 0.0
          %1090 = vst [vmem:[%s17 + $0x78] sm:$0xff] 0.0
        $region144: #{sketch_inn_forward.1} parent=83 // pred_fallthru
          _
        %v1091 = vld [vmem:[%s16] sm:$0xff]
        %v1092 = vld [vmem:[%s16 + $0x8] sm:$0xff]
        %v1093 = vld [vmem:[%s16 + $0x10] sm:$0xff]
        %v1094 = vld [vmem:[%s16 + $0x18] sm:$0xff]
        %v1095 = vld [vmem:[%s16 + $0x20] sm:$0xff]
        %v1096 = vld [vmem:[%s16 + $0x28] sm:$0xff]
        %v1097 = vld [vmem:[%s16 + $0x30] sm:$0xff]
        %v1098 = vld [vmem:[%s16 + $0x38] sm:$0xff]
        %v1099 = vld [vmem:[%s16 + $0x40] sm:$0xff]
        %v1100 = vld [vmem:[%s16 + $0x48] sm:$0xff]
        %v1101 = vld [vmem:[%s16 + $0x50] sm:$0xff]
        %v1102 = vld [vmem:[%s16 + $0x58] sm:$0xff]
        %v1103 = vld [vmem:[%s16 + $0x60] sm:$0xff]
        %v1104 = vld [vmem:[%s16 + $0x68] sm:$0xff]
        %v1105 = vld [vmem:[%s16 + $0x70] sm:$0xff]
        %v1106 = vld [vmem:[%s16 + $0x78] sm:$0xff]
        %v1107 = vld [vmem:[%s1] sm:$0xff]
        %v1108 = vld [vmem:[%s1 + $0x8] sm:$0xff]
        %v1109 = vpack.c.bf16 %v1108, %v1107
        %v1110 = vpack.c.bf16 %v1099, %v1091
        %v1111 = vpack.c.bf16 %v1100, %v1092
        %v1112 = vpack.c.bf16 %v1101, %v1093
        %v1113 = vpack.c.bf16 %v1102, %v1094
        %v1114 = vpack.c.bf16 %v1103, %v1095
        %v1115 = vpack.c.bf16 %v1104, %v1096
        %v1116 = vpack.c.bf16 %v1105, %v1097
        %v1117 = vpack.c.bf16 %v1106, %v1098
        %v1118 = vld [vmem:[%s810] sm:$0xff]
        %v1119 = vld [vmem:[%s810 + $0x8] sm:$0xff]
        %v1120 = vld [vmem:[%s810 + $0x10] sm:$0xff]
        %v1121 = vld [vmem:[%s810 + $0x18] sm:$0xff]
        %v1122 = vld [vmem:[%s810 + $0x20] sm:$0xff]
        %v1123 = vld [vmem:[%s810 + $0x28] sm:$0xff]
        %v1124 = vld [vmem:[%s810 + $0x30] sm:$0xff]
        %v1125 = vld [vmem:[%s810 + $0x38] sm:$0xff]
        %v1126 = vld [vmem:[%s810 + $0x40] sm:$0xff]
        %v1127 = vld [vmem:[%s810 + $0x48] sm:$0xff]
        %v1128 = vld [vmem:[%s810 + $0x50] sm:$0xff]
        %v1129 = vld [vmem:[%s810 + $0x58] sm:$0xff]
        %v1130 = vld [vmem:[%s810 + $0x60] sm:$0xff]
        %v1131 = vld [vmem:[%s810 + $0x68] sm:$0xff]
        %v1132 = vld [vmem:[%s810 + $0x70] sm:$0xff]
        %v1133 = vld [vmem:[%s810 + $0x78] sm:$0xff]
        %v1134 = vld [vmem:[%s810 + $0x80] sm:$0xff]
        %v1135 = vld [vmem:[%s810 + $0x88] sm:$0xff]
        %v1136 = vld [vmem:[%s810 + $0x90] sm:$0xff]
        %v1137 = vld [vmem:[%s810 + $0x98] sm:$0xff]
        %v1138 = vld [vmem:[%s810 + $0xa0] sm:$0xff]
        %v1139 = vld [vmem:[%s810 + $0xa8] sm:$0xff]
        %v1140 = vld [vmem:[%s810 + $0xb0] sm:$0xff]
        %v1141 = vld [vmem:[%s810 + $0xb8] sm:$0xff]
        %v1142 = vld [vmem:[%s810 + $0xc0] sm:$0xff]
        %v1143 = vld [vmem:[%s810 + $0xc8] sm:$0xff]
        %v1144 = vld [vmem:[%s810 + $0xd0] sm:$0xff]
        %v1145 = vld [vmem:[%s810 + $0xd8] sm:$0xff]
        %v1146 = vld [vmem:[%s810 + $0xe0] sm:$0xff]
        %v1147 = vld [vmem:[%s810 + $0xe8] sm:$0xff]
        %v1148 = vld [vmem:[%s810 + $0xf0] sm:$0xff]
        %v1149 = vld [vmem:[%s810 + $0xf8] sm:$0xff]
        %v1150 = vld [vmem:[%s810 + $0x100] sm:$0xff]
        %v1151 = vld [vmem:[%s810 + $0x108] sm:$0xff]
        %v1152 = vld [vmem:[%s810 + $0x110] sm:$0xff]
        %v1153 = vld [vmem:[%s810 + $0x118] sm:$0xff]
        %v1154 = vld [vmem:[%s810 + $0x120] sm:$0xff]
        %v1155 = vld [vmem:[%s810 + $0x128] sm:$0xff]
        %v1156 = vld [vmem:[%s810 + $0x130] sm:$0xff]
        %v1157 = vld [vmem:[%s810 + $0x138] sm:$0xff]
        %v1158 = vld [vmem:[%s810 + $0x140] sm:$0xff]
        %v1159 = vld [vmem:[%s810 + $0x148] sm:$0xff]
        %v1160 = vld [vmem:[%s810 + $0x150] sm:$0xff]
        %v1161 = vld [vmem:[%s810 + $0x158] sm:$0xff]
        %v1162 = vld [vmem:[%s810 + $0x160] sm:$0xff]
        %v1163 = vld [vmem:[%s810 + $0x168] sm:$0xff]
        %v1164 = vld [vmem:[%s810 + $0x170] sm:$0xff]
        %v1165 = vld [vmem:[%s810 + $0x178] sm:$0xff]
        %v1166 = vld [vmem:[%s810 + $0x180] sm:$0xff]
        %v1167 = vld [vmem:[%s810 + $0x188] sm:$0xff]
        %v1168 = vld [vmem:[%s810 + $0x190] sm:$0xff]
        %v1169 = vld [vmem:[%s810 + $0x198] sm:$0xff]
        %v1170 = vld [vmem:[%s810 + $0x1a0] sm:$0xff]
        %v1171 = vld [vmem:[%s810 + $0x1a8] sm:$0xff]
        %v1172 = vld [vmem:[%s810 + $0x1b0] sm:$0xff]
        %v1173 = vld [vmem:[%s810 + $0x1b8] sm:$0xff]
        %v1174 = vld [vmem:[%s810 + $0x1c0] sm:$0xff]
        %v1175 = vld [vmem:[%s810 + $0x1c8] sm:$0xff]
        %v1176 = vld [vmem:[%s810 + $0x1d0] sm:$0xff]
        %v1177 = vld [vmem:[%s810 + $0x1d8] sm:$0xff]
        %v1178 = vld [vmem:[%s810 + $0x1e0] sm:$0xff]
        %v1179 = vld [vmem:[%s810 + $0x1e8] sm:$0xff]
        %v1180 = vld [vmem:[%s810 + $0x1f0] sm:$0xff]
        %v1181 = vld [vmem:[%s810 + $0x1f8] sm:$0xff]
        %v1182 = vunpack.c.l.s8.bf16 %v1118
        %v1183 = vunpack.c.l.s8.bf16 %v1119
        %v1184 = vunpack.c.h.s8.bf16 %v1118
        %v1185 = vunpack.c.h.s8.bf16 %v1119
        %v1186 = vunpack.c.l.s8.bf16 %v1120
        %v1187 = vunpack.c.l.s8.bf16 %v1121
        %v1188 = vunpack.c.h.s8.bf16 %v1120
        %v1189 = vunpack.c.h.s8.bf16 %v1121
        %v1190 = vunpack.c.l.s8.bf16 %v1122
        %v1191 = vunpack.c.l.s8.bf16 %v1123
        %v1192 = vunpack.c.h.s8.bf16 %v1122
        %v1193 = vunpack.c.h.s8.bf16 %v1123
        %v1194 = vunpack.c.l.s8.bf16 %v1124
        %v1195 = vunpack.c.l.s8.bf16 %v1125
        %v1196 = vunpack.c.h.s8.bf16 %v1124
        %v1197 = vunpack.c.h.s8.bf16 %v1125
        %v1198 = vunpack.c.l.s8.bf16 %v1126
        %v1199 = vunpack.c.l.s8.bf16 %v1127
        %v1200 = vunpack.c.h.s8.bf16 %v1126
        %v1201 = vunpack.c.h.s8.bf16 %v1127
        %v1202 = vunpack.c.l.s8.bf16 %v1128
        %v1203 = vunpack.c.l.s8.bf16 %v1129
        %v1204 = vunpack.c.h.s8.bf16 %v1128
        %v1205 = vunpack.c.h.s8.bf16 %v1129
        %v1206 = vunpack.c.l.s8.bf16 %v1130
        %v1207 = vunpack.c.l.s8.bf16 %v1131
        %v1208 = vunpack.c.h.s8.bf16 %v1130
        %v1209 = vunpack.c.h.s8.bf16 %v1131
        %v1210 = vunpack.c.l.s8.bf16 %v1132
        %v1211 = vunpack.c.l.s8.bf16 %v1133
        %v1212 = vunpack.c.h.s8.bf16 %v1132
        %v1213 = vunpack.c.h.s8.bf16 %v1133
        %v1214 = vunpack.c.l.s8.bf16 %v1134
        %v1215 = vunpack.c.l.s8.bf16 %v1135
        %v1216 = vunpack.c.h.s8.bf16 %v1134
        %v1217 = vunpack.c.h.s8.bf16 %v1135
        %v1218 = vunpack.c.l.s8.bf16 %v1136
        %v1219 = vunpack.c.l.s8.bf16 %v1137
        %v1220 = vunpack.c.h.s8.bf16 %v1136
        %v1221 = vunpack.c.h.s8.bf16 %v1137
        %v1222 = vunpack.c.l.s8.bf16 %v1138
        %v1223 = vunpack.c.l.s8.bf16 %v1139
        %v1224 = vunpack.c.h.s8.bf16 %v1138
        %v1225 = vunpack.c.h.s8.bf16 %v1139
        %v1226 = vunpack.c.l.s8.bf16 %v1140
        %v1227 = vunpack.c.l.s8.bf16 %v1141
        %v1228 = vunpack.c.h.s8.bf16 %v1140
        %v1229 = vunpack.c.h.s8.bf16 %v1141
        %v1230 = vunpack.c.l.s8.bf16 %v1142
        %v1231 = vunpack.c.l.s8.bf16 %v1143
        %v1232 = vunpack.c.h.s8.bf16 %v1142
        %v1233 = vunpack.c.h.s8.bf16 %v1143
        %v1234 = vunpack.c.l.s8.bf16 %v1144
        %v1235 = vunpack.c.l.s8.bf16 %v1145
        %v1236 = vunpack.c.h.s8.bf16 %v1144
        %v1237 = vunpack.c.h.s8.bf16 %v1145
        %v1238 = vunpack.c.l.s8.bf16 %v1146
        %v1239 = vunpack.c.l.s8.bf16 %v1147
        %v1240 = vunpack.c.h.s8.bf16 %v1146
        %v1241 = vunpack.c.h.s8.bf16 %v1147
        %v1242 = vunpack.c.l.s8.bf16 %v1148
        %v1243 = vunpack.c.l.s8.bf16 %v1149
        %v1244 = vunpack.c.h.s8.bf16 %v1148
        %v1245 = vunpack.c.h.s8.bf16 %v1149
        %v1246 = vunpack.c.l.s8.bf16 %v1150
        %v1247 = vunpack.c.l.s8.bf16 %v1151
        %v1248 = vunpack.c.h.s8.bf16 %v1150
        %v1249 = vunpack.c.h.s8.bf16 %v1151
        %v1250 = vunpack.c.l.s8.bf16 %v1152
        %v1251 = vunpack.c.l.s8.bf16 %v1153
        %v1252 = vunpack.c.h.s8.bf16 %v1152
        %v1253 = vunpack.c.h.s8.bf16 %v1153
        %v1254 = vunpack.c.l.s8.bf16 %v1154
        %v1255 = vunpack.c.l.s8.bf16 %v1155
        %v1256 = vunpack.c.h.s8.bf16 %v1154
        %v1257 = vunpack.c.h.s8.bf16 %v1155
        %v1258 = vunpack.c.l.s8.bf16 %v1156
        %v1259 = vunpack.c.l.s8.bf16 %v1157
        %v1260 = vunpack.c.h.s8.bf16 %v1156
        %v1261 = vunpack.c.h.s8.bf16 %v1157
        %v1262 = vunpack.c.l.s8.bf16 %v1158
        %v1263 = vunpack.c.l.s8.bf16 %v1159
        %v1264 = vunpack.c.h.s8.bf16 %v1158
        %v1265 = vunpack.c.h.s8.bf16 %v1159
        %v1266 = vunpack.c.l.s8.bf16 %v1160
        %v1267 = vunpack.c.l.s8.bf16 %v1161
        %v1268 = vunpack.c.h.s8.bf16 %v1160
        %v1269 = vunpack.c.h.s8.bf16 %v1161
        %v1270 = vunpack.c.l.s8.bf16 %v1162
        %v1271 = vunpack.c.l.s8.bf16 %v1163
        %v1272 = vunpack.c.h.s8.bf16 %v1162
        %v1273 = vunpack.c.h.s8.bf16 %v1163
        %v1274 = vunpack.c.l.s8.bf16 %v1164
        %v1275 = vunpack.c.l.s8.bf16 %v1165
        %v1276 = vunpack.c.h.s8.bf16 %v1164
        %v1277 = vunpack.c.h.s8.bf16 %v1165
        %v1278 = vunpack.c.l.s8.bf16 %v1166
        %v1279 = vunpack.c.l.s8.bf16 %v1167
        %v1280 = vunpack.c.h.s8.bf16 %v1166
        %v1281 = vunpack.c.h.s8.bf16 %v1167
        %v1282 = vunpack.c.l.s8.bf16 %v1168
        %v1283 = vunpack.c.l.s8.bf16 %v1169
        %v1284 = vunpack.c.h.s8.bf16 %v1168
        %v1285 = vunpack.c.h.s8.bf16 %v1169
        %v1286 = vunpack.c.l.s8.bf16 %v1170
        %v1287 = vunpack.c.l.s8.bf16 %v1171
        %v1288 = vunpack.c.h.s8.bf16 %v1170
        %v1289 = vunpack.c.h.s8.bf16 %v1171
        %v1290 = vunpack.c.l.s8.bf16 %v1172
        %v1291 = vunpack.c.l.s8.bf16 %v1173
        %v1292 = vunpack.c.h.s8.bf16 %v1172
        %v1293 = vunpack.c.h.s8.bf16 %v1173
        %v1294 = vunpack.c.l.s8.bf16 %v1174
        %v1295 = vunpack.c.l.s8.bf16 %v1175
        %v1296 = vunpack.c.h.s8.bf16 %v1174
        %v1297 = vunpack.c.h.s8.bf16 %v1175
        %v1298 = vunpack.c.l.s8.bf16 %v1176
        %v1299 = vunpack.c.l.s8.bf16 %v1177
        %v1300 = vunpack.c.h.s8.bf16 %v1176
        %v1301 = vunpack.c.h.s8.bf16 %v1177
        %v1302 = vunpack.c.l.s8.bf16 %v1178
        %v1303 = vunpack.c.l.s8.bf16 %v1179
        %v1304 = vunpack.c.h.s8.bf16 %v1178
        %v1305 = vunpack.c.h.s8.bf16 %v1179
        %v1306 = vunpack.c.l.s8.bf16 %v1180
        %v1307 = vunpack.c.l.s8.bf16 %v1181
        %v1308 = vunpack.c.h.s8.bf16 %v1180
        %v1309 = vunpack.c.h.s8.bf16 %v1181
        %v1310 = vld [vmem:[%s819] sm:$0xff]
        %v1311 = vld [vmem:[%s819 + $0x8] sm:$0xff]
        %v1312 = vld [vmem:[%s819 + $0x10] sm:$0xff]
        %v1313 = vld [vmem:[%s819 + $0x18] sm:$0xff]
        %v1314 = vld [vmem:[%s819 + $0x20] sm:$0xff]
        %v1315 = vld [vmem:[%s819 + $0x28] sm:$0xff]
        %v1316 = vld [vmem:[%s819 + $0x30] sm:$0xff]
        %v1317 = vld [vmem:[%s819 + $0x38] sm:$0xff]
        %v1318 = vunpack.c.l.s8.bf16 %v1310
        %v1319 = vunpack.c.l.s8.bf16 %v1311
        %v1320 = vunpack.c.h.s8.bf16 %v1310
        %v1321 = vunpack.c.h.s8.bf16 %v1311
        %v1322 = vunpack.c.l.s8.bf16 %v1312
        %v1323 = vunpack.c.l.s8.bf16 %v1313
        %v1324 = vunpack.c.h.s8.bf16 %v1312
        %v1325 = vunpack.c.h.s8.bf16 %v1313
        %v1326 = vunpack.c.l.s8.bf16 %v1314
        %v1327 = vunpack.c.l.s8.bf16 %v1315
        %v1328 = vunpack.c.h.s8.bf16 %v1314
        %v1329 = vunpack.c.h.s8.bf16 %v1315
        %v1330 = vunpack.c.l.s8.bf16 %v1316
        %v1331 = vunpack.c.l.s8.bf16 %v1317
        %v1332 = vunpack.c.h.s8.bf16 %v1316
        %v1333 = vunpack.c.h.s8.bf16 %v1317
        %1334 = vmatprep.subr.bf16.mxu0 %v1319
        %1335 = vmatpush1.bf16.msra.mxu0 %v1318
        %1336 = vmatprep.subr.bf16.mxu0 %v1321
        %1337 = vmatpush1.bf16.msra.mxu0 %v1320
        %1338 = vmatprep.subr.bf16.mxu0 %v1323
        %1339 = vmatpush1.bf16.msra.mxu0 %v1322
        %1340 = vmatprep.subr.bf16.mxu0 %v1325
        %1341 = vmatpush1.bf16.msra.mxu0 %v1324
        %1342 = vmatprep.subr.bf16.mxu0 %v1327
        %1343 = vmatpush1.bf16.msra.mxu0 %v1326
        %1344 = vmatprep.subr.bf16.mxu0 %v1329
        %1345 = vmatpush1.bf16.msra.mxu0 %v1328
        %1346 = vmatprep.subr.bf16.mxu0 %v1331
        %1347 = vmatpush1.bf16.msra.mxu0 %v1330
        %1348 = vmatprep.subr.bf16.mxu0 %v1333
        %1349 = vmatpush1.bf16.msra.mxu0 %v1332
        %1350 = vmatprep.subr.bf16.mxu0 0
        %1351 = vmatpush1.bf16.msra.mxu0 0
        %1352 = vmatprep.subr.bf16.mxu0 0
        %1353 = vmatpush1.bf16.msra.mxu0 0
        %1354 = vmatprep.subr.bf16.mxu0 0
        %1355 = vmatpush1.bf16.msra.mxu0 0
        %1356 = vmatprep.subr.bf16.mxu0 0
        %1357 = vmatpush1.bf16.msra.mxu0 0
        %1358 = vmatprep.subr.bf16.mxu0 0
        %1359 = vmatpush1.bf16.msra.mxu0 0
        %1360 = vmatprep.subr.bf16.mxu0 0
        %1361 = vmatpush1.bf16.msra.mxu0 0
        %1362 = vmatprep.subr.bf16.mxu0 0
        %1363 = vmatpush1.bf16.msra.mxu0 0
        %1364 = vmatprep.subr.bf16.mxu0 0
        %1365 = vmatpush1.bf16.msra.mxu0 0
        %1366 = vmatprep.mubr.bf16.mxu0 0
        %1367 = vmatmul.mubr.bf16.gmra.mrb[0].mxu0 %v1109
        %v1368 = vpop.f32.mrb[0].mxu0
        %v1369 = vadd.f32 0.0, %v1368
        %v1370 = vpop.f32.mrb[0].mxu0
        %v1371 = vadd.f32 0.0, %v1370
        %v1372 = vpop.f32.mrb[0].mxu0
        %v1373 = vadd.f32 0.0, %v1372
        %v1374 = vpop.f32.mrb[0].mxu0
        %v1375 = vadd.f32 0.0, %v1374
        %1376 = vdwg.mxu0
        %1377 = vmatprep.subr.bf16.mxu0 %v1183
        %1378 = vmatpush1.bf16.msra.mxu0 %v1182
        %1379 = vmatprep.subr.bf16.mxu0 %v1185
        %1380 = vmatpush1.bf16.msra.mxu0 %v1184
        %1381 = vmatprep.subr.bf16.mxu0 %v1187
        %1382 = vmatpush1.bf16.msra.mxu0 %v1186
        %1383 = vmatprep.subr.bf16.mxu0 %v1189
        %1384 = vmatpush1.bf16.msra.mxu0 %v1188
        %1385 = vmatprep.subr.bf16.mxu0 %v1191
        %1386 = vmatpush1.bf16.msra.mxu0 %v1190
        %1387 = vmatprep.subr.bf16.mxu0 %v1193
        %1388 = vmatpush1.bf16.msra.mxu0 %v1192
        %1389 = vmatprep.subr.bf16.mxu0 %v1195
        %1390 = vmatpush1.bf16.msra.mxu0 %v1194
        %1391 = vmatprep.subr.bf16.mxu0 %v1197
        %1392 = vmatpush1.bf16.msra.mxu0 %v1196
        %1393 = vmatprep.subr.bf16.mxu0 %v1199
        %1394 = vmatpush1.bf16.msra.mxu0 %v1198
        %1395 = vmatprep.subr.bf16.mxu0 %v1201
        %1396 = vmatpush1.bf16.msra.mxu0 %v1200
        %1397 = vmatprep.subr.bf16.mxu0 %v1203
        %1398 = vmatpush1.bf16.msra.mxu0 %v1202
        %1399 = vmatprep.subr.bf16.mxu0 %v1205
        %1400 = vmatpush1.bf16.msra.mxu0 %v1204
        %1401 = vmatprep.subr.bf16.mxu0 %v1207
        %1402 = vmatpush1.bf16.msra.mxu0 %v1206
        %1403 = vmatprep.subr.bf16.mxu0 %v1209
        %1404 = vmatpush1.bf16.msra.mxu0 %v1208
        %1405 = vmatprep.subr.bf16.mxu0 %v1211
        %1406 = vmatpush1.bf16.msra.mxu0 %v1210
        %1407 = vmatprep.subr.bf16.mxu0 %v1213
        %1408 = vmatpush1.bf16.msra.mxu0 %v1212
        %1409 = vmatprep.mubr.bf16.mxu0 %v1111
        %1410 = vmatmul.mubr.bf16.gmra.mrb[0].mxu0 %v1110
        %v1411 = vpop.f32.mrb[0].mxu0
        %v1412 = vadd.f32 %v1369, %v1411
        %v1413 = vpop.f32.mrb[0].mxu0
        %v1414 = vadd.f32 %v1371, %v1413
        %v1415 = vpop.f32.mrb[0].mxu0
        %v1416 = vadd.f32 %v1373, %v1415
        %v1417 = vpop.f32.mrb[0].mxu0
        %v1418 = vadd.f32 %v1375, %v1417
        %1419 = vdwg.mxu0
        %1420 = vmatprep.subr.bf16.mxu0 %v1215
        %1421 = vmatpush1.bf16.msra.mxu0 %v1214
        %1422 = vmatprep.subr.bf16.mxu0 %v1217
        %1423 = vmatpush1.bf16.msra.mxu0 %v1216
        %1424 = vmatprep.subr.bf16.mxu0 %v1219
        %1425 = vmatpush1.bf16.msra.mxu0 %v1218
        %1426 = vmatprep.subr.bf16.mxu0 %v1221
        %1427 = vmatpush1.bf16.msra.mxu0 %v1220
        %1428 = vmatprep.subr.bf16.mxu0 %v1223
        %1429 = vmatpush1.bf16.msra.mxu0 %v1222
        %1430 = vmatprep.subr.bf16.mxu0 %v1225
        %1431 = vmatpush1.bf16.msra.mxu0 %v1224
        %1432 = vmatprep.subr.bf16.mxu0 %v1227
        %1433 = vmatpush1.bf16.msra.mxu0 %v1226
        %1434 = vmatprep.subr.bf16.mxu0 %v1229
        %1435 = vmatpush1.bf16.msra.mxu0 %v1228
        %1436 = vmatprep.subr.bf16.mxu0 %v1231
        %1437 = vmatpush1.bf16.msra.mxu0 %v1230
        %1438 = vmatprep.subr.bf16.mxu0 %v1233
        %1439 = vmatpush1.bf16.msra.mxu0 %v1232
        %1440 = vmatprep.subr.bf16.mxu0 %v1235
        %1441 = vmatpush1.bf16.msra.mxu0 %v1234
        %1442 = vmatprep.subr.bf16.mxu0 %v1237
        %1443 = vmatpush1.bf16.msra.mxu0 %v1236
        %1444 = vmatprep.subr.bf16.mxu0 %v1239
        %1445 = vmatpush1.bf16.msra.mxu0 %v1238
        %1446 = vmatprep.subr.bf16.mxu0 %v1241
        %1447 = vmatpush1.bf16.msra.mxu0 %v1240
        %1448 = vmatprep.subr.bf16.mxu0 %v1243
        %1449 = vmatpush1.bf16.msra.mxu0 %v1242
        %1450 = vmatprep.subr.bf16.mxu0 %v1245
        %1451 = vmatpush1.bf16.msra.mxu0 %v1244
        %1452 = vmatprep.mubr.bf16.mxu0 %v1113
        %1453 = vmatmul.mubr.bf16.gmra.mrb[0].mxu0 %v1112
        %v1454 = vpop.f32.mrb[0].mxu0
        %v1455 = vadd.f32 %v1412, %v1454
        %v1456 = vpop.f32.mrb[0].mxu0
        %v1457 = vadd.f32 %v1414, %v1456
        %v1458 = vpop.f32.mrb[0].mxu0
        %v1459 = vadd.f32 %v1416, %v1458
        %v1460 = vpop.f32.mrb[0].mxu0
        %v1461 = vadd.f32 %v1418, %v1460
        %1462 = vdwg.mxu0
        %1463 = vmatprep.subr.bf16.mxu0 %v1247
        %1464 = vmatpush1.bf16.msra.mxu0 %v1246
        %1465 = vmatprep.subr.bf16.mxu0 %v1249
        %1466 = vmatpush1.bf16.msra.mxu0 %v1248
        %1467 = vmatprep.subr.bf16.mxu0 %v1251
        %1468 = vmatpush1.bf16.msra.mxu0 %v1250
        %1469 = vmatprep.subr.bf16.mxu0 %v1253
        %1470 = vmatpush1.bf16.msra.mxu0 %v1252
        %1471 = vmatprep.subr.bf16.mxu0 %v1255
        %1472 = vmatpush1.bf16.msra.mxu0 %v1254
        %1473 = vmatprep.subr.bf16.mxu0 %v1257
        %1474 = vmatpush1.bf16.msra.mxu0 %v1256
        %1475 = vmatprep.subr.bf16.mxu0 %v1259
        %1476 = vmatpush1.bf16.msra.mxu0 %v1258
        %1477 = vmatprep.subr.bf16.mxu0 %v1261
        %1478 = vmatpush1.bf16.msra.mxu0 %v1260
        %1479 = vmatprep.subr.bf16.mxu0 %v1263
        %1480 = vmatpush1.bf16.msra.mxu0 %v1262
        %1481 = vmatprep.subr.bf16.mxu0 %v1265
        %1482 = vmatpush1.bf16.msra.mxu0 %v1264
        %1483 = vmatprep.subr.bf16.mxu0 %v1267
        %1484 = vmatpush1.bf16.msra.mxu0 %v1266
        %1485 = vmatprep.subr.bf16.mxu0 %v1269
        %1486 = vmatpush1.bf16.msra.mxu0 %v1268
        %1487 = vmatprep.subr.bf16.mxu0 %v1271
        %1488 = vmatpush1.bf16.msra.mxu0 %v1270
        %1489 = vmatprep.subr.bf16.mxu0 %v1273
        %1490 = vmatpush1.bf16.msra.mxu0 %v1272
        %1491 = vmatprep.subr.bf16.mxu0 %v1275
        %1492 = vmatpush1.bf16.msra.mxu0 %v1274
        %1493 = vmatprep.subr.bf16.mxu0 %v1277
        %1494 = vmatpush1.bf16.msra.mxu0 %v1276
        %1495 = vmatprep.mubr.bf16.mxu0 %v1115
        %1496 = vmatmul.mubr.bf16.gmra.mrb[0].mxu0 %v1114
        %v1497 = vpop.f32.mrb[0].mxu0
        %v1498 = vadd.f32 %v1455, %v1497
        %v1499 = vpop.f32.mrb[0].mxu0
        %v1500 = vadd.f32 %v1457, %v1499
        %v1501 = vpop.f32.mrb[0].mxu0
        %v1502 = vadd.f32 %v1459, %v1501
        %v1503 = vpop.f32.mrb[0].mxu0
        %v1504 = vadd.f32 %v1461, %v1503
        %1505 = vdwg.mxu0
        %1506 = vmatprep.subr.bf16.mxu0 %v1279
        %1507 = vmatpush1.bf16.msra.mxu0 %v1278
        %1508 = vmatprep.subr.bf16.mxu0 %v1281
        %1509 = vmatpush1.bf16.msra.mxu0 %v1280
        %1510 = vmatprep.subr.bf16.mxu0 %v1283
        %1511 = vmatpush1.bf16.msra.mxu0 %v1282
        %1512 = vmatprep.subr.bf16.mxu0 %v1285
        %1513 = vmatpush1.bf16.msra.mxu0 %v1284
        %1514 = vmatprep.subr.bf16.mxu0 %v1287
        %1515 = vmatpush1.bf16.msra.mxu0 %v1286
        %1516 = vmatprep.subr.bf16.mxu0 %v1289
        %1517 = vmatpush1.bf16.msra.mxu0 %v1288
        %1518 = vmatprep.subr.bf16.mxu0 %v1291
        %1519 = vmatpush1.bf16.msra.mxu0 %v1290
        %1520 = vmatprep.subr.bf16.mxu0 %v1293
        %1521 = vmatpush1.bf16.msra.mxu0 %v1292
        %1522 = vmatprep.subr.bf16.mxu0 %v1295
        %1523 = vmatpush1.bf16.msra.mxu0 %v1294
        %1524 = vmatprep.subr.bf16.mxu0 %v1297
        %1525 = vmatpush1.bf16.msra.mxu0 %v1296
        %1526 = vmatprep.subr.bf16.mxu0 %v1299
        %1527 = vmatpush1.bf16.msra.mxu0 %v1298
        %1528 = vmatprep.subr.bf16.mxu0 %v1301
        %1529 = vmatpush1.bf16.msra.mxu0 %v1300
        %1530 = vmatprep.subr.bf16.mxu0 %v1303
        %1531 = vmatpush1.bf16.msra.mxu0 %v1302
        %1532 = vmatprep.subr.bf16.mxu0 %v1305
        %1533 = vmatpush1.bf16.msra.mxu0 %v1304
        %1534 = vmatprep.subr.bf16.mxu0 %v1307
        %1535 = vmatpush1.bf16.msra.mxu0 %v1306
        %1536 = vmatprep.subr.bf16.mxu0 %v1309
        %1537 = vmatpush1.bf16.msra.mxu0 %v1308
        %1538 = vmatprep.mubr.bf16.mxu0 %v1117
        %1539 = vmatmul.mubr.bf16.gmra.mrb[0].mxu0 %v1116
        %v1540 = vpop.f32.mrb[0].mxu0
        %v1541 = vadd.f32 %v1498, %v1540
        %v1542 = vpop.f32.mrb[0].mxu0
        %v1543 = vadd.f32 %v1500, %v1542
        %v1544 = vpop.f32.mrb[0].mxu0
        %v1545 = vadd.f32 %v1502, %v1544
        %v1546 = vpop.f32.mrb[0].mxu0
        %v1547 = vadd.f32 %v1504, %v1546
        %1548 = vdwg.mxu0
        %v1549 = vld [vmem:[%s828] sm:$0x3]
        %v1551 = vlaneseq
        %v1552 = vshrl.u32 %v1551, 7
        %v1553 = vsub.s32 0, %v1552
        %v1554 = vrot.slane %v1549, %v1553
        %v1555 = vlaneseq
        %v1556 = vshrl.u32 %v1555, 7
        %v1557 = vsub.s32 1, %v1556
        %v1558 = vrot.slane %v1549, %v1557
        %v1561 = vmul.f32 %v1541, %v1554
        %v1562 = vmul.f32 %v1543, %v1558
        %v1563 = vmul.f32 %v1545, %v1554
        %v1564 = vmul.f32 %v1547, %v1558
        %v1565 = vld [vmem:[%s837] sm:$0x3]
        %v1567 = vlaneseq
        %v1568 = vshrl.u32 %v1567, 7
        %v1569 = vsub.s32 0, %v1568
        %v1570 = vrot.slane %v1565, %v1569
        %v1571 = vlaneseq
        %v1572 = vshrl.u32 %v1571, 7
        %v1573 = vsub.s32 1, %v1572
        %v1574 = vrot.slane %v1565, %v1573
        %v1577 = vadd.f32 %v1561, %v1570
        %v1578 = vadd.f32 %v1562, %v1574
        %v1579 = vadd.f32 %v1563, %v1570
        %v1580 = vadd.f32 %v1564, %v1574
        %v1581 = vmax.f32 %v1577, 0.0
        %v1582 = vmax.f32 %v1578, 0.0
        %v1583 = vmax.f32 %v1579, 0.0
        %v1584 = vmax.f32 %v1580, 0.0
        %v1585 = vpack.c.bf16 %v1583, %v1581
        %v1586 = vpack.c.bf16 %v1584, %v1582
        %v1587 = vld [vmem:[%s846] sm:$0xff]
        %v1588 = vld [vmem:[%s846 + $0x8] sm:$0xff]
        %v1589 = vld [vmem:[%s846 + $0x10] sm:$0xff]
        %v1590 = vld [vmem:[%s846 + $0x18] sm:$0xff]
        %v1591 = vld [vmem:[%s846 + $0x20] sm:$0xff]
        %v1592 = vld [vmem:[%s846 + $0x28] sm:$0xff]
        %v1593 = vld [vmem:[%s846 + $0x30] sm:$0xff]
        %v1594 = vld [vmem:[%s846 + $0x38] sm:$0xff]
        %v1595 = vld [vmem:[%s846 + $0x40] sm:$0xff]
        %v1596 = vld [vmem:[%s846 + $0x48] sm:$0xff]
        %v1597 = vld [vmem:[%s846 + $0x50] sm:$0xff]
        %v1598 = vld [vmem:[%s846 + $0x58] sm:$0xff]
        %v1599 = vld [vmem:[%s846 + $0x60] sm:$0xff]
        %v1600 = vld [vmem:[%s846 + $0x68] sm:$0xff]
        %v1601 = vld [vmem:[%s846 + $0x70] sm:$0xff]
        %v1602 = vld [vmem:[%s846 + $0x78] sm:$0xff]
        %v1603 = vld [vmem:[%s846 + $0x80] sm:$0xff]
        %v1604 = vld [vmem:[%s846 + $0x88] sm:$0xff]
        %v1605 = vld [vmem:[%s846 + $0x90] sm:$0xff]
        %v1606 = vld [vmem:[%s846 + $0x98] sm:$0xff]
        %v1607 = vld [vmem:[%s846 + $0xa0] sm:$0xff]
        %v1608 = vld [vmem:[%s846 + $0xa8] sm:$0xff]
        %v1609 = vld [vmem:[%s846 + $0xb0] sm:$0xff]
        %v1610 = vld [vmem:[%s846 + $0xb8] sm:$0xff]
        %v1611 = vld [vmem:[%s846 + $0xc0] sm:$0xff]
        %v1612 = vld [vmem:[%s846 + $0xc8] sm:$0xff]
        %v1613 = vld [vmem:[%s846 + $0xd0] sm:$0xff]
        %v1614 = vld [vmem:[%s846 + $0xd8] sm:$0xff]
        %v1615 = vld [vmem:[%s846 + $0xe0] sm:$0xff]
        %v1616 = vld [vmem:[%s846 + $0xe8] sm:$0xff]
        %v1617 = vld [vmem:[%s846 + $0xf0] sm:$0xff]
        %v1618 = vld [vmem:[%s846 + $0xf8] sm:$0xff]
        %v1619 = vld [vmem:[%s846 + $0x100] sm:$0xff]
        %v1620 = vld [vmem:[%s846 + $0x108] sm:$0xff]
        %v1621 = vld [vmem:[%s846 + $0x110] sm:$0xff]
        %v1622 = vld [vmem:[%s846 + $0x118] sm:$0xff]
        %v1623 = vld [vmem:[%s846 + $0x120] sm:$0xff]
        %v1624 = vld [vmem:[%s846 + $0x128] sm:$0xff]
        %v1625 = vld [vmem:[%s846 + $0x130] sm:$0xff]
        %v1626 = vld [vmem:[%s846 + $0x138] sm:$0xff]
        %v1627 = vld [vmem:[%s846 + $0x140] sm:$0xff]
        %v1628 = vld [vmem:[%s846 + $0x148] sm:$0xff]
        %v1629 = vld [vmem:[%s846 + $0x150] sm:$0xff]
        %v1630 = vld [vmem:[%s846 + $0x158] sm:$0xff]
        %v1631 = vld [vmem:[%s846 + $0x160] sm:$0xff]
        %v1632 = vld [vmem:[%s846 + $0x168] sm:$0xff]
        %v1633 = vld [vmem:[%s846 + $0x170] sm:$0xff]
        %v1634 = vld [vmem:[%s846 + $0x178] sm:$0xff]
        %v1635 = vld [vmem:[%s846 + $0x180] sm:$0xff]
        %v1636 = vld [vmem:[%s846 + $0x188] sm:$0xff]
        %v1637 = vld [vmem:[%s846 + $0x190] sm:$0xff]
        %v1638 = vld [vmem:[%s846 + $0x198] sm:$0xff]
        %v1639 = vld [vmem:[%s846 + $0x1a0] sm:$0xff]
        %v1640 = vld [vmem:[%s846 + $0x1a8] sm:$0xff]
        %v1641 = vld [vmem:[%s846 + $0x1b0] sm:$0xff]
        %v1642 = vld [vmem:[%s846 + $0x1b8] sm:$0xff]
        %v1643 = vld [vmem:[%s846 + $0x1c0] sm:$0xff]
        %v1644 = vld [vmem:[%s846 + $0x1c8] sm:$0xff]
        %v1645 = vld [vmem:[%s846 + $0x1d0] sm:$0xff]
        %v1646 = vld [vmem:[%s846 + $0x1d8] sm:$0xff]
        %v1647 = vld [vmem:[%s846 + $0x1e0] sm:$0xff]
        %v1648 = vld [vmem:[%s846 + $0x1e8] sm:$0xff]
        %v1649 = vld [vmem:[%s846 + $0x1f0] sm:$0xff]
        %v1650 = vld [vmem:[%s846 + $0x1f8] sm:$0xff]
        %v1651 = vld [vmem:[%s846 + $0x200] sm:$0xff]
        %v1652 = vld [vmem:[%s846 + $0x208] sm:$0xff]
        %v1653 = vld [vmem:[%s846 + $0x210] sm:$0xff]
        %v1654 = vld [vmem:[%s846 + $0x218] sm:$0xff]
        %v1655 = vld [vmem:[%s846 + $0x220] sm:$0xff]
        %v1656 = vld [vmem:[%s846 + $0x228] sm:$0xff]
        %v1657 = vld [vmem:[%s846 + $0x230] sm:$0xff]
        %v1658 = vld [vmem:[%s846 + $0x238] sm:$0xff]
        %v1659 = vld [vmem:[%s846 + $0x240] sm:$0xff]
        %v1660 = vld [vmem:[%s846 + $0x248] sm:$0xff]
        %v1661 = vld [vmem:[%s846 + $0x250] sm:$0xff]
        %v1662 = vld [vmem:[%s846 + $0x258] sm:$0xff]
        %v1663 = vld [vmem:[%s846 + $0x260] sm:$0xff]
        %v1664 = vld [vmem:[%s846 + $0x268] sm:$0xff]
        %v1665 = vld [vmem:[%s846 + $0x270] sm:$0xff]
        %v1666 = vld [vmem:[%s846 + $0x278] sm:$0xff]
        %v1667 = vld [vmem:[%s846 + $0x280] sm:$0xff]
        %v1668 = vld [vmem:[%s846 + $0x288] sm:$0xff]
        %v1669 = vld [vmem:[%s846 + $0x290] sm:$0xff]
        %v1670 = vld [vmem:[%s846 + $0x298] sm:$0xff]
        %v1671 = vld [vmem:[%s846 + $0x2a0] sm:$0xff]
        %v1672 = vld [vmem:[%s846 + $0x2a8] sm:$0xff]
        %v1673 = vld [vmem:[%s846 + $0x2b0] sm:$0xff]
        %v1674 = vld [vmem:[%s846 + $0x2b8] sm:$0xff]
        %v1675 = vld [vmem:[%s846 + $0x2c0] sm:$0xff]
        %v1676 = vld [vmem:[%s846 + $0x2c8] sm:$0xff]
        %v1677 = vld [vmem:[%s846 + $0x2d0] sm:$0xff]
        %v1678 = vld [vmem:[%s846 + $0x2d8] sm:$0xff]
        %v1679 = vld [vmem:[%s846 + $0x2e0] sm:$0xff]
        %v1680 = vld [vmem:[%s846 + $0x2e8] sm:$0xff]
        %v1681 = vld [vmem:[%s846 + $0x2f0] sm:$0xff]
        %v1682 = vld [vmem:[%s846 + $0x2f8] sm:$0xff]
        %v1683 = vld [vmem:[%s846 + $0x300] sm:$0xff]
        %v1684 = vld [vmem:[%s846 + $0x308] sm:$0xff]
        %v1685 = vld [vmem:[%s846 + $0x310] sm:$0xff]
        %v1686 = vld [vmem:[%s846 + $0x318] sm:$0xff]
        %v1687 = vld [vmem:[%s846 + $0x320] sm:$0xff]
        %v1688 = vld [vmem:[%s846 + $0x328] sm:$0xff]
        %v1689 = vld [vmem:[%s846 + $0x330] sm:$0xff]
        %v1690 = vld [vmem:[%s846 + $0x338] sm:$0xff]
        %v1691 = vld [vmem:[%s846 + $0x340] sm:$0xff]
        %v1692 = vld [vmem:[%s846 + $0x348] sm:$0xff]
        %v1693 = vld [vmem:[%s846 + $0x350] sm:$0xff]
        %v1694 = vld [vmem:[%s846 + $0x358] sm:$0xff]
        %v1695 = vld [vmem:[%s846 + $0x360] sm:$0xff]
        %v1696 = vld [vmem:[%s846 + $0x368] sm:$0xff]
        %v1697 = vld [vmem:[%s846 + $0x370] sm:$0xff]
        %v1698 = vld [vmem:[%s846 + $0x378] sm:$0xff]
        %v1699 = vld [vmem:[%s846 + $0x380] sm:$0xff]
        %v1700 = vld [vmem:[%s846 + $0x388] sm:$0xff]
        %v1701 = vld [vmem:[%s846 + $0x390] sm:$0xff]
        %v1702 = vld [vmem:[%s846 + $0x398] sm:$0xff]
        %v1703 = vld [vmem:[%s846 + $0x3a0] sm:$0xff]
        %v1704 = vld [vmem:[%s846 + $0x3a8] sm:$0xff]
        %v1705 = vld [vmem:[%s846 + $0x3b0] sm:$0xff]
        %v1706 = vld [vmem:[%s846 + $0x3b8] sm:$0xff]
        %v1707 = vld [vmem:[%s846 + $0x3c0] sm:$0xff]
        %v1708 = vld [vmem:[%s846 + $0x3c8] sm:$0xff]
        %v1709 = vld [vmem:[%s846 + $0x3d0] sm:$0xff]
        %v1710 = vld [vmem:[%s846 + $0x3d8] sm:$0xff]
        %v1711 = vld [vmem:[%s846 + $0x3e0] sm:$0xff]
        %v1712 = vld [vmem:[%s846 + $0x3e8] sm:$0xff]
        %v1713 = vld [vmem:[%s846 + $0x3f0] sm:$0xff]
        %v1714 = vld [vmem:[%s846 + $0x3f8] sm:$0xff]
        %v1715 = vunpack.c.l.s8.bf16 %v1587
        %v1716 = vunpack.c.l.s8.bf16 %v1588
        %v1717 = vunpack.c.l.s8.bf16 %v1589
        %v1718 = vunpack.c.l.s8.bf16 %v1590
        %v1719 = vunpack.c.l.s8.bf16 %v1591
        %v1720 = vunpack.c.l.s8.bf16 %v1592
        %v1721 = vunpack.c.l.s8.bf16 %v1593
        %v1722 = vunpack.c.l.s8.bf16 %v1594
        %v1723 = vunpack.c.l.s8.bf16 %v1595
        %v1724 = vunpack.c.l.s8.bf16 %v1596
        %v1725 = vunpack.c.l.s8.bf16 %v1597
        %v1726 = vunpack.c.l.s8.bf16 %v1598
        %v1727 = vunpack.c.l.s8.bf16 %v1599
        %v1728 = vunpack.c.l.s8.bf16 %v1600
        %v1729 = vunpack.c.l.s8.bf16 %v1601
        %v1730 = vunpack.c.l.s8.bf16 %v1602
        %v1731 = vunpack.c.h.s8.bf16 %v1587
        %v1732 = vunpack.c.h.s8.bf16 %v1588
        %v1733 = vunpack.c.h.s8.bf16 %v1589
        %v1734 = vunpack.c.h.s8.bf16 %v1590
        %v1735 = vunpack.c.h.s8.bf16 %v1591
        %v1736 = vunpack.c.h.s8.bf16 %v1592
        %v1737 = vunpack.c.h.s8.bf16 %v1593
        %v1738 = vunpack.c.h.s8.bf16 %v1594
        %v1739 = vunpack.c.h.s8.bf16 %v1595
        %v1740 = vunpack.c.h.s8.bf16 %v1596
        %v1741 = vunpack.c.h.s8.bf16 %v1597
        %v1742 = vunpack.c.h.s8.bf16 %v1598
        %v1743 = vunpack.c.h.s8.bf16 %v1599
        %v1744 = vunpack.c.h.s8.bf16 %v1600
        %v1745 = vunpack.c.h.s8.bf16 %v1601
        %v1746 = vunpack.c.h.s8.bf16 %v1602
        %v1747 = vunpack.c.l.s8.bf16 %v1603
        %v1748 = vunpack.c.l.s8.bf16 %v1604
        %v1749 = vunpack.c.l.s8.bf16 %v1605
        %v1750 = vunpack.c.l.s8.bf16 %v1606
        %v1751 = vunpack.c.l.s8.bf16 %v1607
        %v1752 = vunpack.c.l.s8.bf16 %v1608
        %v1753 = vunpack.c.l.s8.bf16 %v1609
        %v1754 = vunpack.c.l.s8.bf16 %v1610
        %v1755 = vunpack.c.l.s8.bf16 %v1611
        %v1756 = vunpack.c.l.s8.bf16 %v1612
        %v1757 = vunpack.c.l.s8.bf16 %v1613
        %v1758 = vunpack.c.l.s8.bf16 %v1614
        %v1759 = vunpack.c.l.s8.bf16 %v1615
        %v1760 = vunpack.c.l.s8.bf16 %v1616
        %v1761 = vunpack.c.l.s8.bf16 %v1617
        %v1762 = vunpack.c.l.s8.bf16 %v1618
        %v1763 = vunpack.c.h.s8.bf16 %v1603
        %v1764 = vunpack.c.h.s8.bf16 %v1604
        %v1765 = vunpack.c.h.s8.bf16 %v1605
        %v1766 = vunpack.c.h.s8.bf16 %v1606
        %v1767 = vunpack.c.h.s8.bf16 %v1607
        %v1768 = vunpack.c.h.s8.bf16 %v1608
        %v1769 = vunpack.c.h.s8.bf16 %v1609
        %v1770 = vunpack.c.h.s8.bf16 %v1610
        %v1771 = vunpack.c.h.s8.bf16 %v1611
        %v1772 = vunpack.c.h.s8.bf16 %v1612
        %v1773 = vunpack.c.h.s8.bf16 %v1613
        %v1774 = vunpack.c.h.s8.bf16 %v1614
        %v1775 = vunpack.c.h.s8.bf16 %v1615
        %v1776 = vunpack.c.h.s8.bf16 %v1616
        %v1777 = vunpack.c.h.s8.bf16 %v1617
        %v1778 = vunpack.c.h.s8.bf16 %v1618
        %v1779 = vunpack.c.l.s8.bf16 %v1619
        %v1780 = vunpack.c.l.s8.bf16 %v1620
        %v1781 = vunpack.c.l.s8.bf16 %v1621
        %v1782 = vunpack.c.l.s8.bf16 %v1622
        %v1783 = vunpack.c.l.s8.bf16 %v1623
        %v1784 = vunpack.c.l.s8.bf16 %v1624
        %v1785 = vunpack.c.l.s8.bf16 %v1625
        %v1786 = vunpack.c.l.s8.bf16 %v1626
        %v1787 = vunpack.c.l.s8.bf16 %v1627
        %v1788 = vunpack.c.l.s8.bf16 %v1628
        %v1789 = vunpack.c.l.s8.bf16 %v1629
        %v1790 = vunpack.c.l.s8.bf16 %v1630
        %v1791 = vunpack.c.l.s8.bf16 %v1631
        %v1792 = vunpack.c.l.s8.bf16 %v1632
        %v1793 = vunpack.c.l.s8.bf16 %v1633
        %v1794 = vunpack.c.l.s8.bf16 %v1634
        %v1795 = vunpack.c.h.s8.bf16 %v1619
        %v1796 = vunpack.c.h.s8.bf16 %v1620
        %v1797 = vunpack.c.h.s8.bf16 %v1621
        %v1798 = vunpack.c.h.s8.bf16 %v1622
        %v1799 = vunpack.c.h.s8.bf16 %v1623
        %v1800 = vunpack.c.h.s8.bf16 %v1624
        %v1801 = vunpack.c.h.s8.bf16 %v1625
        %v1802 = vunpack.c.h.s8.bf16 %v1626
        %v1803 = vunpack.c.h.s8.bf16 %v1627
        %v1804 = vunpack.c.h.s8.bf16 %v1628
        %v1805 = vunpack.c.h.s8.bf16 %v1629
        %v1806 = vunpack.c.h.s8.bf16 %v1630
        %v1807 = vunpack.c.h.s8.bf16 %v1631
        %v1808 = vunpack.c.h.s8.bf16 %v1632
        %v1809 = vunpack.c.h.s8.bf16 %v1633
        %v1810 = vunpack.c.h.s8.bf16 %v1634
        %v1811 = vunpack.c.l.s8.bf16 %v1635
        %v1812 = vunpack.c.l.s8.bf16 %v1636
        %v1813 = vunpack.c.l.s8.bf16 %v1637
        %v1814 = vunpack.c.l.s8.bf16 %v1638
        %v1815 = vunpack.c.l.s8.bf16 %v1639
        %v1816 = vunpack.c.l.s8.bf16 %v1640
        %v1817 = vunpack.c.l.s8.bf16 %v1641
        %v1818 = vunpack.c.l.s8.bf16 %v1642
        %v1819 = vunpack.c.l.s8.bf16 %v1643
        %v1820 = vunpack.c.l.s8.bf16 %v1644
        %v1821 = vunpack.c.l.s8.bf16 %v1645
        %v1822 = vunpack.c.l.s8.bf16 %v1646
        %v1823 = vunpack.c.l.s8.bf16 %v1647
        %v1824 = vunpack.c.l.s8.bf16 %v1648
        %v1825 = vunpack.c.l.s8.bf16 %v1649
        %v1826 = vunpack.c.l.s8.bf16 %v1650
        %v1827 = vunpack.c.h.s8.bf16 %v1635
        %v1828 = vunpack.c.h.s8.bf16 %v1636
        %v1829 = vunpack.c.h.s8.bf16 %v1637
        %v1830 = vunpack.c.h.s8.bf16 %v1638
        %v1831 = vunpack.c.h.s8.bf16 %v1639
        %v1832 = vunpack.c.h.s8.bf16 %v1640
        %v1833 = vunpack.c.h.s8.bf16 %v1641
        %v1834 = vunpack.c.h.s8.bf16 %v1642
        %v1835 = vunpack.c.h.s8.bf16 %v1643
        %v1836 = vunpack.c.h.s8.bf16 %v1644
        %v1837 = vunpack.c.h.s8.bf16 %v1645
        %v1838 = vunpack.c.h.s8.bf16 %v1646
        %v1839 = vunpack.c.h.s8.bf16 %v1647
        %v1840 = vunpack.c.h.s8.bf16 %v1648
        %v1841 = vunpack.c.h.s8.bf16 %v1649
        %v1842 = vunpack.c.h.s8.bf16 %v1650
        %v1843 = vunpack.c.l.s8.bf16 %v1651
        %v1844 = vunpack.c.l.s8.bf16 %v1652
        %v1845 = vunpack.c.l.s8.bf16 %v1653
        %v1846 = vunpack.c.l.s8.bf16 %v1654
        %v1847 = vunpack.c.l.s8.bf16 %v1655
        %v1848 = vunpack.c.l.s8.bf16 %v1656
        %v1849 = vunpack.c.l.s8.bf16 %v1657
        %v1850 = vunpack.c.l.s8.bf16 %v1658
        %v1851 = vunpack.c.l.s8.bf16 %v1659
        %v1852 = vunpack.c.l.s8.bf16 %v1660
        %v1853 = vunpack.c.l.s8.bf16 %v1661
        %v1854 = vunpack.c.l.s8.bf16 %v1662
        %v1855 = vunpack.c.l.s8.bf16 %v1663
        %v1856 = vunpack.c.l.s8.bf16 %v1664
        %v1857 = vunpack.c.l.s8.bf16 %v1665
        %v1858 = vunpack.c.l.s8.bf16 %v1666
        %v1859 = vunpack.c.h.s8.bf16 %v1651
        %v1860 = vunpack.c.h.s8.bf16 %v1652
        %v1861 = vunpack.c.h.s8.bf16 %v1653
        %v1862 = vunpack.c.h.s8.bf16 %v1654
        %v1863 = vunpack.c.h.s8.bf16 %v1655
        %v1864 = vunpack.c.h.s8.bf16 %v1656
        %v1865 = vunpack.c.h.s8.bf16 %v1657
        %v1866 = vunpack.c.h.s8.bf16 %v1658
        %v1867 = vunpack.c.h.s8.bf16 %v1659
        %v1868 = vunpack.c.h.s8.bf16 %v1660
        %v1869 = vunpack.c.h.s8.bf16 %v1661
        %v1870 = vunpack.c.h.s8.bf16 %v1662
        %v1871 = vunpack.c.h.s8.bf16 %v1663
        %v1872 = vunpack.c.h.s8.bf16 %v1664
        %v1873 = vunpack.c.h.s8.bf16 %v1665
        %v1874 = vunpack.c.h.s8.bf16 %v1666
        %v1875 = vunpack.c.l.s8.bf16 %v1667
        %v1876 = vunpack.c.l.s8.bf16 %v1668
        %v1877 = vunpack.c.l.s8.bf16 %v1669
        %v1878 = vunpack.c.l.s8.bf16 %v1670
        %v1879 = vunpack.c.l.s8.bf16 %v1671
        %v1880 = vunpack.c.l.s8.bf16 %v1672
        %v1881 = vunpack.c.l.s8.bf16 %v1673
        %v1882 = vunpack.c.l.s8.bf16 %v1674
        %v1883 = vunpack.c.l.s8.bf16 %v1675
        %v1884 = vunpack.c.l.s8.bf16 %v1676
        %v1885 = vunpack.c.l.s8.bf16 %v1677
        %v1886 = vunpack.c.l.s8.bf16 %v1678
        %v1887 = vunpack.c.l.s8.bf16 %v1679
        %v1888 = vunpack.c.l.s8.bf16 %v1680
        %v1889 = vunpack.c.l.s8.bf16 %v1681
        %v1890 = vunpack.c.l.s8.bf16 %v1682
        %v1891 = vunpack.c.h.s8.bf16 %v1667
        %v1892 = vunpack.c.h.s8.bf16 %v1668
        %v1893 = vunpack.c.h.s8.bf16 %v1669
        %v1894 = vunpack.c.h.s8.bf16 %v1670
        %v1895 = vunpack.c.h.s8.bf16 %v1671
        %v1896 = vunpack.c.h.s8.bf16 %v1672
        %v1897 = vunpack.c.h.s8.bf16 %v1673
        %v1898 = vunpack.c.h.s8.bf16 %v1674
        %v1899 = vunpack.c.h.s8.bf16 %v1675
        %v1900 = vunpack.c.h.s8.bf16 %v1676
        %v1901 = vunpack.c.h.s8.bf16 %v1677
        %v1902 = vunpack.c.h.s8.bf16 %v1678
        %v1903 = vunpack.c.h.s8.bf16 %v1679
        %v1904 = vunpack.c.h.s8.bf16 %v1680
        %v1905 = vunpack.c.h.s8.bf16 %v1681
        %v1906 = vunpack.c.h.s8.bf16 %v1682
        %v1907 = vunpack.c.l.s8.bf16 %v1683
        %v1908 = vunpack.c.l.s8.bf16 %v1684
        %v1909 = vunpack.c.l.s8.bf16 %v1685
        %v1910 = vunpack.c.l.s8.bf16 %v1686
        %v1911 = vunpack.c.l.s8.bf16 %v1687
        %v1912 = vunpack.c.l.s8.bf16 %v1688
        %v1913 = vunpack.c.l.s8.bf16 %v1689
        %v1914 = vunpack.c.l.s8.bf16 %v1690
        %v1915 = vunpack.c.l.s8.bf16 %v1691
        %v1916 = vunpack.c.l.s8.bf16 %v1692
        %v1917 = vunpack.c.l.s8.bf16 %v1693
        %v1918 = vunpack.c.l.s8.bf16 %v1694
        %v1919 = vunpack.c.l.s8.bf16 %v1695
        %v1920 = vunpack.c.l.s8.bf16 %v1696
        %v1921 = vunpack.c.l.s8.bf16 %v1697
        %v1922 = vunpack.c.l.s8.bf16 %v1698
        %v1923 = vunpack.c.h.s8.bf16 %v1683
        %v1924 = vunpack.c.h.s8.bf16 %v1684
        %v1925 = vunpack.c.h.s8.bf16 %v1685
        %v1926 = vunpack.c.h.s8.bf16 %v1686
        %v1927 = vunpack.c.h.s8.bf16 %v1687
        %v1928 = vunpack.c.h.s8.bf16 %v1688
        %v1929 = vunpack.c.h.s8.bf16 %v1689
        %v1930 = vunpack.c.h.s8.bf16 %v1690
        %v1931 = vunpack.c.h.s8.bf16 %v1691
        %v1932 = vunpack.c.h.s8.bf16 %v1692
        %v1933 = vunpack.c.h.s8.bf16 %v1693
        %v1934 = vunpack.c.h.s8.bf16 %v1694
        %v1935 = vunpack.c.h.s8.bf16 %v1695
        %v1936 = vunpack.c.h.s8.bf16 %v1696
        %v1937 = vunpack.c.h.s8.bf16 %v1697
        %v1938 = vunpack.c.h.s8.bf16 %v1698
        %v1939 = vunpack.c.l.s8.bf16 %v1699
        %v1940 = vunpack.c.l.s8.bf16 %v1700
        %v1941 = vunpack.c.l.s8.bf16 %v1701
        %v1942 = vunpack.c.l.s8.bf16 %v1702
        %v1943 = vunpack.c.l.s8.bf16 %v1703
        %v1944 = vunpack.c.l.s8.bf16 %v1704
        %v1945 = vunpack.c.l.s8.bf16 %v1705
        %v1946 = vunpack.c.l.s8.bf16 %v1706
        %v1947 = vunpack.c.l.s8.bf16 %v1707
        %v1948 = vunpack.c.l.s8.bf16 %v1708
        %v1949 = vunpack.c.l.s8.bf16 %v1709
        %v1950 = vunpack.c.l.s8.bf16 %v1710
        %v1951 = vunpack.c.l.s8.bf16 %v1711
        %v1952 = vunpack.c.l.s8.bf16 %v1712
        %v1953 = vunpack.c.l.s8.bf16 %v1713
        %v1954 = vunpack.c.l.s8.bf16 %v1714
        %v1955 = vunpack.c.h.s8.bf16 %v1699
        %v1956 = vunpack.c.h.s8.bf16 %v1700
        %v1957 = vunpack.c.h.s8.bf16 %v1701
        %v1958 = vunpack.c.h.s8.bf16 %v1702
        %v1959 = vunpack.c.h.s8.bf16 %v1703
        %v1960 = vunpack.c.h.s8.bf16 %v1704
        %v1961 = vunpack.c.h.s8.bf16 %v1705
        %v1962 = vunpack.c.h.s8.bf16 %v1706
        %v1963 = vunpack.c.h.s8.bf16 %v1707
        %v1964 = vunpack.c.h.s8.bf16 %v1708
        %v1965 = vunpack.c.h.s8.bf16 %v1709
        %v1966 = vunpack.c.h.s8.bf16 %v1710
        %v1967 = vunpack.c.h.s8.bf16 %v1711
        %v1968 = vunpack.c.h.s8.bf16 %v1712
        %v1969 = vunpack.c.h.s8.bf16 %v1713
        %v1970 = vunpack.c.h.s8.bf16 %v1714
        %1971 = vmatprep.subr.bf16.mxu0 %v1716
        %1972 = vmatpush1.bf16.msra.mxu0 %v1715
        %1973 = vmatprep.subr.bf16.mxu0 %v1732
        %1974 = vmatpush1.bf16.msra.mxu0 %v1731
        %1975 = vmatprep.subr.bf16.mxu0 %v1748
        %1976 = vmatpush1.bf16.msra.mxu0 %v1747
        %1977 = vmatprep.subr.bf16.mxu0 %v1764
        %1978 = vmatpush1.bf16.msra.mxu0 %v1763
        %1979 = vmatprep.subr.bf16.mxu0 %v1780
        %1980 = vmatpush1.bf16.msra.mxu0 %v1779
        %1981 = vmatprep.subr.bf16.mxu0 %v1796
        %1982 = vmatpush1.bf16.msra.mxu0 %v1795
        %1983 = vmatprep.subr.bf16.mxu0 %v1812
        %1984 = vmatpush1.bf16.msra.mxu0 %v1811
        %1985 = vmatprep.subr.bf16.mxu0 %v1828
        %1986 = vmatpush1.bf16.msra.mxu0 %v1827
        %1987 = vmatprep.subr.bf16.mxu0 %v1844
        %1988 = vmatpush1.bf16.msra.mxu0 %v1843
        %1989 = vmatprep.subr.bf16.mxu0 %v1860
        %1990 = vmatpush1.bf16.msra.mxu0 %v1859
        %1991 = vmatprep.subr.bf16.mxu0 %v1876
        %1992 = vmatpush1.bf16.msra.mxu0 %v1875
        %1993 = vmatprep.subr.bf16.mxu0 %v1892
        %1994 = vmatpush1.bf16.msra.mxu0 %v1891
        %1995 = vmatprep.subr.bf16.mxu0 %v1908
        %1996 = vmatpush1.bf16.msra.mxu0 %v1907
        %1997 = vmatprep.subr.bf16.mxu0 %v1924
        %1998 = vmatpush1.bf16.msra.mxu0 %v1923
        %1999 = vmatprep.subr.bf16.mxu0 %v1940
        %2000 = vmatpush1.bf16.msra.mxu0 %v1939
        %2001 = vmatprep.subr.bf16.mxu0 %v1956
        %2002 = vmatpush1.bf16.msra.mxu0 %v1955
        %2003 = vmatprep.mubr.bf16.mxu0 %v1586
        %2004 = vmatmul.mubr.bf16.gmra.mrb[0].mxu0 %v1585
        %v2005 = vpop.f32.mrb[0].mxu0
        %v2006 = vadd.f32 0.0, %v2005
        %v2007 = vpop.f32.mrb[0].mxu0
        %v2008 = vadd.f32 0.0, %v2007
        %v2009 = vpop.f32.mrb[0].mxu0
        %v2010 = vadd.f32 0.0, %v2009
        %v2011 = vpop.f32.mrb[0].mxu0
        %v2012 = vadd.f32 0.0, %v2011
        %2013 = vdwg.mxu0
        %2014 = vmatprep.subr.bf16.mxu0 %v1718
        %2015 = vmatpush1.bf16.msra.mxu0 %v1717
        %2016 = vmatprep.subr.bf16.mxu0 %v1734
        %2017 = vmatpush1.bf16.msra.mxu0 %v1733
        %2018 = vmatprep.subr.bf16.mxu0 %v1750
        %2019 = vmatpush1.bf16.msra.mxu0 %v1749
        %2020 = vmatprep.subr.bf16.mxu0 %v1766
        %2021 = vmatpush1.bf16.msra.mxu0 %v1765
        %2022 = vmatprep.subr.bf16.mxu0 %v1782
        %2023 = vmatpush1.bf16.msra.mxu0 %v1781
        %2024 = vmatprep.subr.bf16.mxu0 %v1798
        %2025 = vmatpush1.bf16.msra.mxu0 %v1797
        %2026 = vmatprep.subr.bf16.mxu0 %v1814
        %2027 = vmatpush1.bf16.msra.mxu0 %v1813
        %2028 = vmatprep.subr.bf16.mxu0 %v1830
        %2029 = vmatpush1.bf16.msra.mxu0 %v1829
        %2030 = vmatprep.subr.bf16.mxu0 %v1846
        %2031 = vmatpush1.bf16.msra.mxu0 %v1845
        %2032 = vmatprep.subr.bf16.mxu0 %v1862
        %2033 = vmatpush1.bf16.msra.mxu0 %v1861
        %2034 = vmatprep.subr.bf16.mxu0 %v1878
        %2035 = vmatpush1.bf16.msra.mxu0 %v1877
        %2036 = vmatprep.subr.bf16.mxu0 %v1894
        %2037 = vmatpush1.bf16.msra.mxu0 %v1893
        %2038 = vmatprep.subr.bf16.mxu0 %v1910
        %2039 = vmatpush1.bf16.msra.mxu0 %v1909
        %2040 = vmatprep.subr.bf16.mxu0 %v1926
        %2041 = vmatpush1.bf16.msra.mxu0 %v1925
        %2042 = vmatprep.subr.bf16.mxu0 %v1942
        %2043 = vmatpush1.bf16.msra.mxu0 %v1941
        %2044 = vmatprep.subr.bf16.mxu0 %v1958
        %2045 = vmatpush1.bf16.msra.mxu0 %v1957
        %2046 = vmatprep.mubr.bf16.mxu0 %v1586
        %2047 = vmatmul.mubr.bf16.gmra.mrb[0].mxu0 %v1585
        %v2048 = vpop.f32.mrb[0].mxu0
        %v2049 = vadd.f32 0.0, %v2048
        %v2050 = vpop.f32.mrb[0].mxu0
        %v2051 = vadd.f32 0.0, %v2050
        %v2052 = vpop.f32.mrb[0].mxu0
        %v2053 = vadd.f32 0.0, %v2052
        %v2054 = vpop.f32.mrb[0].mxu0
        %v2055 = vadd.f32 0.0, %v2054
        %2056 = vdwg.mxu0
        %2057 = vmatprep.subr.bf16.mxu0 %v1720
        %2058 = vmatpush1.bf16.msra.mxu0 %v1719
        %2059 = vmatprep.subr.bf16.mxu0 %v1736
        %2060 = vmatpush1.bf16.msra.mxu0 %v1735
        %2061 = vmatprep.subr.bf16.mxu0 %v1752
        %2062 = vmatpush1.bf16.msra.mxu0 %v1751
        %2063 = vmatprep.subr.bf16.mxu0 %v1768
        %2064 = vmatpush1.bf16.msra.mxu0 %v1767
        %2065 = vmatprep.subr.bf16.mxu0 %v1784
        %2066 = vmatpush1.bf16.msra.mxu0 %v1783
        %2067 = vmatprep.subr.bf16.mxu0 %v1800
        %2068 = vmatpush1.bf16.msra.mxu0 %v1799
        %2069 = vmatprep.subr.bf16.mxu0 %v1816
        %2070 = vmatpush1.bf16.msra.mxu0 %v1815
        %2071 = vmatprep.subr.bf16.mxu0 %v1832
        %2072 = vmatpush1.bf16.msra.mxu0 %v1831
        %2073 = vmatprep.subr.bf16.mxu0 %v1848
        %2074 = vmatpush1.bf16.msra.mxu0 %v1847
        %2075 = vmatprep.subr.bf16.mxu0 %v1864
        %2076 = vmatpush1.bf16.msra.mxu0 %v1863
        %2077 = vmatprep.subr.bf16.mxu0 %v1880
        %2078 = vmatpush1.bf16.msra.mxu0 %v1879
        %2079 = vmatprep.subr.bf16.mxu0 %v1896
        %2080 = vmatpush1.bf16.msra.mxu0 %v1895
        %2081 = vmatprep.subr.bf16.mxu0 %v1912
        %2082 = vmatpush1.bf16.msra.mxu0 %v1911
        %2083 = vmatprep.subr.bf16.mxu0 %v1928
        %2084 = vmatpush1.bf16.msra.mxu0 %v1927
        %2085 = vmatprep.subr.bf16.mxu0 %v1944
        %2086 = vmatpush1.bf16.msra.mxu0 %v1943
        %2087 = vmatprep.subr.bf16.mxu0 %v1960
        %2088 = vmatpush1.bf16.msra.mxu0 %v1959
        %2089 = vmatprep.mubr.bf16.mxu0 %v1586
        %2090 = vmatmul.mubr.bf16.gmra.mrb[0].mxu0 %v1585
        %v2091 = vpop.f32.mrb[0].mxu0
        %v2092 = vadd.f32 0.0, %v2091
        %v2093 = vpop.f32.mrb[0].mxu0
        %v2094 = vadd.f32 0.0, %v2093
        %v2095 = vpop.f32.mrb[0].mxu0
        %v2096 = vadd.f32 0.0, %v2095
        %v2097 = vpop.f32.mrb[0].mxu0
        %v2098 = vadd.f32 0.0, %v2097
        %2099 = vdwg.mxu0
        %2100 = vmatprep.subr.bf16.mxu0 %v1722
        %2101 = vmatpush1.bf16.msra.mxu0 %v1721
        %2102 = vmatprep.subr.bf16.mxu0 %v1738
        %2103 = vmatpush1.bf16.msra.mxu0 %v1737
        %2104 = vmatprep.subr.bf16.mxu0 %v1754
        %2105 = vmatpush1.bf16.msra.mxu0 %v1753
        %2106 = vmatprep.subr.bf16.mxu0 %v1770
        %2107 = vmatpush1.bf16.msra.mxu0 %v1769
        %2108 = vmatprep.subr.bf16.mxu0 %v1786
        %2109 = vmatpush1.bf16.msra.mxu0 %v1785
        %2110 = vmatprep.subr.bf16.mxu0 %v1802
        %2111 = vmatpush1.bf16.msra.mxu0 %v1801
        %2112 = vmatprep.subr.bf16.mxu0 %v1818
        %2113 = vmatpush1.bf16.msra.mxu0 %v1817
        %2114 = vmatprep.subr.bf16.mxu0 %v1834
        %2115 = vmatpush1.bf16.msra.mxu0 %v1833
        %2116 = vmatprep.subr.bf16.mxu0 %v1850
        %2117 = vmatpush1.bf16.msra.mxu0 %v1849
        %2118 = vmatprep.subr.bf16.mxu0 %v1866
        %2119 = vmatpush1.bf16.msra.mxu0 %v1865
        %2120 = vmatprep.subr.bf16.mxu0 %v1882
        %2121 = vmatpush1.bf16.msra.mxu0 %v1881
        %2122 = vmatprep.subr.bf16.mxu0 %v1898
        %2123 = vmatpush1.bf16.msra.mxu0 %v1897
        %2124 = vmatprep.subr.bf16.mxu0 %v1914
        %2125 = vmatpush1.bf16.msra.mxu0 %v1913
        %2126 = vmatprep.subr.bf16.mxu0 %v1930
        %2127 = vmatpush1.bf16.msra.mxu0 %v1929
        %2128 = vmatprep.subr.bf16.mxu0 %v1946
        %2129 = vmatpush1.bf16.msra.mxu0 %v1945
        %2130 = vmatprep.subr.bf16.mxu0 %v1962
        %2131 = vmatpush1.bf16.msra.mxu0 %v1961
        %2132 = vmatprep.mubr.bf16.mxu0 %v1586
        %2133 = vmatmul.mubr.bf16.gmra.mrb[0].mxu0 %v1585
        %v2134 = vpop.f32.mrb[0].mxu0
        %v2135 = vadd.f32 0.0, %v2134
        %v2136 = vpop.f32.mrb[0].mxu0
        %v2137 = vadd.f32 0.0, %v2136
        %v2138 = vpop.f32.mrb[0].mxu0
        %v2139 = vadd.f32 0.0, %v2138
        %v2140 = vpop.f32.mrb[0].mxu0
        %v2141 = vadd.f32 0.0, %v2140
        %2142 = vdwg.mxu0
        %2143 = vmatprep.subr.bf16.mxu0 %v1724
        %2144 = vmatpush1.bf16.msra.mxu0 %v1723
        %2145 = vmatprep.subr.bf16.mxu0 %v1740
        %2146 = vmatpush1.bf16.msra.mxu0 %v1739
        %2147 = vmatprep.subr.bf16.mxu0 %v1756
        %2148 = vmatpush1.bf16.msra.mxu0 %v1755
        %2149 = vmatprep.subr.bf16.mxu0 %v1772
        %2150 = vmatpush1.bf16.msra.mxu0 %v1771
        %2151 = vmatprep.subr.bf16.mxu0 %v1788
        %2152 = vmatpush1.bf16.msra.mxu0 %v1787
        %2153 = vmatprep.subr.bf16.mxu0 %v1804
        %2154 = vmatpush1.bf16.msra.mxu0 %v1803
        %2155 = vmatprep.subr.bf16.mxu0 %v1820
        %2156 = vmatpush1.bf16.msra.mxu0 %v1819
        %2157 = vmatprep.subr.bf16.mxu0 %v1836
        %2158 = vmatpush1.bf16.msra.mxu0 %v1835
        %2159 = vmatprep.subr.bf16.mxu0 %v1852
        %2160 = vmatpush1.bf16.msra.mxu0 %v1851
        %2161 = vmatprep.subr.bf16.mxu0 %v1868
        %2162 = vmatpush1.bf16.msra.mxu0 %v1867
        %2163 = vmatprep.subr.bf16.mxu0 %v1884
        %2164 = vmatpush1.bf16.msra.mxu0 %v1883
        %2165 = vmatprep.subr.bf16.mxu0 %v1900
        %2166 = vmatpush1.bf16.msra.mxu0 %v1899
        %2167 = vmatprep.subr.bf16.mxu0 %v1916
        %2168 = vmatpush1.bf16.msra.mxu0 %v1915
        %2169 = vmatprep.subr.bf16.mxu0 %v1932
        %2170 = vmatpush1.bf16.msra.mxu0 %v1931
        %2171 = vmatprep.subr.bf16.mxu0 %v1948
        %2172 = vmatpush1.bf16.msra.mxu0 %v1947
        %2173 = vmatprep.subr.bf16.mxu0 %v1964
        %2174 = vmatpush1.bf16.msra.mxu0 %v1963
        %2175 = vmatprep.mubr.bf16.mxu0 %v1586
        %2176 = vmatmul.mubr.bf16.gmra.mrb[0].mxu0 %v1585
        %v2177 = vpop.f32.mrb[0].mxu0
        %v2178 = vadd.f32 0.0, %v2177
        %v2179 = vpop.f32.mrb[0].mxu0
        %v2180 = vadd.f32 0.0, %v2179
        %v2181 = vpop.f32.mrb[0].mxu0
        %v2182 = vadd.f32 0.0, %v2181
        %v2183 = vpop.f32.mrb[0].mxu0
        %v2184 = vadd.f32 0.0, %v2183
        %2185 = vdwg.mxu0
        %2186 = vmatprep.subr.bf16.mxu0 %v1726
        %2187 = vmatpush1.bf16.msra.mxu0 %v1725
        %2188 = vmatprep.subr.bf16.mxu0 %v1742
        %2189 = vmatpush1.bf16.msra.mxu0 %v1741
        %2190 = vmatprep.subr.bf16.mxu0 %v1758
        %2191 = vmatpush1.bf16.msra.mxu0 %v1757
        %2192 = vmatprep.subr.bf16.mxu0 %v1774
        %2193 = vmatpush1.bf16.msra.mxu0 %v1773
        %2194 = vmatprep.subr.bf16.mxu0 %v1790
        %2195 = vmatpush1.bf16.msra.mxu0 %v1789
        %2196 = vmatprep.subr.bf16.mxu0 %v1806
        %2197 = vmatpush1.bf16.msra.mxu0 %v1805
        %2198 = vmatprep.subr.bf16.mxu0 %v1822
        %2199 = vmatpush1.bf16.msra.mxu0 %v1821
        %2200 = vmatprep.subr.bf16.mxu0 %v1838
        %2201 = vmatpush1.bf16.msra.mxu0 %v1837
        %2202 = vmatprep.subr.bf16.mxu0 %v1854
        %2203 = vmatpush1.bf16.msra.mxu0 %v1853
        %2204 = vmatprep.subr.bf16.mxu0 %v1870
        %2205 = vmatpush1.bf16.msra.mxu0 %v1869
        %2206 = vmatprep.subr.bf16.mxu0 %v1886
        %2207 = vmatpush1.bf16.msra.mxu0 %v1885
        %2208 = vmatprep.subr.bf16.mxu0 %v1902
        %2209 = vmatpush1.bf16.msra.mxu0 %v1901
        %2210 = vmatprep.subr.bf16.mxu0 %v1918
        %2211 = vmatpush1.bf16.msra.mxu0 %v1917
        %2212 = vmatprep.subr.bf16.mxu0 %v1934
        %2213 = vmatpush1.bf16.msra.mxu0 %v1933
        %2214 = vmatprep.subr.bf16.mxu0 %v1950
        %2215 = vmatpush1.bf16.msra.mxu0 %v1949
        %2216 = vmatprep.subr.bf16.mxu0 %v1966
        %2217 = vmatpush1.bf16.msra.mxu0 %v1965
        %2218 = vmatprep.mubr.bf16.mxu0 %v1586
        %2219 = vmatmul.mubr.bf16.gmra.mrb[0].mxu0 %v1585
        %v2220 = vpop.f32.mrb[0].mxu0
        %v2221 = vadd.f32 0.0, %v2220
        %v2222 = vpop.f32.mrb[0].mxu0
        %v2223 = vadd.f32 0.0, %v2222
        %v2224 = vpop.f32.mrb[0].mxu0
        %v2225 = vadd.f32 0.0, %v2224
        %v2226 = vpop.f32.mrb[0].mxu0
        %v2227 = vadd.f32 0.0, %v2226
        %2228 = vdwg.mxu0
        %2229 = vmatprep.subr.bf16.mxu0 %v1728
        %2230 = vmatpush1.bf16.msra.mxu0 %v1727
        %2231 = vmatprep.subr.bf16.mxu0 %v1744
        %2232 = vmatpush1.bf16.msra.mxu0 %v1743
        %2233 = vmatprep.subr.bf16.mxu0 %v1760
        %2234 = vmatpush1.bf16.msra.mxu0 %v1759
        %2235 = vmatprep.subr.bf16.mxu0 %v1776
        %2236 = vmatpush1.bf16.msra.mxu0 %v1775
        %2237 = vmatprep.subr.bf16.mxu0 %v1792
        %2238 = vmatpush1.bf16.msra.mxu0 %v1791
        %2239 = vmatprep.subr.bf16.mxu0 %v1808
        %2240 = vmatpush1.bf16.msra.mxu0 %v1807
        %2241 = vmatprep.subr.bf16.mxu0 %v1824
        %2242 = vmatpush1.bf16.msra.mxu0 %v1823
        %2243 = vmatprep.subr.bf16.mxu0 %v1840
        %2244 = vmatpush1.bf16.msra.mxu0 %v1839
        %2245 = vmatprep.subr.bf16.mxu0 %v1856
        %2246 = vmatpush1.bf16.msra.mxu0 %v1855
        %2247 = vmatprep.subr.bf16.mxu0 %v1872
        %2248 = vmatpush1.bf16.msra.mxu0 %v1871
        %2249 = vmatprep.subr.bf16.mxu0 %v1888
        %2250 = vmatpush1.bf16.msra.mxu0 %v1887
        %2251 = vmatprep.subr.bf16.mxu0 %v1904
        %2252 = vmatpush1.bf16.msra.mxu0 %v1903
        %2253 = vmatprep.subr.bf16.mxu0 %v1920
        %2254 = vmatpush1.bf16.msra.mxu0 %v1919
        %2255 = vmatprep.subr.bf16.mxu0 %v1936
        %2256 = vmatpush1.bf16.msra.mxu0 %v1935
        %2257 = vmatprep.subr.bf16.mxu0 %v1952
        %2258 = vmatpush1.bf16.msra.mxu0 %v1951
        %2259 = vmatprep.subr.bf16.mxu0 %v1968
        %2260 = vmatpush1.bf16.msra.mxu0 %v1967
        %2261 = vmatprep.mubr.bf16.mxu0 %v1586
        %2262 = vmatmul.mubr.bf16.gmra.mrb[0].mxu0 %v1585
        %v2263 = vpop.f32.mrb[0].mxu0
        %v2264 = vadd.f32 0.0, %v2263
        %v2265 = vpop.f32.mrb[0].mxu0
        %v2266 = vadd.f32 0.0, %v2265
        %v2267 = vpop.f32.mrb[0].mxu0
        %v2268 = vadd.f32 0.0, %v2267
        %v2269 = vpop.f32.mrb[0].mxu0
        %v2270 = vadd.f32 0.0, %v2269
        %2271 = vdwg.mxu0
        %2272 = vmatprep.subr.bf16.mxu0 %v1730
        %2273 = vmatpush1.bf16.msra.mxu0 %v1729
        %2274 = vmatprep.subr.bf16.mxu0 %v1746
        %2275 = vmatpush1.bf16.msra.mxu0 %v1745
        %2276 = vmatprep.subr.bf16.mxu0 %v1762
        %2277 = vmatpush1.bf16.msra.mxu0 %v1761
        %2278 = vmatprep.subr.bf16.mxu0 %v1778
        %2279 = vmatpush1.bf16.msra.mxu0 %v1777
        %2280 = vmatprep.subr.bf16.mxu0 %v1794
        %2281 = vmatpush1.bf16.msra.mxu0 %v1793
        %2282 = vmatprep.subr.bf16.mxu0 %v1810
        %2283 = vmatpush1.bf16.msra.mxu0 %v1809
        %2284 = vmatprep.subr.bf16.mxu0 %v1826
        %2285 = vmatpush1.bf16.msra.mxu0 %v1825
        %2286 = vmatprep.subr.bf16.mxu0 %v1842
        %2287 = vmatpush1.bf16.msra.mxu0 %v1841
        %2288 = vmatprep.subr.bf16.mxu0 %v1858
        %2289 = vmatpush1.bf16.msra.mxu0 %v1857
        %2290 = vmatprep.subr.bf16.mxu0 %v1874
        %2291 = vmatpush1.bf16.msra.mxu0 %v1873
        %2292 = vmatprep.subr.bf16.mxu0 %v1890
        %2293 = vmatpush1.bf16.msra.mxu0 %v1889
        %2294 = vmatprep.subr.bf16.mxu0 %v1906
        %2295 = vmatpush1.bf16.msra.mxu0 %v1905
        %2296 = vmatprep.subr.bf16.mxu0 %v1922
        %2297 = vmatpush1.bf16.msra.mxu0 %v1921
        %2298 = vmatprep.subr.bf16.mxu0 %v1938
        %2299 = vmatpush1.bf16.msra.mxu0 %v1937
        %2300 = vmatprep.subr.bf16.mxu0 %v1954
        %2301 = vmatpush1.bf16.msra.mxu0 %v1953
        %2302 = vmatprep.subr.bf16.mxu0 %v1970
        %2303 = vmatpush1.bf16.msra.mxu0 %v1969
        %2304 = vmatprep.mubr.bf16.mxu0 %v1586
        %2305 = vmatmul.mubr.bf16.gmra.mrb[0].mxu0 %v1585
        %v2306 = vpop.f32.mrb[0].mxu0
        %v2307 = vadd.f32 0.0, %v2306
        %v2308 = vpop.f32.mrb[0].mxu0
        %v2309 = vadd.f32 0.0, %v2308
        %v2310 = vpop.f32.mrb[0].mxu0
        %v2311 = vadd.f32 0.0, %v2310
        %v2312 = vpop.f32.mrb[0].mxu0
        %v2313 = vadd.f32 0.0, %v2312
        %2314 = vdwg.mxu0
        %v2315 = vld [vmem:[%s855] sm:$0xff]
        %v2316 = vld [vmem:[%s855 + $0x8] sm:$0xff]
        %v2319 = vlaneseq
        %v2320 = vshrl.u32 %v2319, 7
        %v2321 = vsub.s32 0, %v2320
        %v2322 = vrot.slane %v2315, %v2321
        %v2323 = vlaneseq
        %v2324 = vshrl.u32 %v2323, 7
        %v2325 = vsub.s32 1, %v2324
        %v2326 = vrot.slane %v2315, %v2325
        %v2327 = vlaneseq
        %v2328 = vshrl.u32 %v2327, 7
        %v2329 = vsub.s32 2, %v2328
        %v2330 = vrot.slane %v2315, %v2329
        %v2331 = vlaneseq
        %v2332 = vshrl.u32 %v2331, 7
        %v2333 = vsub.s32 3, %v2332
        %v2334 = vrot.slane %v2315, %v2333
        %v2335 = vlaneseq
        %v2336 = vshrl.u32 %v2335, 7
        %v2337 = vsub.s32 4, %v2336
        %v2338 = vrot.slane %v2315, %v2337
        %v2339 = vlaneseq
        %v2340 = vshrl.u32 %v2339, 7
        %v2341 = vsub.s32 5, %v2340
        %v2342 = vrot.slane %v2315, %v2341
        %v2343 = vlaneseq
        %v2344 = vshrl.u32 %v2343, 7
        %v2345 = vsub.s32 6, %v2344
        %v2346 = vrot.slane %v2315, %v2345
        %v2347 = vlaneseq
        %v2348 = vshrl.u32 %v2347, 7
        %v2349 = vsub.s32 7, %v2348
        %v2350 = vrot.slane %v2315, %v2349
        %v2351 = vlaneseq
        %v2352 = vshrl.u32 %v2351, 7
        %v2353 = vsub.s32 0, %v2352
        %v2354 = vrot.slane %v2316, %v2353
        %v2355 = vlaneseq
        %v2356 = vshrl.u32 %v2355, 7
        %v2357 = vsub.s32 1, %v2356
        %v2358 = vrot.slane %v2316, %v2357
        %v2359 = vlaneseq
        %v2360 = vshrl.u32 %v2359, 7
        %v2361 = vsub.s32 2, %v2360
        %v2362 = vrot.slane %v2316, %v2361
        %v2363 = vlaneseq
        %v2364 = vshrl.u32 %v2363, 7
        %v2365 = vsub.s32 3, %v2364
        %v2366 = vrot.slane %v2316, %v2365
        %v2367 = vlaneseq
        %v2368 = vshrl.u32 %v2367, 7
        %v2369 = vsub.s32 4, %v2368
        %v2370 = vrot.slane %v2316, %v2369
        %v2371 = vlaneseq
        %v2372 = vshrl.u32 %v2371, 7
        %v2373 = vsub.s32 5, %v2372
        %v2374 = vrot.slane %v2316, %v2373
        %v2375 = vlaneseq
        %v2376 = vshrl.u32 %v2375, 7
        %v2377 = vsub.s32 6, %v2376
        %v2378 = vrot.slane %v2316, %v2377
        %v2379 = vlaneseq
        %v2380 = vshrl.u32 %v2379, 7
        %v2381 = vsub.s32 7, %v2380
        %v2382 = vrot.slane %v2316, %v2381
        %v2399 = vmul.f32 %v2006, %v2322
        %v2400 = vmul.f32 %v2008, %v2326
        %v2401 = vmul.f32 %v2049, %v2330
        %v2402 = vmul.f32 %v2051, %v2334
        %v2403 = vmul.f32 %v2092, %v2338
        %v2404 = vmul.f32 %v2094, %v2342
        %v2405 = vmul.f32 %v2135, %v2346
        %v2406 = vmul.f32 %v2137, %v2350
        %v2407 = vmul.f32 %v2178, %v2354
        %v2408 = vmul.f32 %v2180, %v2358
        %v2409 = vmul.f32 %v2221, %v2362
        %v2410 = vmul.f32 %v2223, %v2366
        %v2411 = vmul.f32 %v2264, %v2370
        %v2412 = vmul.f32 %v2266, %v2374
        %v2413 = vmul.f32 %v2307, %v2378
        %v2414 = vmul.f32 %v2309, %v2382
        %v2415 = vmul.f32 %v2010, %v2322
        %v2416 = vmul.f32 %v2012, %v2326
        %v2417 = vmul.f32 %v2053, %v2330
        %v2418 = vmul.f32 %v2055, %v2334
        %v2419 = vmul.f32 %v2096, %v2338
        %v2420 = vmul.f32 %v2098, %v2342
        %v2421 = vmul.f32 %v2139, %v2346
        %v2422 = vmul.f32 %v2141, %v2350
        %v2423 = vmul.f32 %v2182, %v2354
        %v2424 = vmul.f32 %v2184, %v2358
        %v2425 = vmul.f32 %v2225, %v2362
        %v2426 = vmul.f32 %v2227, %v2366
        %v2427 = vmul.f32 %v2268, %v2370
        %v2428 = vmul.f32 %v2270, %v2374
        %v2429 = vmul.f32 %v2311, %v2378
        %v2430 = vmul.f32 %v2313, %v2382
        %v2431 = vld [vmem:[%s864] sm:$0xff]
        %v2432 = vld [vmem:[%s864 + $0x8] sm:$0xff]
        %v2435 = vlaneseq
        %v2436 = vshrl.u32 %v2435, 7
        %v2437 = vsub.s32 0, %v2436
        %v2438 = vrot.slane %v2431, %v2437
        %v2439 = vlaneseq
        %v2440 = vshrl.u32 %v2439, 7
        %v2441 = vsub.s32 1, %v2440
        %v2442 = vrot.slane %v2431, %v2441
        %v2443 = vlaneseq
        %v2444 = vshrl.u32 %v2443, 7
        %v2445 = vsub.s32 2, %v2444
        %v2446 = vrot.slane %v2431, %v2445
        %v2447 = vlaneseq
        %v2448 = vshrl.u32 %v2447, 7
        %v2449 = vsub.s32 3, %v2448
        %v2450 = vrot.slane %v2431, %v2449
        %v2451 = vlaneseq
        %v2452 = vshrl.u32 %v2451, 7
        %v2453 = vsub.s32 4, %v2452
        %v2454 = vrot.slane %v2431, %v2453
        %v2455 = vlaneseq
        %v2456 = vshrl.u32 %v2455, 7
        %v2457 = vsub.s32 5, %v2456
        %v2458 = vrot.slane %v2431, %v2457
        %v2459 = vlaneseq
        %v2460 = vshrl.u32 %v2459, 7
        %v2461 = vsub.s32 6, %v2460
        %v2462 = vrot.slane %v2431, %v2461
        %v2463 = vlaneseq
        %v2464 = vshrl.u32 %v2463, 7
        %v2465 = vsub.s32 7, %v2464
        %v2466 = vrot.slane %v2431, %v2465
        %v2467 = vlaneseq
        %v2468 = vshrl.u32 %v2467, 7
        %v2469 = vsub.s32 0, %v2468
        %v2470 = vrot.slane %v2432, %v2469
        %v2471 = vlaneseq
        %v2472 = vshrl.u32 %v2471, 7
        %v2473 = vsub.s32 1, %v2472
        %v2474 = vrot.slane %v2432, %v2473
        %v2475 = vlaneseq
        %v2476 = vshrl.u32 %v2475, 7
        %v2477 = vsub.s32 2, %v2476
        %v2478 = vrot.slane %v2432, %v2477
        %v2479 = vlaneseq
        %v2480 = vshrl.u32 %v2479, 7
        %v2481 = vsub.s32 3, %v2480
        %v2482 = vrot.slane %v2432, %v2481
        %v2483 = vlaneseq
        %v2484 = vshrl.u32 %v2483, 7
        %v2485 = vsub.s32 4, %v2484
        %v2486 = vrot.slane %v2432, %v2485
        %v2487 = vlaneseq
        %v2488 = vshrl.u32 %v2487, 7
        %v2489 = vsub.s32 5, %v2488
        %v2490 = vrot.slane %v2432, %v2489
        %v2491 = vlaneseq
        %v2492 = vshrl.u32 %v2491, 7
        %v2493 = vsub.s32 6, %v2492
        %v2494 = vrot.slane %v2432, %v2493
        %v2495 = vlaneseq
        %v2496 = vshrl.u32 %v2495, 7
        %v2497 = vsub.s32 7, %v2496
        %v2498 = vrot.slane %v2432, %v2497
        %v2515 = vadd.f32 %v2399, %v2438
        %v2516 = vadd.f32 %v2400, %v2442
        %v2517 = vadd.f32 %v2401, %v2446
        %v2518 = vadd.f32 %v2402, %v2450
        %v2519 = vadd.f32 %v2403, %v2454
        %v2520 = vadd.f32 %v2404, %v2458
        %v2521 = vadd.f32 %v2405, %v2462
        %v2522 = vadd.f32 %v2406, %v2466
        %v2523 = vadd.f32 %v2407, %v2470
        %v2524 = vadd.f32 %v2408, %v2474
        %v2525 = vadd.f32 %v2409, %v2478
        %v2526 = vadd.f32 %v2410, %v2482
        %v2527 = vadd.f32 %v2411, %v2486
        %v2528 = vadd.f32 %v2412, %v2490
        %v2529 = vadd.f32 %v2413, %v2494
        %v2530 = vadd.f32 %v2414, %v2498
        %v2531 = vadd.f32 %v2415, %v2438
        %v2532 = vadd.f32 %v2416, %v2442
        %v2533 = vadd.f32 %v2417, %v2446
        %v2534 = vadd.f32 %v2418, %v2450
        %v2535 = vadd.f32 %v2419, %v2454
        %v2536 = vadd.f32 %v2420, %v2458
        %v2537 = vadd.f32 %v2421, %v2462
        %v2538 = vadd.f32 %v2422, %v2466
        %v2539 = vadd.f32 %v2423, %v2470
        %v2540 = vadd.f32 %v2424, %v2474
        %v2541 = vadd.f32 %v2425, %v2478
        %v2542 = vadd.f32 %v2426, %v2482
        %v2543 = vadd.f32 %v2427, %v2486
        %v2544 = vadd.f32 %v2428, %v2490
        %v2545 = vadd.f32 %v2429, %v2494
        %v2546 = vadd.f32 %v2430, %v2498
        %v2547 = vmul.f32 %v2515, 0.5
        %v2548 = vmul.f32 %v2516, 0.5
        %v2549 = vmul.f32 %v2517, 0.5
        %v2550 = vmul.f32 %v2518, 0.5
        %v2551 = vmul.f32 %v2519, 0.5
        %v2552 = vmul.f32 %v2520, 0.5
        %v2553 = vmul.f32 %v2521, 0.5
        %v2554 = vmul.f32 %v2522, 0.5
        %v2555 = vmul.f32 %v2531, 0.5
        %v2556 = vmul.f32 %v2532, 0.5
        %v2557 = vmul.f32 %v2533, 0.5
        %v2558 = vmul.f32 %v2534, 0.5
        %v2559 = vmul.f32 %v2535, 0.5
        %v2560 = vmul.f32 %v2536, 0.5
        %v2561 = vmul.f32 %v2537, 0.5
        %v2562 = vmul.f32 %v2538, 0.5
        %v2563 = vtanh.pop %v2547
        %v2564 = vtanh.pop %v2548
        %v2565 = vtanh.pop %v2549
        %v2566 = vtanh.pop %v2550
        %v2567 = vtanh.pop %v2551
        %v2568 = vtanh.pop %v2552
        %v2569 = vtanh.pop %v2553
        %v2570 = vtanh.pop %v2554
        %v2571 = vtanh.pop %v2555
        %v2572 = vtanh.pop %v2556
        %v2573 = vtanh.pop %v2557
        %v2574 = vtanh.pop %v2558
        %v2575 = vtanh.pop %v2559
        %v2576 = vtanh.pop %v2560
        %v2577 = vtanh.pop %v2561
        %v2578 = vtanh.pop %v2562
        %v2579 = vmul.f32 %v2563, 2.0
        %v2580 = vmul.f32 %v2564, 2.0
        %v2581 = vmul.f32 %v2565, 2.0
        %v2582 = vmul.f32 %v2566, 2.0
        %v2583 = vmul.f32 %v2567, 2.0
        %v2584 = vmul.f32 %v2568, 2.0
        %v2585 = vmul.f32 %v2569, 2.0
        %v2586 = vmul.f32 %v2570, 2.0
        %v2587 = vmul.f32 %v2571, 2.0
        %v2588 = vmul.f32 %v2572, 2.0
        %v2589 = vmul.f32 %v2573, 2.0
        %v2590 = vmul.f32 %v2574, 2.0
        %v2591 = vmul.f32 %v2575, 2.0
        %v2592 = vmul.f32 %v2576, 2.0
        %v2593 = vmul.f32 %v2577, 2.0
        %v2594 = vmul.f32 %v2578, 2.0
        %v2595 = vmul.f32 %v2579, 1.442695
        %v2596 = vpow.pop %v2595
        %v2597 = vmul.f32 %v2580, 1.442695
        %v2598 = vpow.pop %v2597
        %v2599 = vmul.f32 %v2581, 1.442695
        %v2600 = vpow.pop %v2599
        %v2601 = vmul.f32 %v2582, 1.442695
        %v2602 = vpow.pop %v2601
        %v2603 = vmul.f32 %v2583, 1.442695
        %v2604 = vpow.pop %v2603
        %v2605 = vmul.f32 %v2584, 1.442695
        %v2606 = vpow.pop %v2605
        %v2607 = vmul.f32 %v2585, 1.442695
        %v2608 = vpow.pop %v2607
        %v2609 = vmul.f32 %v2586, 1.442695
        %v2610 = vpow.pop %v2609
        %v2611 = vmul.f32 %v2587, 1.442695
        %v2612 = vpow.pop %v2611
        %v2613 = vmul.f32 %v2588, 1.442695
        %v2614 = vpow.pop %v2613
        %v2615 = vmul.f32 %v2589, 1.442695
        %v2616 = vpow.pop %v2615
        %v2617 = vmul.f32 %v2590, 1.442695
        %v2618 = vpow.pop %v2617
        %v2619 = vmul.f32 %v2591, 1.442695
        %v2620 = vpow.pop %v2619
        %v2621 = vmul.f32 %v2592, 1.442695
        %v2622 = vpow.pop %v2621
        %v2623 = vmul.f32 %v2593, 1.442695
        %v2624 = vpow.pop %v2623
        %v2625 = vmul.f32 %v2594, 1.442695
        %v2626 = vpow.pop %v2625
        %v2627 = vmul.f32 %v1091, %v2596
        %v2628 = vmul.f32 %v1092, %v2598
        %v2629 = vmul.f32 %v1093, %v2600
        %v2630 = vmul.f32 %v1094, %v2602
        %v2631 = vmul.f32 %v1095, %v2604
        %v2632 = vmul.f32 %v1096, %v2606
        %v2633 = vmul.f32 %v1097, %v2608
        %v2634 = vmul.f32 %v1098, %v2610
        %v2635 = vmul.f32 %v1099, %v2612
        %v2636 = vmul.f32 %v1100, %v2614
        %v2637 = vmul.f32 %v1101, %v2616
        %v2638 = vmul.f32 %v1102, %v2618
        %v2639 = vmul.f32 %v1103, %v2620
        %v2640 = vmul.f32 %v1104, %v2622
        %v2641 = vmul.f32 %v1105, %v2624
        %v2642 = vmul.f32 %v1106, %v2626
        %v2643 = vadd.f32 %v2627, %v2523
        %v2644 = vadd.f32 %v2628, %v2524
        %v2645 = vadd.f32 %v2629, %v2525
        %v2646 = vadd.f32 %v2630, %v2526
        %v2647 = vadd.f32 %v2631, %v2527
        %v2648 = vadd.f32 %v2632, %v2528
        %v2649 = vadd.f32 %v2633, %v2529
        %v2650 = vadd.f32 %v2634, %v2530
        %v2651 = vadd.f32 %v2635, %v2539
        %v2652 = vadd.f32 %v2636, %v2540
        %v2653 = vadd.f32 %v2637, %v2541
        %v2654 = vadd.f32 %v2638, %v2542
        %v2655 = vadd.f32 %v2639, %v2543
        %v2656 = vadd.f32 %v2640, %v2544
        %v2657 = vadd.f32 %v2641, %v2545
        %v2658 = vadd.f32 %v2642, %v2546
        %v2659 = vpack.c.bf16 %v2651, %v2643
        %v2660 = vpack.c.bf16 %v2652, %v2644
        %v2661 = vpack.c.bf16 %v2653, %v2645
        %v2662 = vpack.c.bf16 %v2654, %v2646
        %v2663 = vpack.c.bf16 %v2655, %v2647
        %v2664 = vpack.c.bf16 %v2656, %v2648
        %v2665 = vpack.c.bf16 %v2657, %v2649
        %v2666 = vpack.c.bf16 %v2658, %v2650
        %v2667 = vld [vmem:[%s873] sm:$0xff]
        %v2668 = vld [vmem:[%s873 + $0x8] sm:$0xff]
        %v2669 = vld [vmem:[%s873 + $0x10] sm:$0xff]
        %v2670 = vld [vmem:[%s873 + $0x18] sm:$0xff]
        %v2671 = vld [vmem:[%s873 + $0x20] sm:$0xff]
        %v2672 = vld [vmem:[%s873 + $0x28] sm:$0xff]
        %v2673 = vld [vmem:[%s873 + $0x30] sm:$0xff]
        %v2674 = vld [vmem:[%s873 + $0x38] sm:$0xff]
        %v2675 = vld [vmem:[%s873 + $0x40] sm:$0xff]
        %v2676 = vld [vmem:[%s873 + $0x48] sm:$0xff]
        %v2677 = vld [vmem:[%s873 + $0x50] sm:$0xff]
        %v2678 = vld [vmem:[%s873 + $0x58] sm:$0xff]
        %v2679 = vld [vmem:[%s873 + $0x60] sm:$0xff]
        %v2680 = vld [vmem:[%s873 + $0x68] sm:$0xff]
        %v2681 = vld [vmem:[%s873 + $0x70] sm:$0xff]
        %v2682 = vld [vmem:[%s873 + $0x78] sm:$0xff]
        %v2683 = vld [vmem:[%s873 + $0x80] sm:$0xff]
        %v2684 = vld [vmem:[%s873 + $0x88] sm:$0xff]
        %v2685 = vld [vmem:[%s873 + $0x90] sm:$0xff]
        %v2686 = vld [vmem:[%s873 + $0x98] sm:$0xff]
        %v2687 = vld [vmem:[%s873 + $0xa0] sm:$0xff]
        %v2688 = vld [vmem:[%s873 + $0xa8] sm:$0xff]
        %v2689 = vld [vmem:[%s873 + $0xb0] sm:$0xff]
        %v2690 = vld [vmem:[%s873 + $0xb8] sm:$0xff]
        %v2691 = vld [vmem:[%s873 + $0xc0] sm:$0xff]
        %v2692 = vld [vmem:[%s873 + $0xc8] sm:$0xff]
        %v2693 = vld [vmem:[%s873 + $0xd0] sm:$0xff]
        %v2694 = vld [vmem:[%s873 + $0xd8] sm:$0xff]
        %v2695 = vld [vmem:[%s873 + $0xe0] sm:$0xff]
        %v2696 = vld [vmem:[%s873 + $0xe8] sm:$0xff]
        %v2697 = vld [vmem:[%s873 + $0xf0] sm:$0xff]
        %v2698 = vld [vmem:[%s873 + $0xf8] sm:$0xff]
        %v2699 = vld [vmem:[%s873 + $0x100] sm:$0xff]
        %v2700 = vld [vmem:[%s873 + $0x108] sm:$0xff]
        %v2701 = vld [vmem:[%s873 + $0x110] sm:$0xff]
        %v2702 = vld [vmem:[%s873 + $0x118] sm:$0xff]
        %v2703 = vld [vmem:[%s873 + $0x120] sm:$0xff]
        %v2704 = vld [vmem:[%s873 + $0x128] sm:$0xff]
        %v2705 = vld [vmem:[%s873 + $0x130] sm:$0xff]
        %v2706 = vld [vmem:[%s873 + $0x138] sm:$0xff]
        %v2707 = vld [vmem:[%s873 + $0x140] sm:$0xff]
        %v2708 = vld [vmem:[%s873 + $0x148] sm:$0xff]
        %v2709 = vld [vmem:[%s873 + $0x150] sm:$0xff]
        %v2710 = vld [vmem:[%s873 + $0x158] sm:$0xff]
        %v2711 = vld [vmem:[%s873 + $0x160] sm:$0xff]
        %v2712 = vld [vmem:[%s873 + $0x168] sm:$0xff]
        %v2713 = vld [vmem:[%s873 + $0x170] sm:$0xff]
        %v2714 = vld [vmem:[%s873 + $0x178] sm:$0xff]
        %v2715 = vld [vmem:[%s873 + $0x180] sm:$0xff]
        %v2716 = vld [vmem:[%s873 + $0x188] sm:$0xff]
        %v2717 = vld [vmem:[%s873 + $0x190] sm:$0xff]
        %v2718 = vld [vmem:[%s873 + $0x198] sm:$0xff]
        %v2719 = vld [vmem:[%s873 + $0x1a0] sm:$0xff]
        %v2720 = vld [vmem:[%s873 + $0x1a8] sm:$0xff]
        %v2721 = vld [vmem:[%s873 + $0x1b0] sm:$0xff]
        %v2722 = vld [vmem:[%s873 + $0x1b8] sm:$0xff]
        %v2723 = vld [vmem:[%s873 + $0x1c0] sm:$0xff]
        %v2724 = vld [vmem:[%s873 + $0x1c8] sm:$0xff]
        %v2725 = vld [vmem:[%s873 + $0x1d0] sm:$0xff]
        %v2726 = vld [vmem:[%s873 + $0x1d8] sm:$0xff]
        %v2727 = vld [vmem:[%s873 + $0x1e0] sm:$0xff]
        %v2728 = vld [vmem:[%s873 + $0x1e8] sm:$0xff]
        %v2729 = vld [vmem:[%s873 + $0x1f0] sm:$0xff]
        %v2730 = vld [vmem:[%s873 + $0x1f8] sm:$0xff]
        %v2731 = vunpack.c.l.s8.bf16 %v2667
        %v2732 = vunpack.c.l.s8.bf16 %v2668
        %v2733 = vunpack.c.h.s8.bf16 %v2667
        %v2734 = vunpack.c.h.s8.bf16 %v2668
        %v2735 = vunpack.c.l.s8.bf16 %v2669
        %v2736 = vunpack.c.l.s8.bf16 %v2670
        %v2737 = vunpack.c.h.s8.bf16 %v2669
        %v2738 = vunpack.c.h.s8.bf16 %v2670
        %v2739 = vunpack.c.l.s8.bf16 %v2671
        %v2740 = vunpack.c.l.s8.bf16 %v2672
        %v2741 = vunpack.c.h.s8.bf16 %v2671
        %v2742 = vunpack.c.h.s8.bf16 %v2672
        %v2743 = vunpack.c.l.s8.bf16 %v2673
        %v2744 = vunpack.c.l.s8.bf16 %v2674
        %v2745 = vunpack.c.h.s8.bf16 %v2673
        %v2746 = vunpack.c.h.s8.bf16 %v2674
        %v2747 = vunpack.c.l.s8.bf16 %v2675
        %v2748 = vunpack.c.l.s8.bf16 %v2676
        %v2749 = vunpack.c.h.s8.bf16 %v2675
        %v2750 = vunpack.c.h.s8.bf16 %v2676
        %v2751 = vunpack.c.l.s8.bf16 %v2677
        %v2752 = vunpack.c.l.s8.bf16 %v2678
        %v2753 = vunpack.c.h.s8.bf16 %v2677
        %v2754 = vunpack.c.h.s8.bf16 %v2678
        %v2755 = vunpack.c.l.s8.bf16 %v2679
        %v2756 = vunpack.c.l.s8.bf16 %v2680
        %v2757 = vunpack.c.h.s8.bf16 %v2679
        %v2758 = vunpack.c.h.s8.bf16 %v2680
        %v2759 = vunpack.c.l.s8.bf16 %v2681
        %v2760 = vunpack.c.l.s8.bf16 %v2682
        %v2761 = vunpack.c.h.s8.bf16 %v2681
        %v2762 = vunpack.c.h.s8.bf16 %v2682
        %v2763 = vunpack.c.l.s8.bf16 %v2683
        %v2764 = vunpack.c.l.s8.bf16 %v2684
        %v2765 = vunpack.c.h.s8.bf16 %v2683
        %v2766 = vunpack.c.h.s8.bf16 %v2684
        %v2767 = vunpack.c.l.s8.bf16 %v2685
        %v2768 = vunpack.c.l.s8.bf16 %v2686
        %v2769 = vunpack.c.h.s8.bf16 %v2685
        %v2770 = vunpack.c.h.s8.bf16 %v2686
        %v2771 = vunpack.c.l.s8.bf16 %v2687
        %v2772 = vunpack.c.l.s8.bf16 %v2688
        %v2773 = vunpack.c.h.s8.bf16 %v2687
        %v2774 = vunpack.c.h.s8.bf16 %v2688
        %v2775 = vunpack.c.l.s8.bf16 %v2689
        %v2776 = vunpack.c.l.s8.bf16 %v2690
        %v2777 = vunpack.c.h.s8.bf16 %v2689
        %v2778 = vunpack.c.h.s8.bf16 %v2690
        %v2779 = vunpack.c.l.s8.bf16 %v2691
        %v2780 = vunpack.c.l.s8.bf16 %v2692
        %v2781 = vunpack.c.h.s8.bf16 %v2691
        %v2782 = vunpack.c.h.s8.bf16 %v2692
        %v2783 = vunpack.c.l.s8.bf16 %v2693
        %v2784 = vunpack.c.l.s8.bf16 %v2694
        %v2785 = vunpack.c.h.s8.bf16 %v2693
        %v2786 = vunpack.c.h.s8.bf16 %v2694
        %v2787 = vunpack.c.l.s8.bf16 %v2695
        %v2788 = vunpack.c.l.s8.bf16 %v2696
        %v2789 = vunpack.c.h.s8.bf16 %v2695
        %v2790 = vunpack.c.h.s8.bf16 %v2696
        %v2791 = vunpack.c.l.s8.bf16 %v2697
        %v2792 = vunpack.c.l.s8.bf16 %v2698
        %v2793 = vunpack.c.h.s8.bf16 %v2697
        %v2794 = vunpack.c.h.s8.bf16 %v2698
        %v2795 = vunpack.c.l.s8.bf16 %v2699
        %v2796 = vunpack.c.l.s8.bf16 %v2700
        %v2797 = vunpack.c.h.s8.bf16 %v2699
        %v2798 = vunpack.c.h.s8.bf16 %v2700
        %v2799 = vunpack.c.l.s8.bf16 %v2701
        %v2800 = vunpack.c.l.s8.bf16 %v2702
        %v2801 = vunpack.c.h.s8.bf16 %v2701
        %v2802 = vunpack.c.h.s8.bf16 %v2702
        %v2803 = vunpack.c.l.s8.bf16 %v2703
        %v2804 = vunpack.c.l.s8.bf16 %v2704
        %v2805 = vunpack.c.h.s8.bf16 %v2703
        %v2806 = vunpack.c.h.s8.bf16 %v2704
        %v2807 = vunpack.c.l.s8.bf16 %v2705
        %v2808 = vunpack.c.l.s8.bf16 %v2706
        %v2809 = vunpack.c.h.s8.bf16 %v2705
        %v2810 = vunpack.c.h.s8.bf16 %v2706
        %v2811 = vunpack.c.l.s8.bf16 %v2707
        %v2812 = vunpack.c.l.s8.bf16 %v2708
        %v2813 = vunpack.c.h.s8.bf16 %v2707
        %v2814 = vunpack.c.h.s8.bf16 %v2708
        %v2815 = vunpack.c.l.s8.bf16 %v2709
        %v2816 = vunpack.c.l.s8.bf16 %v2710
        %v2817 = vunpack.c.h.s8.bf16 %v2709
        %v2818 = vunpack.c.h.s8.bf16 %v2710
        %v2819 = vunpack.c.l.s8.bf16 %v2711
        %v2820 = vunpack.c.l.s8.bf16 %v2712
        %v2821 = vunpack.c.h.s8.bf16 %v2711
        %v2822 = vunpack.c.h.s8.bf16 %v2712
        %v2823 = vunpack.c.l.s8.bf16 %v2713
        %v2824 = vunpack.c.l.s8.bf16 %v2714
        %v2825 = vunpack.c.h.s8.bf16 %v2713
        %v2826 = vunpack.c.h.s8.bf16 %v2714
        %v2827 = vunpack.c.l.s8.bf16 %v2715
        %v2828 = vunpack.c.l.s8.bf16 %v2716
        %v2829 = vunpack.c.h.s8.bf16 %v2715
        %v2830 = vunpack.c.h.s8.bf16 %v2716
        %v2831 = vunpack.c.l.s8.bf16 %v2717
        %v2832 = vunpack.c.l.s8.bf16 %v2718
        %v2833 = vunpack.c.h.s8.bf16 %v2717
        %v2834 = vunpack.c.h.s8.bf16 %v2718
        %v2835 = vunpack.c.l.s8.bf16 %v2719
        %v2836 = vunpack.c.l.s8.bf16 %v2720
        %v2837 = vunpack.c.h.s8.bf16 %v2719
        %v2838 = vunpack.c.h.s8.bf16 %v2720
        %v2839 = vunpack.c.l.s8.bf16 %v2721
        %v2840 = vunpack.c.l.s8.bf16 %v2722
        %v2841 = vunpack.c.h.s8.bf16 %v2721
        %v2842 = vunpack.c.h.s8.bf16 %v2722
        %v2843 = vunpack.c.l.s8.bf16 %v2723
        %v2844 = vunpack.c.l.s8.bf16 %v2724
        %v2845 = vunpack.c.h.s8.bf16 %v2723
        %v2846 = vunpack.c.h.s8.bf16 %v2724
        %v2847 = vunpack.c.l.s8.bf16 %v2725
        %v2848 = vunpack.c.l.s8.bf16 %v2726
        %v2849 = vunpack.c.h.s8.bf16 %v2725
        %v2850 = vunpack.c.h.s8.bf16 %v2726
        %v2851 = vunpack.c.l.s8.bf16 %v2727
        %v2852 = vunpack.c.l.s8.bf16 %v2728
        %v2853 = vunpack.c.h.s8.bf16 %v2727
        %v2854 = vunpack.c.h.s8.bf16 %v2728
        %v2855 = vunpack.c.l.s8.bf16 %v2729
        %v2856 = vunpack.c.l.s8.bf16 %v2730
        %v2857 = vunpack.c.h.s8.bf16 %v2729
        %v2858 = vunpack.c.h.s8.bf16 %v2730
        %v2859 = vld [vmem:[%s882] sm:$0xff]
        %v2860 = vld [vmem:[%s882 + $0x8] sm:$0xff]
        %v2861 = vld [vmem:[%s882 + $0x10] sm:$0xff]
        %v2862 = vld [vmem:[%s882 + $0x18] sm:$0xff]
        %v2863 = vld [vmem:[%s882 + $0x20] sm:$0xff]
        %v2864 = vld [vmem:[%s882 + $0x28] sm:$0xff]
        %v2865 = vld [vmem:[%s882 + $0x30] sm:$0xff]
        %v2866 = vld [vmem:[%s882 + $0x38] sm:$0xff]
        %v2867 = vunpack.c.l.s8.bf16 %v2859
        %v2868 = vunpack.c.l.s8.bf16 %v2860
        %v2869 = vunpack.c.h.s8.bf16 %v2859
        %v2870 = vunpack.c.h.s8.bf16 %v2860
        %v2871 = vunpack.c.l.s8.bf16 %v2861
        %v2872 = vunpack.c.l.s8.bf16 %v2862
        %v2873 = vunpack.c.h.s8.bf16 %v2861
        %v2874 = vunpack.c.h.s8.bf16 %v2862
        %v2875 = vunpack.c.l.s8.bf16 %v2863
        %v2876 = vunpack.c.l.s8.bf16 %v2864
        %v2877 = vunpack.c.h.s8.bf16 %v2863
        %v2878 = vunpack.c.h.s8.bf16 %v2864
        %v2879 = vunpack.c.l.s8.bf16 %v2865
        %v2880 = vunpack.c.l.s8.bf16 %v2866
        %v2881 = vunpack.c.h.s8.bf16 %v2865
        %v2882 = vunpack.c.h.s8.bf16 %v2866
        %2883 = vmatprep.subr.bf16.mxu0 %v2868
        %2884 = vmatpush1.bf16.msra.mxu0 %v2867
        %2885 = vmatprep.subr.bf16.mxu0 %v2870
        %2886 = vmatpush1.bf16.msra.mxu0 %v2869
        %2887 = vmatprep.subr.bf16.mxu0 %v2872
        %2888 = vmatpush1.bf16.msra.mxu0 %v2871
        %2889 = vmatprep.subr.bf16.mxu0 %v2874
        %2890 = vmatpush1.bf16.msra.mxu0 %v2873
        %2891 = vmatprep.subr.bf16.mxu0 %v2876
        %2892 = vmatpush1.bf16.msra.mxu0 %v2875
        %2893 = vmatprep.subr.bf16.mxu0 %v2878
        %2894 = vmatpush1.bf16.msra.mxu0 %v2877
        %2895 = vmatprep.subr.bf16.mxu0 %v2880
        %2896 = vmatpush1.bf16.msra.mxu0 %v2879
        %2897 = vmatprep.subr.bf16.mxu0 %v2882
        %2898 = vmatpush1.bf16.msra.mxu0 %v2881
        %2899 = vmatprep.subr.bf16.mxu0 0
        %2900 = vmatpush1.bf16.msra.mxu0 0
        %2901 = vmatprep.subr.bf16.mxu0 0
        %2902 = vmatpush1.bf16.msra.mxu0 0
        %2903 = vmatprep.subr.bf16.mxu0 0
        %2904 = vmatpush1.bf16.msra.mxu0 0
        %2905 = vmatprep.subr.bf16.mxu0 0
        %2906 = vmatpush1.bf16.msra.mxu0 0
        %2907 = vmatprep.subr.bf16.mxu0 0
        %2908 = vmatpush1.bf16.msra.mxu0 0
        %2909 = vmatprep.subr.bf16.mxu0 0
        %2910 = vmatpush1.bf16.msra.mxu0 0
        %2911 = vmatprep.subr.bf16.mxu0 0
        %2912 = vmatpush1.bf16.msra.mxu0 0
        %2913 = vmatprep.subr.bf16.mxu0 0
        %2914 = vmatpush1.bf16.msra.mxu0 0
        %2915 = vmatprep.mubr.bf16.mxu0 0
        %2916 = vmatmul.mubr.bf16.gmra.mrb[0].mxu0 %v1109
        %v2917 = vpop.f32.mrb[0].mxu0
        %v2918 = vadd.f32 0.0, %v2917
        %v2919 = vpop.f32.mrb[0].mxu0
        %v2920 = vadd.f32 0.0, %v2919
        %v2921 = vpop.f32.mrb[0].mxu0
        %v2922 = vadd.f32 0.0, %v2921
        %v2923 = vpop.f32.mrb[0].mxu0
        %v2924 = vadd.f32 0.0, %v2923
        %2925 = vdwg.mxu0
        %2926 = vmatprep.subr.bf16.mxu0 %v2732
        %2927 = vmatpush1.bf16.msra.mxu0 %v2731
        %2928 = vmatprep.subr.bf16.mxu0 %v2734
        %2929 = vmatpush1.bf16.msra.mxu0 %v2733
        %2930 = vmatprep.subr.bf16.mxu0 %v2736
        %2931 = vmatpush1.bf16.msra.mxu0 %v2735
        %2932 = vmatprep.subr.bf16.mxu0 %v2738
        %2933 = vmatpush1.bf16.msra.mxu0 %v2737
        %2934 = vmatprep.subr.bf16.mxu0 %v2740
        %2935 = vmatpush1.bf16.msra.mxu0 %v2739
        %2936 = vmatprep.subr.bf16.mxu0 %v2742
        %2937 = vmatpush1.bf16.msra.mxu0 %v2741
        %2938 = vmatprep.subr.bf16.mxu0 %v2744
        %2939 = vmatpush1.bf16.msra.mxu0 %v2743
        %2940 = vmatprep.subr.bf16.mxu0 %v2746
        %2941 = vmatpush1.bf16.msra.mxu0 %v2745
        %2942 = vmatprep.subr.bf16.mxu0 %v2748
        %2943 = vmatpush1.bf16.msra.mxu0 %v2747
        %2944 = vmatprep.subr.bf16.mxu0 %v2750
        %2945 = vmatpush1.bf16.msra.mxu0 %v2749
        %2946 = vmatprep.subr.bf16.mxu0 %v2752
        %2947 = vmatpush1.bf16.msra.mxu0 %v2751
        %2948 = vmatprep.subr.bf16.mxu0 %v2754
        %2949 = vmatpush1.bf16.msra.mxu0 %v2753
        %2950 = vmatprep.subr.bf16.mxu0 %v2756
        %2951 = vmatpush1.bf16.msra.mxu0 %v2755
        %2952 = vmatprep.subr.bf16.mxu0 %v2758
        %2953 = vmatpush1.bf16.msra.mxu0 %v2757
        %2954 = vmatprep.subr.bf16.mxu0 %v2760
        %2955 = vmatpush1.bf16.msra.mxu0 %v2759
        %2956 = vmatprep.subr.bf16.mxu0 %v2762
        %2957 = vmatpush1.bf16.msra.mxu0 %v2761
        %2958 = vmatprep.mubr.bf16.mxu0 %v2660
        %2959 = vmatmul.mubr.bf16.gmra.mrb[0].mxu0 %v2659
        %v2960 = vpop.f32.mrb[0].mxu0
        %v2961 = vadd.f32 %v2918, %v2960
        %v2962 = vpop.f32.mrb[0].mxu0
        %v2963 = vadd.f32 %v2920, %v2962
        %v2964 = vpop.f32.mrb[0].mxu0
        %v2965 = vadd.f32 %v2922, %v2964
        %v2966 = vpop.f32.mrb[0].mxu0
        %v2967 = vadd.f32 %v2924, %v2966
        %2968 = vdwg.mxu0
        %2969 = vmatprep.subr.bf16.mxu0 %v2764
        %2970 = vmatpush1.bf16.msra.mxu0 %v2763
        %2971 = vmatprep.subr.bf16.mxu0 %v2766
        %2972 = vmatpush1.bf16.msra.mxu0 %v2765
        %2973 = vmatprep.subr.bf16.mxu0 %v2768
        %2974 = vmatpush1.bf16.msra.mxu0 %v2767
        %2975 = vmatprep.subr.bf16.mxu0 %v2770
        %2976 = vmatpush1.bf16.msra.mxu0 %v2769
        %2977 = vmatprep.subr.bf16.mxu0 %v2772
        %2978 = vmatpush1.bf16.msra.mxu0 %v2771
        %2979 = vmatprep.subr.bf16.mxu0 %v2774
        %2980 = vmatpush1.bf16.msra.mxu0 %v2773
        %2981 = vmatprep.subr.bf16.mxu0 %v2776
        %2982 = vmatpush1.bf16.msra.mxu0 %v2775
        %2983 = vmatprep.subr.bf16.mxu0 %v2778
        %2984 = vmatpush1.bf16.msra.mxu0 %v2777
        %2985 = vmatprep.subr.bf16.mxu0 %v2780
        %2986 = vmatpush1.bf16.msra.mxu0 %v2779
        %2987 = vmatprep.subr.bf16.mxu0 %v2782
        %2988 = vmatpush1.bf16.msra.mxu0 %v2781
        %2989 = vmatprep.subr.bf16.mxu0 %v2784
        %2990 = vmatpush1.bf16.msra.mxu0 %v2783
        %2991 = vmatprep.subr.bf16.mxu0 %v2786
        %2992 = vmatpush1.bf16.msra.mxu0 %v2785
        %2993 = vmatprep.subr.bf16.mxu0 %v2788
        %2994 = vmatpush1.bf16.msra.mxu0 %v2787
        %2995 = vmatprep.subr.bf16.mxu0 %v2790
        %2996 = vmatpush1.bf16.msra.mxu0 %v2789
        %2997 = vmatprep.subr.bf16.mxu0 %v2792
        %2998 = vmatpush1.bf16.msra.mxu0 %v2791
        %2999 = vmatprep.subr.bf16.mxu0 %v2794
        %3000 = vmatpush1.bf16.msra.mxu0 %v2793
        %3001 = vmatprep.mubr.bf16.mxu0 %v2662
        %3002 = vmatmul.mubr.bf16.gmra.mrb[0].mxu0 %v2661
        %v3003 = vpop.f32.mrb[0].mxu0
        %v3004 = vadd.f32 %v2961, %v3003
        %v3005 = vpop.f32.mrb[0].mxu0
        %v3006 = vadd.f32 %v2963, %v3005
        %v3007 = vpop.f32.mrb[0].mxu0
        %v3008 = vadd.f32 %v2965, %v3007
        %v3009 = vpop.f32.mrb[0].mxu0
        %v3010 = vadd.f32 %v2967, %v3009
        %3011 = vdwg.mxu0
        %3012 = vmatprep.subr.bf16.mxu0 %v2796
        %3013 = vmatpush1.bf16.msra.mxu0 %v2795
        %3014 = vmatprep.subr.bf16.mxu0 %v2798
        %3015 = vmatpush1.bf16.msra.mxu0 %v2797
        %3016 = vmatprep.subr.bf16.mxu0 %v2800
        %3017 = vmatpush1.bf16.msra.mxu0 %v2799
        %3018 = vmatprep.subr.bf16.mxu0 %v2802
        %3019 = vmatpush1.bf16.msra.mxu0 %v2801
        %3020 = vmatprep.subr.bf16.mxu0 %v2804
        %3021 = vmatpush1.bf16.msra.mxu0 %v2803
        %3022 = vmatprep.subr.bf16.mxu0 %v2806
        %3023 = vmatpush1.bf16.msra.mxu0 %v2805
        %3024 = vmatprep.subr.bf16.mxu0 %v2808
        %3025 = vmatpush1.bf16.msra.mxu0 %v2807
        %3026 = vmatprep.subr.bf16.mxu0 %v2810
        %3027 = vmatpush1.bf16.msra.mxu0 %v2809
        %3028 = vmatprep.subr.bf16.mxu0 %v2812
        %3029 = vmatpush1.bf16.msra.mxu0 %v2811
        %3030 = vmatprep.subr.bf16.mxu0 %v2814
        %3031 = vmatpush1.bf16.msra.mxu0 %v2813
        %3032 = vmatprep.subr.bf16.mxu0 %v2816
        %3033 = vmatpush1.bf16.msra.mxu0 %v2815
        %3034 = vmatprep.subr.bf16.mxu0 %v2818
        %3035 = vmatpush1.bf16.msra.mxu0 %v2817
        %3036 = vmatprep.subr.bf16.mxu0 %v2820
        %3037 = vmatpush1.bf16.msra.mxu0 %v2819
        %3038 = vmatprep.subr.bf16.mxu0 %v2822
        %3039 = vmatpush1.bf16.msra.mxu0 %v2821
        %3040 = vmatprep.subr.bf16.mxu0 %v2824
        %3041 = vmatpush1.bf16.msra.mxu0 %v2823
        %3042 = vmatprep.subr.bf16.mxu0 %v2826
        %3043 = vmatpush1.bf16.msra.mxu0 %v2825
        %3044 = vmatprep.mubr.bf16.mxu0 %v2664
        %3045 = vmatmul.mubr.bf16.gmra.mrb[0].mxu0 %v2663
        %v3046 = vpop.f32.mrb[0].mxu0
        %v3047 = vadd.f32 %v3004, %v3046
        %v3048 = vpop.f32.mrb[0].mxu0
        %v3049 = vadd.f32 %v3006, %v3048
        %v3050 = vpop.f32.mrb[0].mxu0
        %v3051 = vadd.f32 %v3008, %v3050
        %v3052 = vpop.f32.mrb[0].mxu0
        %v3053 = vadd.f32 %v3010, %v3052
        %3054 = vdwg.mxu0
        %3055 = vmatprep.subr.bf16.mxu0 %v2828
        %3056 = vmatpush1.bf16.msra.mxu0 %v2827
        %3057 = vmatprep.subr.bf16.mxu0 %v2830
        %3058 = vmatpush1.bf16.msra.mxu0 %v2829
        %3059 = vmatprep.subr.bf16.mxu0 %v2832
        %3060 = vmatpush1.bf16.msra.mxu0 %v2831
        %3061 = vmatprep.subr.bf16.mxu0 %v2834
        %3062 = vmatpush1.bf16.msra.mxu0 %v2833
        %3063 = vmatprep.subr.bf16.mxu0 %v2836
        %3064 = vmatpush1.bf16.msra.mxu0 %v2835
        %3065 = vmatprep.subr.bf16.mxu0 %v2838
        %3066 = vmatpush1.bf16.msra.mxu0 %v2837
        %3067 = vmatprep.subr.bf16.mxu0 %v2840
        %3068 = vmatpush1.bf16.msra.mxu0 %v2839
        %3069 = vmatprep.subr.bf16.mxu0 %v2842
        %3070 = vmatpush1.bf16.msra.mxu0 %v2841
        %3071 = vmatprep.subr.bf16.mxu0 %v2844
        %3072 = vmatpush1.bf16.msra.mxu0 %v2843
        %3073 = vmatprep.subr.bf16.mxu0 %v2846
        %3074 = vmatpush1.bf16.msra.mxu0 %v2845
        %3075 = vmatprep.subr.bf16.mxu0 %v2848
        %3076 = vmatpush1.bf16.msra.mxu0 %v2847
        %3077 = vmatprep.subr.bf16.mxu0 %v2850
        %3078 = vmatpush1.bf16.msra.mxu0 %v2849
        %3079 = vmatprep.subr.bf16.mxu0 %v2852
        %3080 = vmatpush1.bf16.msra.mxu0 %v2851
        %3081 = vmatprep.subr.bf16.mxu0 %v2854
        %3082 = vmatpush1.bf16.msra.mxu0 %v2853
        %3083 = vmatprep.subr.bf16.mxu0 %v2856
        %3084 = vmatpush1.bf16.msra.mxu0 %v2855
        %3085 = vmatprep.subr.bf16.mxu0 %v2858
        %3086 = vmatpush1.bf16.msra.mxu0 %v2857
        %3087 = vmatprep.mubr.bf16.mxu0 %v2666
        %3088 = vmatmul.mubr.bf16.gmra.mrb[0].mxu0 %v2665
        %v3089 = vpop.f32.mrb[0].mxu0
        %v3090 = vadd.f32 %v3047, %v3089
        %v3091 = vpop.f32.mrb[0].mxu0
        %v3092 = vadd.f32 %v3049, %v3091
        %v3093 = vpop.f32.mrb[0].mxu0
        %v3094 = vadd.f32 %v3051, %v3093
        %v3095 = vpop.f32.mrb[0].mxu0
        %v3096 = vadd.f32 %v3053, %v3095
        %3097 = vdwg.mxu0
        %v3098 = vld [vmem:[%s891] sm:$0x3]
        %v3100 = vlaneseq
        %v3101 = vshrl.u32 %v3100, 7
        %v3102 = vsub.s32 0, %v3101
        %v3103 = vrot.slane %v3098, %v3102
        %v3104 = vlaneseq
        %v3105 = vshrl.u32 %v3104, 7
        %v3106 = vsub.s32 1, %v3105
        %v3107 = vrot.slane %v3098, %v3106
        %v3110 = vmul.f32 %v3090, %v3103
        %v3111 = vmul.f32 %v3092, %v3107
        %v3112 = vmul.f32 %v3094, %v3103
        %v3113 = vmul.f32 %v3096, %v3107
        %v3114 = vld [vmem:[%s900] sm:$0x3]
        %v3116 = vlaneseq
        %v3117 = vshrl.u32 %v3116, 7
        %v3118 = vsub.s32 0, %v3117
        %v3119 = vrot.slane %v3114, %v3118
        %v3120 = vlaneseq
        %v3121 = vshrl.u32 %v3120, 7
        %v3122 = vsub.s32 1, %v3121
        %v3123 = vrot.slane %v3114, %v3122
        %v3126 = vadd.f32 %v3110, %v3119
        %v3127 = vadd.f32 %v3111, %v3123
        %v3128 = vadd.f32 %v3112, %v3119
        %v3129 = vadd.f32 %v3113, %v3123
        %v3130 = vmax.f32 %v3126, 0.0
        %v3131 = vmax.f32 %v3127, 0.0
        %v3132 = vmax.f32 %v3128, 0.0
        %v3133 = vmax.f32 %v3129, 0.0
        %v3134 = vpack.c.bf16 %v3132, %v3130
        %v3135 = vpack.c.bf16 %v3133, %v3131
        %v3136 = vld [vmem:[%s909] sm:$0xff]
        %v3137 = vld [vmem:[%s909 + $0x8] sm:$0xff]
        %v3138 = vld [vmem:[%s909 + $0x10] sm:$0xff]
        %v3139 = vld [vmem:[%s909 + $0x18] sm:$0xff]
        %v3140 = vld [vmem:[%s909 + $0x20] sm:$0xff]
        %v3141 = vld [vmem:[%s909 + $0x28] sm:$0xff]
        %v3142 = vld [vmem:[%s909 + $0x30] sm:$0xff]
        %v3143 = vld [vmem:[%s909 + $0x38] sm:$0xff]
        %v3144 = vld [vmem:[%s909 + $0x40] sm:$0xff]
        %v3145 = vld [vmem:[%s909 + $0x48] sm:$0xff]
        %v3146 = vld [vmem:[%s909 + $0x50] sm:$0xff]
        %v3147 = vld [vmem:[%s909 + $0x58] sm:$0xff]
        %v3148 = vld [vmem:[%s909 + $0x60] sm:$0xff]
        %v3149 = vld [vmem:[%s909 + $0x68] sm:$0xff]
        %v3150 = vld [vmem:[%s909 + $0x70] sm:$0xff]
        %v3151 = vld [vmem:[%s909 + $0x78] sm:$0xff]
        %v3152 = vld [vmem:[%s909 + $0x80] sm:$0xff]
        %v3153 = vld [vmem:[%s909 + $0x88] sm:$0xff]
        %v3154 = vld [vmem:[%s909 + $0x90] sm:$0xff]
        %v3155 = vld [vmem:[%s909 + $0x98] sm:$0xff]
        %v3156 = vld [vmem:[%s909 + $0xa0] sm:$0xff]
        %v3157 = vld [vmem:[%s909 + $0xa8] sm:$0xff]
        %v3158 = vld [vmem:[%s909 + $0xb0] sm:$0xff]
        %v3159 = vld [vmem:[%s909 + $0xb8] sm:$0xff]
        %v3160 = vld [vmem:[%s909 + $0xc0] sm:$0xff]
        %v3161 = vld [vmem:[%s909 + $0xc8] sm:$0xff]
        %v3162 = vld [vmem:[%s909 + $0xd0] sm:$0xff]
        %v3163 = vld [vmem:[%s909 + $0xd8] sm:$0xff]
        %v3164 = vld [vmem:[%s909 + $0xe0] sm:$0xff]
        %v3165 = vld [vmem:[%s909 + $0xe8] sm:$0xff]
        %v3166 = vld [vmem:[%s909 + $0xf0] sm:$0xff]
        %v3167 = vld [vmem:[%s909 + $0xf8] sm:$0xff]
        %v3168 = vld [vmem:[%s909 + $0x100] sm:$0xff]
        %v3169 = vld [vmem:[%s909 + $0x108] sm:$0xff]
        %v3170 = vld [vmem:[%s909 + $0x110] sm:$0xff]
        %v3171 = vld [vmem:[%s909 + $0x118] sm:$0xff]
        %v3172 = vld [vmem:[%s909 + $0x120] sm:$0xff]
        %v3173 = vld [vmem:[%s909 + $0x128] sm:$0xff]
        %v3174 = vld [vmem:[%s909 + $0x130] sm:$0xff]
        %v3175 = vld [vmem:[%s909 + $0x138] sm:$0xff]
        %v3176 = vld [vmem:[%s909 + $0x140] sm:$0xff]
        %v3177 = vld [vmem:[%s909 + $0x148] sm:$0xff]
        %v3178 = vld [vmem:[%s909 + $0x150] sm:$0xff]
        %v3179 = vld [vmem:[%s909 + $0x158] sm:$0xff]
        %v3180 = vld [vmem:[%s909 + $0x160] sm:$0xff]
        %v3181 = vld [vmem:[%s909 + $0x168] sm:$0xff]
        %v3182 = vld [vmem:[%s909 + $0x170] sm:$0xff]
        %v3183 = vld [vmem:[%s909 + $0x178] sm:$0xff]
        %v3184 = vld [vmem:[%s909 + $0x180] sm:$0xff]
        %v3185 = vld [vmem:[%s909 + $0x188] sm:$0xff]
        %v3186 = vld [vmem:[%s909 + $0x190] sm:$0xff]
        %v3187 = vld [vmem:[%s909 + $0x198] sm:$0xff]
        %v3188 = vld [vmem:[%s909 + $0x1a0] sm:$0xff]
        %v3189 = vld [vmem:[%s909 + $0x1a8] sm:$0xff]
        %v3190 = vld [vmem:[%s909 + $0x1b0] sm:$0xff]
        %v3191 = vld [vmem:[%s909 + $0x1b8] sm:$0xff]
        %v3192 = vld [vmem:[%s909 + $0x1c0] sm:$0xff]
        %v3193 = vld [vmem:[%s909 + $0x1c8] sm:$0xff]
        %v3194 = vld [vmem:[%s909 + $0x1d0] sm:$0xff]
        %v3195 = vld [vmem:[%s909 + $0x1d8] sm:$0xff]
        %v3196 = vld [vmem:[%s909 + $0x1e0] sm:$0xff]
        %v3197 = vld [vmem:[%s909 + $0x1e8] sm:$0xff]
        %v3198 = vld [vmem:[%s909 + $0x1f0] sm:$0xff]
        %v3199 = vld [vmem:[%s909 + $0x1f8] sm:$0xff]
        %v3200 = vld [vmem:[%s909 + $0x200] sm:$0xff]
        %v3201 = vld [vmem:[%s909 + $0x208] sm:$0xff]
        %v3202 = vld [vmem:[%s909 + $0x210] sm:$0xff]
        %v3203 = vld [vmem:[%s909 + $0x218] sm:$0xff]
        %v3204 = vld [vmem:[%s909 + $0x220] sm:$0xff]
        %v3205 = vld [vmem:[%s909 + $0x228] sm:$0xff]
        %v3206 = vld [vmem:[%s909 + $0x230] sm:$0xff]
        %v3207 = vld [vmem:[%s909 + $0x238] sm:$0xff]
        %v3208 = vld [vmem:[%s909 + $0x240] sm:$0xff]
        %v3209 = vld [vmem:[%s909 + $0x248] sm:$0xff]
        %v3210 = vld [vmem:[%s909 + $0x250] sm:$0xff]
        %v3211 = vld [vmem:[%s909 + $0x258] sm:$0xff]
        %v3212 = vld [vmem:[%s909 + $0x260] sm:$0xff]
        %v3213 = vld [vmem:[%s909 + $0x268] sm:$0xff]
        %v3214 = vld [vmem:[%s909 + $0x270] sm:$0xff]
        %v3215 = vld [vmem:[%s909 + $0x278] sm:$0xff]
        %v3216 = vld [vmem:[%s909 + $0x280] sm:$0xff]
        %v3217 = vld [vmem:[%s909 + $0x288] sm:$0xff]
        %v3218 = vld [vmem:[%s909 + $0x290] sm:$0xff]
        %v3219 = vld [vmem:[%s909 + $0x298] sm:$0xff]
        %v3220 = vld [vmem:[%s909 + $0x2a0] sm:$0xff]
        %v3221 = vld [vmem:[%s909 + $0x2a8] sm:$0xff]
        %v3222 = vld [vmem:[%s909 + $0x2b0] sm:$0xff]
        %v3223 = vld [vmem:[%s909 + $0x2b8] sm:$0xff]
        %v3224 = vld [vmem:[%s909 + $0x2c0] sm:$0xff]
        %v3225 = vld [vmem:[%s909 + $0x2c8] sm:$0xff]
        %v3226 = vld [vmem:[%s909 + $0x2d0] sm:$0xff]
        %v3227 = vld [vmem:[%s909 + $0x2d8] sm:$0xff]
        %v3228 = vld [vmem:[%s909 + $0x2e0] sm:$0xff]
        %v3229 = vld [vmem:[%s909 + $0x2e8] sm:$0xff]
        %v3230 = vld [vmem:[%s909 + $0x2f0] sm:$0xff]
        %v3231 = vld [vmem:[%s909 + $0x2f8] sm:$0xff]
        %v3232 = vld [vmem:[%s909 + $0x300] sm:$0xff]
        %v3233 = vld [vmem:[%s909 + $0x308] sm:$0xff]
        %v3234 = vld [vmem:[%s909 + $0x310] sm:$0xff]
        %v3235 = vld [vmem:[%s909 + $0x318] sm:$0xff]
        %v3236 = vld [vmem:[%s909 + $0x320] sm:$0xff]
        %v3237 = vld [vmem:[%s909 + $0x328] sm:$0xff]
        %v3238 = vld [vmem:[%s909 + $0x330] sm:$0xff]
        %v3239 = vld [vmem:[%s909 + $0x338] sm:$0xff]
        %v3240 = vld [vmem:[%s909 + $0x340] sm:$0xff]
        %v3241 = vld [vmem:[%s909 + $0x348] sm:$0xff]
        %v3242 = vld [vmem:[%s909 + $0x350] sm:$0xff]
        %v3243 = vld [vmem:[%s909 + $0x358] sm:$0xff]
        %v3244 = vld [vmem:[%s909 + $0x360] sm:$0xff]
        %v3245 = vld [vmem:[%s909 + $0x368] sm:$0xff]
        %v3246 = vld [vmem:[%s909 + $0x370] sm:$0xff]
        %v3247 = vld [vmem:[%s909 + $0x378] sm:$0xff]
        %v3248 = vld [vmem:[%s909 + $0x380] sm:$0xff]
        %v3249 = vld [vmem:[%s909 + $0x388] sm:$0xff]
        %v3250 = vld [vmem:[%s909 + $0x390] sm:$0xff]
        %v3251 = vld [vmem:[%s909 + $0x398] sm:$0xff]
        %v3252 = vld [vmem:[%s909 + $0x3a0] sm:$0xff]
        %v3253 = vld [vmem:[%s909 + $0x3a8] sm:$0xff]
        %v3254 = vld [vmem:[%s909 + $0x3b0] sm:$0xff]
        %v3255 = vld [vmem:[%s909 + $0x3b8] sm:$0xff]
        %v3256 = vld [vmem:[%s909 + $0x3c0] sm:$0xff]
        %v3257 = vld [vmem:[%s909 + $0x3c8] sm:$0xff]
        %v3258 = vld [vmem:[%s909 + $0x3d0] sm:$0xff]
        %v3259 = vld [vmem:[%s909 + $0x3d8] sm:$0xff]
        %v3260 = vld [vmem:[%s909 + $0x3e0] sm:$0xff]
        %v3261 = vld [vmem:[%s909 + $0x3e8] sm:$0xff]
        %v3262 = vld [vmem:[%s909 + $0x3f0] sm:$0xff]
        %v3263 = vld [vmem:[%s909 + $0x3f8] sm:$0xff]
        %v3264 = vunpack.c.l.s8.bf16 %v3136
        %v3265 = vunpack.c.l.s8.bf16 %v3137
        %v3266 = vunpack.c.l.s8.bf16 %v3138
        %v3267 = vunpack.c.l.s8.bf16 %v3139
        %v3268 = vunpack.c.l.s8.bf16 %v3140
        %v3269 = vunpack.c.l.s8.bf16 %v3141
        %v3270 = vunpack.c.l.s8.bf16 %v3142
        %v3271 = vunpack.c.l.s8.bf16 %v3143
        %v3272 = vunpack.c.l.s8.bf16 %v3144
        %v3273 = vunpack.c.l.s8.bf16 %v3145
        %v3274 = vunpack.c.l.s8.bf16 %v3146
        %v3275 = vunpack.c.l.s8.bf16 %v3147
        %v3276 = vunpack.c.l.s8.bf16 %v3148
        %v3277 = vunpack.c.l.s8.bf16 %v3149
        %v3278 = vunpack.c.l.s8.bf16 %v3150
        %v3279 = vunpack.c.l.s8.bf16 %v3151
        %v3280 = vunpack.c.h.s8.bf16 %v3136
        %v3281 = vunpack.c.h.s8.bf16 %v3137
        %v3282 = vunpack.c.h.s8.bf16 %v3138
        %v3283 = vunpack.c.h.s8.bf16 %v3139
        %v3284 = vunpack.c.h.s8.bf16 %v3140
        %v3285 = vunpack.c.h.s8.bf16 %v3141
        %v3286 = vunpack.c.h.s8.bf16 %v3142
        %v3287 = vunpack.c.h.s8.bf16 %v3143
        %v3288 = vunpack.c.h.s8.bf16 %v3144
        %v3289 = vunpack.c.h.s8.bf16 %v3145
        %v3290 = vunpack.c.h.s8.bf16 %v3146
        %v3291 = vunpack.c.h.s8.bf16 %v3147
        %v3292 = vunpack.c.h.s8.bf16 %v3148
        %v3293 = vunpack.c.h.s8.bf16 %v3149
        %v3294 = vunpack.c.h.s8.bf16 %v3150
        %v3295 = vunpack.c.h.s8.bf16 %v3151
        %v3296 = vunpack.c.l.s8.bf16 %v3152
        %v3297 = vunpack.c.l.s8.bf16 %v3153
        %v3298 = vunpack.c.l.s8.bf16 %v3154
        %v3299 = vunpack.c.l.s8.bf16 %v3155
        %v3300 = vunpack.c.l.s8.bf16 %v3156
        %v3301 = vunpack.c.l.s8.bf16 %v3157
        %v3302 = vunpack.c.l.s8.bf16 %v3158
        %v3303 = vunpack.c.l.s8.bf16 %v3159
        %v3304 = vunpack.c.l.s8.bf16 %v3160
        %v3305 = vunpack.c.l.s8.bf16 %v3161
        %v3306 = vunpack.c.l.s8.bf16 %v3162
        %v3307 = vunpack.c.l.s8.bf16 %v3163
        %v3308 = vunpack.c.l.s8.bf16 %v3164
        %v3309 = vunpack.c.l.s8.bf16 %v3165
        %v3310 = vunpack.c.l.s8.bf16 %v3166
        %v3311 = vunpack.c.l.s8.bf16 %v3167
        %v3312 = vunpack.c.h.s8.bf16 %v3152
        %v3313 = vunpack.c.h.s8.bf16 %v3153
        %v3314 = vunpack.c.h.s8.bf16 %v3154
        %v3315 = vunpack.c.h.s8.bf16 %v3155
        %v3316 = vunpack.c.h.s8.bf16 %v3156
        %v3317 = vunpack.c.h.s8.bf16 %v3157
        %v3318 = vunpack.c.h.s8.bf16 %v3158
        %v3319 = vunpack.c.h.s8.bf16 %v3159
        %v3320 = vunpack.c.h.s8.bf16 %v3160
        %v3321 = vunpack.c.h.s8.bf16 %v3161
        %v3322 = vunpack.c.h.s8.bf16 %v3162
        %v3323 = vunpack.c.h.s8.bf16 %v3163
        %v3324 = vunpack.c.h.s8.bf16 %v3164
        %v3325 = vunpack.c.h.s8.bf16 %v3165
        %v3326 = vunpack.c.h.s8.bf16 %v3166
        %v3327 = vunpack.c.h.s8.bf16 %v3167
        %v3328 = vunpack.c.l.s8.bf16 %v3168
        %v3329 = vunpack.c.l.s8.bf16 %v3169
        %v3330 = vunpack.c.l.s8.bf16 %v3170
        %v3331 = vunpack.c.l.s8.bf16 %v3171
        %v3332 = vunpack.c.l.s8.bf16 %v3172
        %v3333 = vunpack.c.l.s8.bf16 %v3173
        %v3334 = vunpack.c.l.s8.bf16 %v3174
        %v3335 = vunpack.c.l.s8.bf16 %v3175
        %v3336 = vunpack.c.l.s8.bf16 %v3176
        %v3337 = vunpack.c.l.s8.bf16 %v3177
        %v3338 = vunpack.c.l.s8.bf16 %v3178
        %v3339 = vunpack.c.l.s8.bf16 %v3179
        %v3340 = vunpack.c.l.s8.bf16 %v3180
        %v3341 = vunpack.c.l.s8.bf16 %v3181
        %v3342 = vunpack.c.l.s8.bf16 %v3182
        %v3343 = vunpack.c.l.s8.bf16 %v3183
        %v3344 = vunpack.c.h.s8.bf16 %v3168
        %v3345 = vunpack.c.h.s8.bf16 %v3169
        %v3346 = vunpack.c.h.s8.bf16 %v3170
        %v3347 = vunpack.c.h.s8.bf16 %v3171
        %v3348 = vunpack.c.h.s8.bf16 %v3172
        %v3349 = vunpack.c.h.s8.bf16 %v3173
        %v3350 = vunpack.c.h.s8.bf16 %v3174
        %v3351 = vunpack.c.h.s8.bf16 %v3175
        %v3352 = vunpack.c.h.s8.bf16 %v3176
        %v3353 = vunpack.c.h.s8.bf16 %v3177
        %v3354 = vunpack.c.h.s8.bf16 %v3178
        %v3355 = vunpack.c.h.s8.bf16 %v3179
        %v3356 = vunpack.c.h.s8.bf16 %v3180
        %v3357 = vunpack.c.h.s8.bf16 %v3181
        %v3358 = vunpack.c.h.s8.bf16 %v3182
        %v3359 = vunpack.c.h.s8.bf16 %v3183
        %v3360 = vunpack.c.l.s8.bf16 %v3184
        %v3361 = vunpack.c.l.s8.bf16 %v3185
        %v3362 = vunpack.c.l.s8.bf16 %v3186
        %v3363 = vunpack.c.l.s8.bf16 %v3187
        %v3364 = vunpack.c.l.s8.bf16 %v3188
        %v3365 = vunpack.c.l.s8.bf16 %v3189
        %v3366 = vunpack.c.l.s8.bf16 %v3190
        %v3367 = vunpack.c.l.s8.bf16 %v3191
        %v3368 = vunpack.c.l.s8.bf16 %v3192
        %v3369 = vunpack.c.l.s8.bf16 %v3193
        %v3370 = vunpack.c.l.s8.bf16 %v3194
        %v3371 = vunpack.c.l.s8.bf16 %v3195
        %v3372 = vunpack.c.l.s8.bf16 %v3196
        %v3373 = vunpack.c.l.s8.bf16 %v3197
        %v3374 = vunpack.c.l.s8.bf16 %v3198
        %v3375 = vunpack.c.l.s8.bf16 %v3199
        %v3376 = vunpack.c.h.s8.bf16 %v3184
        %v3377 = vunpack.c.h.s8.bf16 %v3185
        %v3378 = vunpack.c.h.s8.bf16 %v3186
        %v3379 = vunpack.c.h.s8.bf16 %v3187
        %v3380 = vunpack.c.h.s8.bf16 %v3188
        %v3381 = vunpack.c.h.s8.bf16 %v3189
        %v3382 = vunpack.c.h.s8.bf16 %v3190
        %v3383 = vunpack.c.h.s8.bf16 %v3191
        %v3384 = vunpack.c.h.s8.bf16 %v3192
        %v3385 = vunpack.c.h.s8.bf16 %v3193
        %v3386 = vunpack.c.h.s8.bf16 %v3194
        %v3387 = vunpack.c.h.s8.bf16 %v3195
        %v3388 = vunpack.c.h.s8.bf16 %v3196
        %v3389 = vunpack.c.h.s8.bf16 %v3197
        %v3390 = vunpack.c.h.s8.bf16 %v3198
        %v3391 = vunpack.c.h.s8.bf16 %v3199
        %v3392 = vunpack.c.l.s8.bf16 %v3200
        %v3393 = vunpack.c.l.s8.bf16 %v3201
        %v3394 = vunpack.c.l.s8.bf16 %v3202
        %v3395 = vunpack.c.l.s8.bf16 %v3203
        %v3396 = vunpack.c.l.s8.bf16 %v3204
        %v3397 = vunpack.c.l.s8.bf16 %v3205
        %v3398 = vunpack.c.l.s8.bf16 %v3206
        %v3399 = vunpack.c.l.s8.bf16 %v3207
        %v3400 = vunpack.c.l.s8.bf16 %v3208
        %v3401 = vunpack.c.l.s8.bf16 %v3209
        %v3402 = vunpack.c.l.s8.bf16 %v3210
        %v3403 = vunpack.c.l.s8.bf16 %v3211
        %v3404 = vunpack.c.l.s8.bf16 %v3212
        %v3405 = vunpack.c.l.s8.bf16 %v3213
        %v3406 = vunpack.c.l.s8.bf16 %v3214
        %v3407 = vunpack.c.l.s8.bf16 %v3215
        %v3408 = vunpack.c.h.s8.bf16 %v3200
        %v3409 = vunpack.c.h.s8.bf16 %v3201
        %v3410 = vunpack.c.h.s8.bf16 %v3202
        %v3411 = vunpack.c.h.s8.bf16 %v3203
        %v3412 = vunpack.c.h.s8.bf16 %v3204
        %v3413 = vunpack.c.h.s8.bf16 %v3205
        %v3414 = vunpack.c.h.s8.bf16 %v3206
        %v3415 = vunpack.c.h.s8.bf16 %v3207
        %v3416 = vunpack.c.h.s8.bf16 %v3208
        %v3417 = vunpack.c.h.s8.bf16 %v3209
        %v3418 = vunpack.c.h.s8.bf16 %v3210
        %v3419 = vunpack.c.h.s8.bf16 %v3211
        %v3420 = vunpack.c.h.s8.bf16 %v3212
        %v3421 = vunpack.c.h.s8.bf16 %v3213
        %v3422 = vunpack.c.h.s8.bf16 %v3214
        %v3423 = vunpack.c.h.s8.bf16 %v3215
        %v3424 = vunpack.c.l.s8.bf16 %v3216
        %v3425 = vunpack.c.l.s8.bf16 %v3217
        %v3426 = vunpack.c.l.s8.bf16 %v3218
        %v3427 = vunpack.c.l.s8.bf16 %v3219
        %v3428 = vunpack.c.l.s8.bf16 %v3220
        %v3429 = vunpack.c.l.s8.bf16 %v3221
        %v3430 = vunpack.c.l.s8.bf16 %v3222
        %v3431 = vunpack.c.l.s8.bf16 %v3223
        %v3432 = vunpack.c.l.s8.bf16 %v3224
        %v3433 = vunpack.c.l.s8.bf16 %v3225
        %v3434 = vunpack.c.l.s8.bf16 %v3226
        %v3435 = vunpack.c.l.s8.bf16 %v3227
        %v3436 = vunpack.c.l.s8.bf16 %v3228
        %v3437 = vunpack.c.l.s8.bf16 %v3229
        %v3438 = vunpack.c.l.s8.bf16 %v3230
        %v3439 = vunpack.c.l.s8.bf16 %v3231
        %v3440 = vunpack.c.h.s8.bf16 %v3216
        %v3441 = vunpack.c.h.s8.bf16 %v3217
        %v3442 = vunpack.c.h.s8.bf16 %v3218
        %v3443 = vunpack.c.h.s8.bf16 %v3219
        %v3444 = vunpack.c.h.s8.bf16 %v3220
        %v3445 = vunpack.c.h.s8.bf16 %v3221
        %v3446 = vunpack.c.h.s8.bf16 %v3222
        %v3447 = vunpack.c.h.s8.bf16 %v3223
        %v3448 = vunpack.c.h.s8.bf16 %v3224
        %v3449 = vunpack.c.h.s8.bf16 %v3225
        %v3450 = vunpack.c.h.s8.bf16 %v3226
        %v3451 = vunpack.c.h.s8.bf16 %v3227
        %v3452 = vunpack.c.h.s8.bf16 %v3228
        %v3453 = vunpack.c.h.s8.bf16 %v3229
        %v3454 = vunpack.c.h.s8.bf16 %v3230
        %v3455 = vunpack.c.h.s8.bf16 %v3231
        %v3456 = vunpack.c.l.s8.bf16 %v3232
        %v3457 = vunpack.c.l.s8.bf16 %v3233
        %v3458 = vunpack.c.l.s8.bf16 %v3234
        %v3459 = vunpack.c.l.s8.bf16 %v3235
        %v3460 = vunpack.c.l.s8.bf16 %v3236
        %v3461 = vunpack.c.l.s8.bf16 %v3237
        %v3462 = vunpack.c.l.s8.bf16 %v3238
        %v3463 = vunpack.c.l.s8.bf16 %v3239
        %v3464 = vunpack.c.l.s8.bf16 %v3240
        %v3465 = vunpack.c.l.s8.bf16 %v3241
        %v3466 = vunpack.c.l.s8.bf16 %v3242
        %v3467 = vunpack.c.l.s8.bf16 %v3243
        %v3468 = vunpack.c.l.s8.bf16 %v3244
        %v3469 = vunpack.c.l.s8.bf16 %v3245
        %v3470 = vunpack.c.l.s8.bf16 %v3246
        %v3471 = vunpack.c.l.s8.bf16 %v3247
        %v3472 = vunpack.c.h.s8.bf16 %v3232
        %v3473 = vunpack.c.h.s8.bf16 %v3233
        %v3474 = vunpack.c.h.s8.bf16 %v3234
        %v3475 = vunpack.c.h.s8.bf16 %v3235
        %v3476 = vunpack.c.h.s8.bf16 %v3236
        %v3477 = vunpack.c.h.s8.bf16 %v3237
        %v3478 = vunpack.c.h.s8.bf16 %v3238
        %v3479 = vunpack.c.h.s8.bf16 %v3239
        %v3480 = vunpack.c.h.s8.bf16 %v3240
        %v3481 = vunpack.c.h.s8.bf16 %v3241
        %v3482 = vunpack.c.h.s8.bf16 %v3242
        %v3483 = vunpack.c.h.s8.bf16 %v3243
        %v3484 = vunpack.c.h.s8.bf16 %v3244
        %v3485 = vunpack.c.h.s8.bf16 %v3245
        %v3486 = vunpack.c.h.s8.bf16 %v3246
        %v3487 = vunpack.c.h.s8.bf16 %v3247
        %v3488 = vunpack.c.l.s8.bf16 %v3248
        %v3489 = vunpack.c.l.s8.bf16 %v3249
        %v3490 = vunpack.c.l.s8.bf16 %v3250
        %v3491 = vunpack.c.l.s8.bf16 %v3251
        %v3492 = vunpack.c.l.s8.bf16 %v3252
        %v3493 = vunpack.c.l.s8.bf16 %v3253
        %v3494 = vunpack.c.l.s8.bf16 %v3254
        %v3495 = vunpack.c.l.s8.bf16 %v3255
        %v3496 = vunpack.c.l.s8.bf16 %v3256
        %v3497 = vunpack.c.l.s8.bf16 %v3257
        %v3498 = vunpack.c.l.s8.bf16 %v3258
        %v3499 = vunpack.c.l.s8.bf16 %v3259
        %v3500 = vunpack.c.l.s8.bf16 %v3260
        %v3501 = vunpack.c.l.s8.bf16 %v3261
        %v3502 = vunpack.c.l.s8.bf16 %v3262
        %v3503 = vunpack.c.l.s8.bf16 %v3263
        %v3504 = vunpack.c.h.s8.bf16 %v3248
        %v3505 = vunpack.c.h.s8.bf16 %v3249
        %v3506 = vunpack.c.h.s8.bf16 %v3250
        %v3507 = vunpack.c.h.s8.bf16 %v3251
        %v3508 = vunpack.c.h.s8.bf16 %v3252
        %v3509 = vunpack.c.h.s8.bf16 %v3253
        %v3510 = vunpack.c.h.s8.bf16 %v3254
        %v3511 = vunpack.c.h.s8.bf16 %v3255
        %v3512 = vunpack.c.h.s8.bf16 %v3256
        %v3513 = vunpack.c.h.s8.bf16 %v3257
        %v3514 = vunpack.c.h.s8.bf16 %v3258
        %v3515 = vunpack.c.h.s8.bf16 %v3259
        %v3516 = vunpack.c.h.s8.bf16 %v3260
        %v3517 = vunpack.c.h.s8.bf16 %v3261
        %v3518 = vunpack.c.h.s8.bf16 %v3262
        %v3519 = vunpack.c.h.s8.bf16 %v3263
        %3520 = vmatprep.subr.bf16.mxu0 %v3265
        %3521 = vmatpush1.bf16.msra.mxu0 %v3264
        %3522 = vmatprep.subr.bf16.mxu0 %v3281
        %3523 = vmatpush1.bf16.msra.mxu0 %v3280
        %3524 = vmatprep.subr.bf16.mxu0 %v3297
        %3525 = vmatpush1.bf16.msra.mxu0 %v3296
        %3526 = vmatprep.subr.bf16.mxu0 %v3313
        %3527 = vmatpush1.bf16.msra.mxu0 %v3312
        %3528 = vmatprep.subr.bf16.mxu0 %v3329
        %3529 = vmatpush1.bf16.msra.mxu0 %v3328
        %3530 = vmatprep.subr.bf16.mxu0 %v3345
        %3531 = vmatpush1.bf16.msra.mxu0 %v3344
        %3532 = vmatprep.subr.bf16.mxu0 %v3361
        %3533 = vmatpush1.bf16.msra.mxu0 %v3360
        %3534 = vmatprep.subr.bf16.mxu0 %v3377
        %3535 = vmatpush1.bf16.msra.mxu0 %v3376
        %3536 = vmatprep.subr.bf16.mxu0 %v3393
        %3537 = vmatpush1.bf16.msra.mxu0 %v3392
        %3538 = vmatprep.subr.bf16.mxu0 %v3409
        %3539 = vmatpush1.bf16.msra.mxu0 %v3408
        %3540 = vmatprep.subr.bf16.mxu0 %v3425
        %3541 = vmatpush1.bf16.msra.mxu0 %v3424
        %3542 = vmatprep.subr.bf16.mxu0 %v3441
        %3543 = vmatpush1.bf16.msra.mxu0 %v3440
        %3544 = vmatprep.subr.bf16.mxu0 %v3457
        %3545 = vmatpush1.bf16.msra.mxu0 %v3456
        %3546 = vmatprep.subr.bf16.mxu0 %v3473
        %3547 = vmatpush1.bf16.msra.mxu0 %v3472
        %3548 = vmatprep.subr.bf16.mxu0 %v3489
        %3549 = vmatpush1.bf16.msra.mxu0 %v3488
        %3550 = vmatprep.subr.bf16.mxu0 %v3505
        %3551 = vmatpush1.bf16.msra.mxu0 %v3504
        %3552 = vmatprep.mubr.bf16.mxu0 %v3135
        %3553 = vmatmul.mubr.bf16.gmra.mrb[0].mxu0 %v3134
        %v3554 = vpop.f32.mrb[0].mxu0
        %v3555 = vadd.f32 0.0, %v3554
        %v3556 = vpop.f32.mrb[0].mxu0
        %v3557 = vadd.f32 0.0, %v3556
        %v3558 = vpop.f32.mrb[0].mxu0
        %v3559 = vadd.f32 0.0, %v3558
        %v3560 = vpop.f32.mrb[0].mxu0
        %v3561 = vadd.f32 0.0, %v3560
        %3562 = vdwg.mxu0
        %3563 = vmatprep.subr.bf16.mxu0 %v3267
        %3564 = vmatpush1.bf16.msra.mxu0 %v3266
        %3565 = vmatprep.subr.bf16.mxu0 %v3283
        %3566 = vmatpush1.bf16.msra.mxu0 %v3282
        %3567 = vmatprep.subr.bf16.mxu0 %v3299
        %3568 = vmatpush1.bf16.msra.mxu0 %v3298
        %3569 = vmatprep.subr.bf16.mxu0 %v3315
        %3570 = vmatpush1.bf16.msra.mxu0 %v3314
        %3571 = vmatprep.subr.bf16.mxu0 %v3331
        %3572 = vmatpush1.bf16.msra.mxu0 %v3330
        %3573 = vmatprep.subr.bf16.mxu0 %v3347
        %3574 = vmatpush1.bf16.msra.mxu0 %v3346
        %3575 = vmatprep.subr.bf16.mxu0 %v3363
        %3576 = vmatpush1.bf16.msra.mxu0 %v3362
        %3577 = vmatprep.subr.bf16.mxu0 %v3379
        %3578 = vmatpush1.bf16.msra.mxu0 %v3378
        %3579 = vmatprep.subr.bf16.mxu0 %v3395
        %3580 = vmatpush1.bf16.msra.mxu0 %v3394
        %3581 = vmatprep.subr.bf16.mxu0 %v3411
        %3582 = vmatpush1.bf16.msra.mxu0 %v3410
        %3583 = vmatprep.subr.bf16.mxu0 %v3427
        %3584 = vmatpush1.bf16.msra.mxu0 %v3426
        %3585 = vmatprep.subr.bf16.mxu0 %v3443
        %3586 = vmatpush1.bf16.msra.mxu0 %v3442
        %3587 = vmatprep.subr.bf16.mxu0 %v3459
        %3588 = vmatpush1.bf16.msra.mxu0 %v3458
        %3589 = vmatprep.subr.bf16.mxu0 %v3475
        %3590 = vmatpush1.bf16.msra.mxu0 %v3474
        %3591 = vmatprep.subr.bf16.mxu0 %v3491
        %3592 = vmatpush1.bf16.msra.mxu0 %v3490
        %3593 = vmatprep.subr.bf16.mxu0 %v3507
        %3594 = vmatpush1.bf16.msra.mxu0 %v3506
        %3595 = vmatprep.mubr.bf16.mxu0 %v3135
        %3596 = vmatmul.mubr.bf16.gmra.mrb[0].mxu0 %v3134
        %v3597 = vpop.f32.mrb[0].mxu0
        %v3598 = vadd.f32 0.0, %v3597
        %v3599 = vpop.f32.mrb[0].mxu0
        %v3600 = vadd.f32 0.0, %v3599
        %v3601 = vpop.f32.mrb[0].mxu0
        %v3602 = vadd.f32 0.0, %v3601
        %v3603 = vpop.f32.mrb[0].mxu0
        %v3604 = vadd.f32 0.0, %v3603
        %3605 = vdwg.mxu0
        %3606 = vmatprep.subr.bf16.mxu0 %v3269
        %3607 = vmatpush1.bf16.msra.mxu0 %v3268
        %3608 = vmatprep.subr.bf16.mxu0 %v3285
        %3609 = vmatpush1.bf16.msra.mxu0 %v3284
        %3610 = vmatprep.subr.bf16.mxu0 %v3301
        %3611 = vmatpush1.bf16.msra.mxu0 %v3300
        %3612 = vmatprep.subr.bf16.mxu0 %v3317
        %3613 = vmatpush1.bf16.msra.mxu0 %v3316
        %3614 = vmatprep.subr.bf16.mxu0 %v3333
        %3615 = vmatpush1.bf16.msra.mxu0 %v3332
        %3616 = vmatprep.subr.bf16.mxu0 %v3349
        %3617 = vmatpush1.bf16.msra.mxu0 %v3348
        %3618 = vmatprep.subr.bf16.mxu0 %v3365
        %3619 = vmatpush1.bf16.msra.mxu0 %v3364
        %3620 = vmatprep.subr.bf16.mxu0 %v3381
        %3621 = vmatpush1.bf16.msra.mxu0 %v3380
        %3622 = vmatprep.subr.bf16.mxu0 %v3397
        %3623 = vmatpush1.bf16.msra.mxu0 %v3396
        %3624 = vmatprep.subr.bf16.mxu0 %v3413
        %3625 = vmatpush1.bf16.msra.mxu0 %v3412
        %3626 = vmatprep.subr.bf16.mxu0 %v3429
        %3627 = vmatpush1.bf16.msra.mxu0 %v3428
        %3628 = vmatprep.subr.bf16.mxu0 %v3445
        %3629 = vmatpush1.bf16.msra.mxu0 %v3444
        %3630 = vmatprep.subr.bf16.mxu0 %v3461
        %3631 = vmatpush1.bf16.msra.mxu0 %v3460
        %3632 = vmatprep.subr.bf16.mxu0 %v3477
        %3633 = vmatpush1.bf16.msra.mxu0 %v3476
        %3634 = vmatprep.subr.bf16.mxu0 %v3493
        %3635 = vmatpush1.bf16.msra.mxu0 %v3492
        %3636 = vmatprep.subr.bf16.mxu0 %v3509
        %3637 = vmatpush1.bf16.msra.mxu0 %v3508
        %3638 = vmatprep.mubr.bf16.mxu0 %v3135
        %3639 = vmatmul.mubr.bf16.gmra.mrb[0].mxu0 %v3134
        %v3640 = vpop.f32.mrb[0].mxu0
        %v3641 = vadd.f32 0.0, %v3640
        %v3642 = vpop.f32.mrb[0].mxu0
        %v3643 = vadd.f32 0.0, %v3642
        %v3644 = vpop.f32.mrb[0].mxu0
        %v3645 = vadd.f32 0.0, %v3644
        %v3646 = vpop.f32.mrb[0].mxu0
        %v3647 = vadd.f32 0.0, %v3646
        %3648 = vdwg.mxu0
        %3649 = vmatprep.subr.bf16.mxu0 %v3271
        %3650 = vmatpush1.bf16.msra.mxu0 %v3270
        %3651 = vmatprep.subr.bf16.mxu0 %v3287
        %3652 = vmatpush1.bf16.msra.mxu0 %v3286
        %3653 = vmatprep.subr.bf16.mxu0 %v3303
        %3654 = vmatpush1.bf16.msra.mxu0 %v3302
        %3655 = vmatprep.subr.bf16.mxu0 %v3319
        %3656 = vmatpush1.bf16.msra.mxu0 %v3318
        %3657 = vmatprep.subr.bf16.mxu0 %v3335
        %3658 = vmatpush1.bf16.msra.mxu0 %v3334
        %3659 = vmatprep.subr.bf16.mxu0 %v3351
        %3660 = vmatpush1.bf16.msra.mxu0 %v3350
        %3661 = vmatprep.subr.bf16.mxu0 %v3367
        %3662 = vmatpush1.bf16.msra.mxu0 %v3366
        %3663 = vmatprep.subr.bf16.mxu0 %v3383
        %3664 = vmatpush1.bf16.msra.mxu0 %v3382
        %3665 = vmatprep.subr.bf16.mxu0 %v3399
        %3666 = vmatpush1.bf16.msra.mxu0 %v3398
        %3667 = vmatprep.subr.bf16.mxu0 %v3415
        %3668 = vmatpush1.bf16.msra.mxu0 %v3414
        %3669 = vmatprep.subr.bf16.mxu0 %v3431
        %3670 = vmatpush1.bf16.msra.mxu0 %v3430
        %3671 = vmatprep.subr.bf16.mxu0 %v3447
        %3672 = vmatpush1.bf16.msra.mxu0 %v3446
        %3673 = vmatprep.subr.bf16.mxu0 %v3463
        %3674 = vmatpush1.bf16.msra.mxu0 %v3462
        %3675 = vmatprep.subr.bf16.mxu0 %v3479
        %3676 = vmatpush1.bf16.msra.mxu0 %v3478
        %3677 = vmatprep.subr.bf16.mxu0 %v3495
        %3678 = vmatpush1.bf16.msra.mxu0 %v3494
        %3679 = vmatprep.subr.bf16.mxu0 %v3511
        %3680 = vmatpush1.bf16.msra.mxu0 %v3510
        %3681 = vmatprep.mubr.bf16.mxu0 %v3135
        %3682 = vmatmul.mubr.bf16.gmra.mrb[0].mxu0 %v3134
        %v3683 = vpop.f32.mrb[0].mxu0
        %v3684 = vadd.f32 0.0, %v3683
        %v3685 = vpop.f32.mrb[0].mxu0
        %v3686 = vadd.f32 0.0, %v3685
        %v3687 = vpop.f32.mrb[0].mxu0
        %v3688 = vadd.f32 0.0, %v3687
        %v3689 = vpop.f32.mrb[0].mxu0
        %v3690 = vadd.f32 0.0, %v3689
        %3691 = vdwg.mxu0
        %3692 = vmatprep.subr.bf16.mxu0 %v3273
        %3693 = vmatpush1.bf16.msra.mxu0 %v3272
        %3694 = vmatprep.subr.bf16.mxu0 %v3289
        %3695 = vmatpush1.bf16.msra.mxu0 %v3288
        %3696 = vmatprep.subr.bf16.mxu0 %v3305
        %3697 = vmatpush1.bf16.msra.mxu0 %v3304
        %3698 = vmatprep.subr.bf16.mxu0 %v3321
        %3699 = vmatpush1.bf16.msra.mxu0 %v3320
        %3700 = vmatprep.subr.bf16.mxu0 %v3337
        %3701 = vmatpush1.bf16.msra.mxu0 %v3336
        %3702 = vmatprep.subr.bf16.mxu0 %v3353
        %3703 = vmatpush1.bf16.msra.mxu0 %v3352
        %3704 = vmatprep.subr.bf16.mxu0 %v3369
        %3705 = vmatpush1.bf16.msra.mxu0 %v3368
        %3706 = vmatprep.subr.bf16.mxu0 %v3385
        %3707 = vmatpush1.bf16.msra.mxu0 %v3384
        %3708 = vmatprep.subr.bf16.mxu0 %v3401
        %3709 = vmatpush1.bf16.msra.mxu0 %v3400
        %3710 = vmatprep.subr.bf16.mxu0 %v3417
        %3711 = vmatpush1.bf16.msra.mxu0 %v3416
        %3712 = vmatprep.subr.bf16.mxu0 %v3433
        %3713 = vmatpush1.bf16.msra.mxu0 %v3432
        %3714 = vmatprep.subr.bf16.mxu0 %v3449
        %3715 = vmatpush1.bf16.msra.mxu0 %v3448
        %3716 = vmatprep.subr.bf16.mxu0 %v3465
        %3717 = vmatpush1.bf16.msra.mxu0 %v3464
        %3718 = vmatprep.subr.bf16.mxu0 %v3481
        %3719 = vmatpush1.bf16.msra.mxu0 %v3480
        %3720 = vmatprep.subr.bf16.mxu0 %v3497
        %3721 = vmatpush1.bf16.msra.mxu0 %v3496
        %3722 = vmatprep.subr.bf16.mxu0 %v3513
        %3723 = vmatpush1.bf16.msra.mxu0 %v3512
        %3724 = vmatprep.mubr.bf16.mxu0 %v3135
        %3725 = vmatmul.mubr.bf16.gmra.mrb[0].mxu0 %v3134
        %v3726 = vpop.f32.mrb[0].mxu0
        %v3727 = vadd.f32 0.0, %v3726
        %v3728 = vpop.f32.mrb[0].mxu0
        %v3729 = vadd.f32 0.0, %v3728
        %v3730 = vpop.f32.mrb[0].mxu0
        %v3731 = vadd.f32 0.0, %v3730
        %v3732 = vpop.f32.mrb[0].mxu0
        %v3733 = vadd.f32 0.0, %v3732
        %3734 = vdwg.mxu0
        %3735 = vmatprep.subr.bf16.mxu0 %v3275
        %3736 = vmatpush1.bf16.msra.mxu0 %v3274
        %3737 = vmatprep.subr.bf16.mxu0 %v3291
        %3738 = vmatpush1.bf16.msra.mxu0 %v3290
        %3739 = vmatprep.subr.bf16.mxu0 %v3307
        %3740 = vmatpush1.bf16.msra.mxu0 %v3306
        %3741 = vmatprep.subr.bf16.mxu0 %v3323
        %3742 = vmatpush1.bf16.msra.mxu0 %v3322
        %3743 = vmatprep.subr.bf16.mxu0 %v3339
        %3744 = vmatpush1.bf16.msra.mxu0 %v3338
        %3745 = vmatprep.subr.bf16.mxu0 %v3355
        %3746 = vmatpush1.bf16.msra.mxu0 %v3354
        %3747 = vmatprep.subr.bf16.mxu0 %v3371
        %3748 = vmatpush1.bf16.msra.mxu0 %v3370
        %3749 = vmatprep.subr.bf16.mxu0 %v3387
        %3750 = vmatpush1.bf16.msra.mxu0 %v3386
        %3751 = vmatprep.subr.bf16.mxu0 %v3403
        %3752 = vmatpush1.bf16.msra.mxu0 %v3402
        %3753 = vmatprep.subr.bf16.mxu0 %v3419
        %3754 = vmatpush1.bf16.msra.mxu0 %v3418
        %3755 = vmatprep.subr.bf16.mxu0 %v3435
        %3756 = vmatpush1.bf16.msra.mxu0 %v3434
        %3757 = vmatprep.subr.bf16.mxu0 %v3451
        %3758 = vmatpush1.bf16.msra.mxu0 %v3450
        %3759 = vmatprep.subr.bf16.mxu0 %v3467
        %3760 = vmatpush1.bf16.msra.mxu0 %v3466
        %3761 = vmatprep.subr.bf16.mxu0 %v3483
        %3762 = vmatpush1.bf16.msra.mxu0 %v3482
        %3763 = vmatprep.subr.bf16.mxu0 %v3499
        %3764 = vmatpush1.bf16.msra.mxu0 %v3498
        %3765 = vmatprep.subr.bf16.mxu0 %v3515
        %3766 = vmatpush1.bf16.msra.mxu0 %v3514
        %3767 = vmatprep.mubr.bf16.mxu0 %v3135
        %3768 = vmatmul.mubr.bf16.gmra.mrb[0].mxu0 %v3134
        %v3769 = vpop.f32.mrb[0].mxu0
        %v3770 = vadd.f32 0.0, %v3769
        %v3771 = vpop.f32.mrb[0].mxu0
        %v3772 = vadd.f32 0.0, %v3771
        %v3773 = vpop.f32.mrb[0].mxu0
        %v3774 = vadd.f32 0.0, %v3773
        %v3775 = vpop.f32.mrb[0].mxu0
        %v3776 = vadd.f32 0.0, %v3775
        %3777 = vdwg.mxu0
        %3778 = vmatprep.subr.bf16.mxu0 %v3277
        %3779 = vmatpush1.bf16.msra.mxu0 %v3276
        %3780 = vmatprep.subr.bf16.mxu0 %v3293
        %3781 = vmatpush1.bf16.msra.mxu0 %v3292
        %3782 = vmatprep.subr.bf16.mxu0 %v3309
        %3783 = vmatpush1.bf16.msra.mxu0 %v3308
        %3784 = vmatprep.subr.bf16.mxu0 %v3325
        %3785 = vmatpush1.bf16.msra.mxu0 %v3324
        %3786 = vmatprep.subr.bf16.mxu0 %v3341
        %3787 = vmatpush1.bf16.msra.mxu0 %v3340
        %3788 = vmatprep.subr.bf16.mxu0 %v3357
        %3789 = vmatpush1.bf16.msra.mxu0 %v3356
        %3790 = vmatprep.subr.bf16.mxu0 %v3373
        %3791 = vmatpush1.bf16.msra.mxu0 %v3372
        %3792 = vmatprep.subr.bf16.mxu0 %v3389
        %3793 = vmatpush1.bf16.msra.mxu0 %v3388
        %3794 = vmatprep.subr.bf16.mxu0 %v3405
        %3795 = vmatpush1.bf16.msra.mxu0 %v3404
        %3796 = vmatprep.subr.bf16.mxu0 %v3421
        %3797 = vmatpush1.bf16.msra.mxu0 %v3420
        %3798 = vmatprep.subr.bf16.mxu0 %v3437
        %3799 = vmatpush1.bf16.msra.mxu0 %v3436
        %3800 = vmatprep.subr.bf16.mxu0 %v3453
        %3801 = vmatpush1.bf16.msra.mxu0 %v3452
        %3802 = vmatprep.subr.bf16.mxu0 %v3469
        %3803 = vmatpush1.bf16.msra.mxu0 %v3468
        %3804 = vmatprep.subr.bf16.mxu0 %v3485
        %3805 = vmatpush1.bf16.msra.mxu0 %v3484
        %3806 = vmatprep.subr.bf16.mxu0 %v3501
        %3807 = vmatpush1.bf16.msra.mxu0 %v3500
        %3808 = vmatprep.subr.bf16.mxu0 %v3517
        %3809 = vmatpush1.bf16.msra.mxu0 %v3516
        %3810 = vmatprep.mubr.bf16.mxu0 %v3135
        %3811 = vmatmul.mubr.bf16.gmra.mrb[0].mxu0 %v3134
        %v3812 = vpop.f32.mrb[0].mxu0
        %v3813 = vadd.f32 0.0, %v3812
        %v3814 = vpop.f32.mrb[0].mxu0
        %v3815 = vadd.f32 0.0, %v3814
        %v3816 = vpop.f32.mrb[0].mxu0
        %v3817 = vadd.f32 0.0, %v3816
        %v3818 = vpop.f32.mrb[0].mxu0
        %v3819 = vadd.f32 0.0, %v3818
        %3820 = vdwg.mxu0
        %3821 = vmatprep.subr.bf16.mxu0 %v3279
        %3822 = vmatpush1.bf16.msra.mxu0 %v3278
        %3823 = vmatprep.subr.bf16.mxu0 %v3295
        %3824 = vmatpush1.bf16.msra.mxu0 %v3294
        %3825 = vmatprep.subr.bf16.mxu0 %v3311
        %3826 = vmatpush1.bf16.msra.mxu0 %v3310
        %3827 = vmatprep.subr.bf16.mxu0 %v3327
        %3828 = vmatpush1.bf16.msra.mxu0 %v3326
        %3829 = vmatprep.subr.bf16.mxu0 %v3343
        %3830 = vmatpush1.bf16.msra.mxu0 %v3342
        %3831 = vmatprep.subr.bf16.mxu0 %v3359
        %3832 = vmatpush1.bf16.msra.mxu0 %v3358
        %3833 = vmatprep.subr.bf16.mxu0 %v3375
        %3834 = vmatpush1.bf16.msra.mxu0 %v3374
        %3835 = vmatprep.subr.bf16.mxu0 %v3391
        %3836 = vmatpush1.bf16.msra.mxu0 %v3390
        %3837 = vmatprep.subr.bf16.mxu0 %v3407
        %3838 = vmatpush1.bf16.msra.mxu0 %v3406
        %3839 = vmatprep.subr.bf16.mxu0 %v3423
        %3840 = vmatpush1.bf16.msra.mxu0 %v3422
        %3841 = vmatprep.subr.bf16.mxu0 %v3439
        %3842 = vmatpush1.bf16.msra.mxu0 %v3438
        %3843 = vmatprep.subr.bf16.mxu0 %v3455
        %3844 = vmatpush1.bf16.msra.mxu0 %v3454
        %3845 = vmatprep.subr.bf16.mxu0 %v3471
        %3846 = vmatpush1.bf16.msra.mxu0 %v3470
        %3847 = vmatprep.subr.bf16.mxu0 %v3487
        %3848 = vmatpush1.bf16.msra.mxu0 %v3486
        %3849 = vmatprep.subr.bf16.mxu0 %v3503
        %3850 = vmatpush1.bf16.msra.mxu0 %v3502
        %3851 = vmatprep.subr.bf16.mxu0 %v3519
        %3852 = vmatpush1.bf16.msra.mxu0 %v3518
        %3853 = vmatprep.mubr.bf16.mxu0 %v3135
        %3854 = vmatmul.mubr.bf16.gmra.mrb[0].mxu0 %v3134
        %v3855 = vpop.f32.mrb[0].mxu0
        %v3856 = vadd.f32 0.0, %v3855
        %v3857 = vpop.f32.mrb[0].mxu0
        %v3858 = vadd.f32 0.0, %v3857
        %v3859 = vpop.f32.mrb[0].mxu0
        %v3860 = vadd.f32 0.0, %v3859
        %v3861 = vpop.f32.mrb[0].mxu0
        %v3862 = vadd.f32 0.0, %v3861
        %3863 = vdwg.mxu0
        %v3864 = vld [vmem:[%s918] sm:$0xff]
        %v3865 = vld [vmem:[%s918 + $0x8] sm:$0xff]
        %v3868 = vlaneseq
        %v3869 = vshrl.u32 %v3868, 7
        %v3870 = vsub.s32 0, %v3869
        %v3871 = vrot.slane %v3864, %v3870
        %v3872 = vlaneseq
        %v3873 = vshrl.u32 %v3872, 7
        %v3874 = vsub.s32 1, %v3873
        %v3875 = vrot.slane %v3864, %v3874
        %v3876 = vlaneseq
        %v3877 = vshrl.u32 %v3876, 7
        %v3878 = vsub.s32 2, %v3877
        %v3879 = vrot.slane %v3864, %v3878
        %v3880 = vlaneseq
        %v3881 = vshrl.u32 %v3880, 7
        %v3882 = vsub.s32 3, %v3881
        %v3883 = vrot.slane %v3864, %v3882
        %v3884 = vlaneseq
        %v3885 = vshrl.u32 %v3884, 7
        %v3886 = vsub.s32 4, %v3885
        %v3887 = vrot.slane %v3864, %v3886
        %v3888 = vlaneseq
        %v3889 = vshrl.u32 %v3888, 7
        %v3890 = vsub.s32 5, %v3889
        %v3891 = vrot.slane %v3864, %v3890
        %v3892 = vlaneseq
        %v3893 = vshrl.u32 %v3892, 7
        %v3894 = vsub.s32 6, %v3893
        %v3895 = vrot.slane %v3864, %v3894
        %v3896 = vlaneseq
        %v3897 = vshrl.u32 %v3896, 7
        %v3898 = vsub.s32 7, %v3897
        %v3899 = vrot.slane %v3864, %v3898
        %v3900 = vlaneseq
        %v3901 = vshrl.u32 %v3900, 7
        %v3902 = vsub.s32 0, %v3901
        %v3903 = vrot.slane %v3865, %v3902
        %v3904 = vlaneseq
        %v3905 = vshrl.u32 %v3904, 7
        %v3906 = vsub.s32 1, %v3905
        %v3907 = vrot.slane %v3865, %v3906
        %v3908 = vlaneseq
        %v3909 = vshrl.u32 %v3908, 7
        %v3910 = vsub.s32 2, %v3909
        %v3911 = vrot.slane %v3865, %v3910
        %v3912 = vlaneseq
        %v3913 = vshrl.u32 %v3912, 7
        %v3914 = vsub.s32 3, %v3913
        %v3915 = vrot.slane %v3865, %v3914
        %v3916 = vlaneseq
        %v3917 = vshrl.u32 %v3916, 7
        %v3918 = vsub.s32 4, %v3917
        %v3919 = vrot.slane %v3865, %v3918
        %v3920 = vlaneseq
        %v3921 = vshrl.u32 %v3920, 7
        %v3922 = vsub.s32 5, %v3921
        %v3923 = vrot.slane %v3865, %v3922
        %v3924 = vlaneseq
        %v3925 = vshrl.u32 %v3924, 7
        %v3926 = vsub.s32 6, %v3925
        %v3927 = vrot.slane %v3865, %v3926
        %v3928 = vlaneseq
        %v3929 = vshrl.u32 %v3928, 7
        %v3930 = vsub.s32 7, %v3929
        %v3931 = vrot.slane %v3865, %v3930
        %v3948 = vmul.f32 %v3555, %v3871
        %v3949 = vmul.f32 %v3557, %v3875
        %v3950 = vmul.f32 %v3598, %v3879
        %v3951 = vmul.f32 %v3600, %v3883
        %v3952 = vmul.f32 %v3641, %v3887
        %v3953 = vmul.f32 %v3643, %v3891
        %v3954 = vmul.f32 %v3684, %v3895
        %v3955 = vmul.f32 %v3686, %v3899
        %v3956 = vmul.f32 %v3727, %v3903
        %v3957 = vmul.f32 %v3729, %v3907
        %v3958 = vmul.f32 %v3770, %v3911
        %v3959 = vmul.f32 %v3772, %v3915
        %v3960 = vmul.f32 %v3813, %v3919
        %v3961 = vmul.f32 %v3815, %v3923
        %v3962 = vmul.f32 %v3856, %v3927
        %v3963 = vmul.f32 %v3858, %v3931
        %v3964 = vmul.f32 %v3559, %v3871
        %v3965 = vmul.f32 %v3561, %v3875
        %v3966 = vmul.f32 %v3602, %v3879
        %v3967 = vmul.f32 %v3604, %v3883
        %v3968 = vmul.f32 %v3645, %v3887
        %v3969 = vmul.f32 %v3647, %v3891
        %v3970 = vmul.f32 %v3688, %v3895
        %v3971 = vmul.f32 %v3690, %v3899
        %v3972 = vmul.f32 %v3731, %v3903
        %v3973 = vmul.f32 %v3733, %v3907
        %v3974 = vmul.f32 %v3774, %v3911
        %v3975 = vmul.f32 %v3776, %v3915
        %v3976 = vmul.f32 %v3817, %v3919
        %v3977 = vmul.f32 %v3819, %v3923
        %v3978 = vmul.f32 %v3860, %v3927
        %v3979 = vmul.f32 %v3862, %v3931
        %v3980 = vld [vmem:[%s927] sm:$0xff]
        %v3981 = vld [vmem:[%s927 + $0x8] sm:$0xff]
        %v3984 = vlaneseq
        %v3985 = vshrl.u32 %v3984, 7
        %v3986 = vsub.s32 0, %v3985
        %v3987 = vrot.slane %v3980, %v3986
        %v3988 = vlaneseq
        %v3989 = vshrl.u32 %v3988, 7
        %v3990 = vsub.s32 1, %v3989
        %v3991 = vrot.slane %v3980, %v3990
        %v3992 = vlaneseq
        %v3993 = vshrl.u32 %v3992, 7
        %v3994 = vsub.s32 2, %v3993
        %v3995 = vrot.slane %v3980, %v3994
        %v3996 = vlaneseq
        %v3997 = vshrl.u32 %v3996, 7
        %v3998 = vsub.s32 3, %v3997
        %v3999 = vrot.slane %v3980, %v3998
        %v4000 = vlaneseq
        %v4001 = vshrl.u32 %v4000, 7
        %v4002 = vsub.s32 4, %v4001
        %v4003 = vrot.slane %v3980, %v4002
        %v4004 = vlaneseq
        %v4005 = vshrl.u32 %v4004, 7
        %v4006 = vsub.s32 5, %v4005
        %v4007 = vrot.slane %v3980, %v4006
        %v4008 = vlaneseq
        %v4009 = vshrl.u32 %v4008, 7
        %v4010 = vsub.s32 6, %v4009
        %v4011 = vrot.slane %v3980, %v4010
        %v4012 = vlaneseq
        %v4013 = vshrl.u32 %v4012, 7
        %v4014 = vsub.s32 7, %v4013
        %v4015 = vrot.slane %v3980, %v4014
        %v4016 = vlaneseq
        %v4017 = vshrl.u32 %v4016, 7
        %v4018 = vsub.s32 0, %v4017
        %v4019 = vrot.slane %v3981, %v4018
        %v4020 = vlaneseq
        %v4021 = vshrl.u32 %v4020, 7
        %v4022 = vsub.s32 1, %v4021
        %v4023 = vrot.slane %v3981, %v4022
        %v4024 = vlaneseq
        %v4025 = vshrl.u32 %v4024, 7
        %v4026 = vsub.s32 2, %v4025
        %v4027 = vrot.slane %v3981, %v4026
        %v4028 = vlaneseq
        %v4029 = vshrl.u32 %v4028, 7
        %v4030 = vsub.s32 3, %v4029
        %v4031 = vrot.slane %v3981, %v4030
        %v4032 = vlaneseq
        %v4033 = vshrl.u32 %v4032, 7
        %v4034 = vsub.s32 4, %v4033
        %v4035 = vrot.slane %v3981, %v4034
        %v4036 = vlaneseq
        %v4037 = vshrl.u32 %v4036, 7
        %v4038 = vsub.s32 5, %v4037
        %v4039 = vrot.slane %v3981, %v4038
        %v4040 = vlaneseq
        %v4041 = vshrl.u32 %v4040, 7
        %v4042 = vsub.s32 6, %v4041
        %v4043 = vrot.slane %v3981, %v4042
        %v4044 = vlaneseq
        %v4045 = vshrl.u32 %v4044, 7
        %v4046 = vsub.s32 7, %v4045
        %v4047 = vrot.slane %v3981, %v4046
        %v4064 = vadd.f32 %v3948, %v3987
        %v4065 = vadd.f32 %v3949, %v3991
        %v4066 = vadd.f32 %v3950, %v3995
        %v4067 = vadd.f32 %v3951, %v3999
        %v4068 = vadd.f32 %v3952, %v4003
        %v4069 = vadd.f32 %v3953, %v4007
        %v4070 = vadd.f32 %v3954, %v4011
        %v4071 = vadd.f32 %v3955, %v4015
        %v4072 = vadd.f32 %v3956, %v4019
        %v4073 = vadd.f32 %v3957, %v4023
        %v4074 = vadd.f32 %v3958, %v4027
        %v4075 = vadd.f32 %v3959, %v4031
        %v4076 = vadd.f32 %v3960, %v4035
        %v4077 = vadd.f32 %v3961, %v4039
        %v4078 = vadd.f32 %v3962, %v4043
        %v4079 = vadd.f32 %v3963, %v4047
        %v4080 = vadd.f32 %v3964, %v3987
        %v4081 = vadd.f32 %v3965, %v3991
        %v4082 = vadd.f32 %v3966, %v3995
        %v4083 = vadd.f32 %v3967, %v3999
        %v4084 = vadd.f32 %v3968, %v4003
        %v4085 = vadd.f32 %v3969, %v4007
        %v4086 = vadd.f32 %v3970, %v4011
        %v4087 = vadd.f32 %v3971, %v4015
        %v4088 = vadd.f32 %v3972, %v4019
        %v4089 = vadd.f32 %v3973, %v4023
        %v4090 = vadd.f32 %v3974, %v4027
        %v4091 = vadd.f32 %v3975, %v4031
        %v4092 = vadd.f32 %v3976, %v4035
        %v4093 = vadd.f32 %v3977, %v4039
        %v4094 = vadd.f32 %v3978, %v4043
        %v4095 = vadd.f32 %v3979, %v4047
        %v4096 = vmul.f32 %v4064, 0.5
        %v4097 = vmul.f32 %v4065, 0.5
        %v4098 = vmul.f32 %v4066, 0.5
        %v4099 = vmul.f32 %v4067, 0.5
        %v4100 = vmul.f32 %v4068, 0.5
        %v4101 = vmul.f32 %v4069, 0.5
        %v4102 = vmul.f32 %v4070, 0.5
        %v4103 = vmul.f32 %v4071, 0.5
        %v4104 = vmul.f32 %v4080, 0.5
        %v4105 = vmul.f32 %v4081, 0.5
        %v4106 = vmul.f32 %v4082, 0.5
        %v4107 = vmul.f32 %v4083, 0.5
        %v4108 = vmul.f32 %v4084, 0.5
        %v4109 = vmul.f32 %v4085, 0.5
        %v4110 = vmul.f32 %v4086, 0.5
        %v4111 = vmul.f32 %v4087, 0.5
        %v4112 = vtanh.pop %v4096
        %v4113 = vtanh.pop %v4097
        %v4114 = vtanh.pop %v4098
        %v4115 = vtanh.pop %v4099
        %v4116 = vtanh.pop %v4100
        %v4117 = vtanh.pop %v4101
        %v4118 = vtanh.pop %v4102
        %v4119 = vtanh.pop %v4103
        %v4120 = vtanh.pop %v4104
        %v4121 = vtanh.pop %v4105
        %v4122 = vtanh.pop %v4106
        %v4123 = vtanh.pop %v4107
        %v4124 = vtanh.pop %v4108
        %v4125 = vtanh.pop %v4109
        %v4126 = vtanh.pop %v4110
        %v4127 = vtanh.pop %v4111
        %v4128 = vmul.f32 %v4112, 2.0
        %v4129 = vmul.f32 %v4113, 2.0
        %v4130 = vmul.f32 %v4114, 2.0
        %v4131 = vmul.f32 %v4115, 2.0
        %v4132 = vmul.f32 %v4116, 2.0
        %v4133 = vmul.f32 %v4117, 2.0
        %v4134 = vmul.f32 %v4118, 2.0
        %v4135 = vmul.f32 %v4119, 2.0
        %v4136 = vmul.f32 %v4120, 2.0
        %v4137 = vmul.f32 %v4121, 2.0
        %v4138 = vmul.f32 %v4122, 2.0
        %v4139 = vmul.f32 %v4123, 2.0
        %v4140 = vmul.f32 %v4124, 2.0
        %v4141 = vmul.f32 %v4125, 2.0
        %v4142 = vmul.f32 %v4126, 2.0
        %v4143 = vmul.f32 %v4127, 2.0
        %v4144 = vmul.f32 %v4128, 1.442695
        %v4145 = vpow.pop %v4144
        %v4146 = vmul.f32 %v4129, 1.442695
        %v4147 = vpow.pop %v4146
        %v4148 = vmul.f32 %v4130, 1.442695
        %v4149 = vpow.pop %v4148
        %v4150 = vmul.f32 %v4131, 1.442695
        %v4151 = vpow.pop %v4150
        %v4152 = vmul.f32 %v4132, 1.442695
        %v4153 = vpow.pop %v4152
        %v4154 = vmul.f32 %v4133, 1.442695
        %v4155 = vpow.pop %v4154
        %v4156 = vmul.f32 %v4134, 1.442695
        %v4157 = vpow.pop %v4156
        %v4158 = vmul.f32 %v4135, 1.442695
        %v4159 = vpow.pop %v4158
        %v4160 = vmul.f32 %v4136, 1.442695
        %v4161 = vpow.pop %v4160
        %v4162 = vmul.f32 %v4137, 1.442695
        %v4163 = vpow.pop %v4162
        %v4164 = vmul.f32 %v4138, 1.442695
        %v4165 = vpow.pop %v4164
        %v4166 = vmul.f32 %v4139, 1.442695
        %v4167 = vpow.pop %v4166
        %v4168 = vmul.f32 %v4140, 1.442695
        %v4169 = vpow.pop %v4168
        %v4170 = vmul.f32 %v4141, 1.442695
        %v4171 = vpow.pop %v4170
        %v4172 = vmul.f32 %v4142, 1.442695
        %v4173 = vpow.pop %v4172
        %v4174 = vmul.f32 %v4143, 1.442695
        %v4175 = vpow.pop %v4174
        %v4176 = vmul.f32 %v2643, %v4145
        %v4177 = vmul.f32 %v2644, %v4147
        %v4178 = vmul.f32 %v2645, %v4149
        %v4179 = vmul.f32 %v2646, %v4151
        %v4180 = vmul.f32 %v2647, %v4153
        %v4181 = vmul.f32 %v2648, %v4155
        %v4182 = vmul.f32 %v2649, %v4157
        %v4183 = vmul.f32 %v2650, %v4159
        %v4184 = vmul.f32 %v2651, %v4161
        %v4185 = vmul.f32 %v2652, %v4163
        %v4186 = vmul.f32 %v2653, %v4165
        %v4187 = vmul.f32 %v2654, %v4167
        %v4188 = vmul.f32 %v2655, %v4169
        %v4189 = vmul.f32 %v2656, %v4171
        %v4190 = vmul.f32 %v2657, %v4173
        %v4191 = vmul.f32 %v2658, %v4175
        %v4192 = vadd.f32 %v4176, %v4072
        %v4193 = vadd.f32 %v4177, %v4073
        %v4194 = vadd.f32 %v4178, %v4074
        %v4195 = vadd.f32 %v4179, %v4075
        %v4196 = vadd.f32 %v4180, %v4076
        %v4197 = vadd.f32 %v4181, %v4077
        %v4198 = vadd.f32 %v4182, %v4078
        %v4199 = vadd.f32 %v4183, %v4079
        %v4200 = vadd.f32 %v4184, %v4088
        %v4201 = vadd.f32 %v4185, %v4089
        %v4202 = vadd.f32 %v4186, %v4090
        %v4203 = vadd.f32 %v4187, %v4091
        %v4204 = vadd.f32 %v4188, %v4092
        %v4205 = vadd.f32 %v4189, %v4093
        %v4206 = vadd.f32 %v4190, %v4094
        %v4207 = vadd.f32 %v4191, %v4095
        %4208 = vst [vmem:[%s16] sm:$0xff] %v4192
        %4209 = vst [vmem:[%s16 + $0x8] sm:$0xff] %v4193
        %4210 = vst [vmem:[%s16 + $0x10] sm:$0xff] %v4194
        %4211 = vst [vmem:[%s16 + $0x18] sm:$0xff] %v4195
        %4212 = vst [vmem:[%s16 + $0x20] sm:$0xff] %v4196
        %4213 = vst [vmem:[%s16 + $0x28] sm:$0xff] %v4197
        %4214 = vst [vmem:[%s16 + $0x30] sm:$0xff] %v4198
        %4215 = vst [vmem:[%s16 + $0x38] sm:$0xff] %v4199
        %4216 = vst [vmem:[%s16 + $0x40] sm:$0xff] %v4200
        %4217 = vst [vmem:[%s16 + $0x48] sm:$0xff] %v4201
        %4218 = vst [vmem:[%s16 + $0x50] sm:$0xff] %v4202
        %4219 = vst [vmem:[%s16 + $0x58] sm:$0xff] %v4203
        %4220 = vst [vmem:[%s16 + $0x60] sm:$0xff] %v4204
        %4221 = vst [vmem:[%s16 + $0x68] sm:$0xff] %v4205
        %4222 = vst [vmem:[%s16 + $0x70] sm:$0xff] %v4206
        %4223 = vst [vmem:[%s16 + $0x78] sm:$0xff] %v4207
        %v4224 = vld [vmem:[%s17] sm:$0xff]
        %v4225 = vld [vmem:[%s17 + $0x8] sm:$0xff]
        %v4226 = vld [vmem:[%s17 + $0x10] sm:$0xff]
        %v4227 = vld [vmem:[%s17 + $0x18] sm:$0xff]
        %v4228 = vld [vmem:[%s17 + $0x20] sm:$0xff]
        %v4229 = vld [vmem:[%s17 + $0x28] sm:$0xff]
        %v4230 = vld [vmem:[%s17 + $0x30] sm:$0xff]
        %v4231 = vld [vmem:[%s17 + $0x38] sm:$0xff]
        %v4232 = vld [vmem:[%s17 + $0x40] sm:$0xff]
        %v4233 = vld [vmem:[%s17 + $0x48] sm:$0xff]
        %v4234 = vld [vmem:[%s17 + $0x50] sm:$0xff]
        %v4235 = vld [vmem:[%s17 + $0x58] sm:$0xff]
        %v4236 = vld [vmem:[%s17 + $0x60] sm:$0xff]
        %v4237 = vld [vmem:[%s17 + $0x68] sm:$0xff]
        %v4238 = vld [vmem:[%s17 + $0x70] sm:$0xff]
        %v4239 = vld [vmem:[%s17 + $0x78] sm:$0xff]
        %v4240 = vadd.f32 %v4224, %v2579
        %v4241 = vadd.f32 %v4225, %v2580
        %v4242 = vadd.f32 %v4226, %v2581
        %v4243 = vadd.f32 %v4227, %v2582
        %v4244 = vadd.f32 %v4228, %v2583
        %v4245 = vadd.f32 %v4229, %v2584
        %v4246 = vadd.f32 %v4230, %v2585
        %v4247 = vadd.f32 %v4231, %v2586
        %v4248 = vadd.f32 %v4232, %v2587
        %v4249 = vadd.f32 %v4233, %v2588
        %v4250 = vadd.f32 %v4234, %v2589
        %v4251 = vadd.f32 %v4235, %v2590
        %v4252 = vadd.f32 %v4236, %v2591
        %v4253 = vadd.f32 %v4237, %v2592
        %v4254 = vadd.f32 %v4238, %v2593
        %v4255 = vadd.f32 %v4239, %v2594
        %v4256 = vadd.f32 %v4240, %v4128
        %v4257 = vadd.f32 %v4241, %v4129
        %v4258 = vadd.f32 %v4242, %v4130
        %v4259 = vadd.f32 %v4243, %v4131
        %v4260 = vadd.f32 %v4244, %v4132
        %v4261 = vadd.f32 %v4245, %v4133
        %v4262 = vadd.f32 %v4246, %v4134
        %v4263 = vadd.f32 %v4247, %v4135
        %v4264 = vadd.f32 %v4248, %v4136
        %v4265 = vadd.f32 %v4249, %v4137
        %v4266 = vadd.f32 %v4250, %v4138
        %v4267 = vadd.f32 %v4251, %v4139
        %v4268 = vadd.f32 %v4252, %v4140
        %v4269 = vadd.f32 %v4253, %v4141
        %v4270 = vadd.f32 %v4254, %v4142
        %v4271 = vadd.f32 %v4255, %v4143
        %4272 = vst [vmem:[%s17] sm:$0xff] %v4256
        %4273 = vst [vmem:[%s17 + $0x8] sm:$0xff] %v4257
        %4274 = vst [vmem:[%s17 + $0x10] sm:$0xff] %v4258
        %4275 = vst [vmem:[%s17 + $0x18] sm:$0xff] %v4259
        %4276 = vst [vmem:[%s17 + $0x20] sm:$0xff] %v4260
        %4277 = vst [vmem:[%s17 + $0x28] sm:$0xff] %v4261
        %4278 = vst [vmem:[%s17 + $0x30] sm:$0xff] %v4262
        %4279 = vst [vmem:[%s17 + $0x38] sm:$0xff] %v4263
        %4280 = vst [vmem:[%s17 + $0x40] sm:$0xff] %v4264
        %4281 = vst [vmem:[%s17 + $0x48] sm:$0xff] %v4265
        %4282 = vst [vmem:[%s17 + $0x50] sm:$0xff] %v4266
        %4283 = vst [vmem:[%s17 + $0x58] sm:$0xff] %v4267
        %4284 = vst [vmem:[%s17 + $0x60] sm:$0xff] %v4268
        %4285 = vst [vmem:[%s17 + $0x68] sm:$0xff] %v4269
        %4286 = vst [vmem:[%s17 + $0x70] sm:$0xff] %v4270
        %4287 = vst [vmem:[%s17 + $0x78] sm:$0xff] %v4271
        // Predicated region
        $region145: #{sketch_inn_forward.1} parent=83 // pred_check
          %p4288 = pneg %p472
        $region146: #{sketch_inn_forward.1} parent=83 // pred_check_branch
          %4290 = sbr.rel (%p4288) target = $region148
        $region147: #{sketch_inn_forward.1} parent=83 // pred_region
          _
        $region148: #{sketch_inn_forward.1} parent=83 // pred_fallthru
          _
        // Predicated region
        $region149: #{sketch_inn_forward.1} parent=83 // pred_check
          %p4291 = pneg %p493
        $region150: #{sketch_inn_forward.1} parent=83 // pred_check_branch
          %4293 = sbr.rel (%p4291) target = $region152
        $region151: #{sketch_inn_forward.1} parent=83 // pred_region
          _
        $region152: #{sketch_inn_forward.1} parent=83 // pred_fallthru
          _
        // Predicated region
        $region153: #{sketch_inn_forward.1} parent=83 // pred_check
          %p4294 = pneg %p472
        $region154: #{sketch_inn_forward.1} parent=83 // pred_check_branch
          %4296 = sbr.rel (%p4294) target = $region156
        $region155: #{sketch_inn_forward.1} parent=83 // pred_region
          _
        $region156: #{sketch_inn_forward.1} parent=83 // pred_fallthru
          _
        // Predicated region
        $region157: #{sketch_inn_forward.1} parent=83 // pred_check
          %p4297 = pneg %p493
        $region158: #{sketch_inn_forward.1} parent=83 // pred_check_branch
          %4299 = sbr.rel (%p4297) target = $region160
        $region159: #{sketch_inn_forward.1} parent=83 // pred_region
          _
        $region160: #{sketch_inn_forward.1} parent=83 // pred_fallthru
          _
      $region84: #{sketch_inn_forward.1} parent=5 // pred_fallthru
        _
      %p4300 = scmp.le.s32.totalorder 2, %s48
      // Predicated region
      $region161: #{sketch_inn_forward.1} parent=5 // pred_check
        %p4301 = pneg %p4300
      $region162: #{sketch_inn_forward.1} parent=5 // pred_check_branch
        %4303 = sbr.rel (%p4301) target = $region164
      $region163: #{sketch_inn_forward.1} parent=5 // pred_region
        %s4304 = ssub.s32 %s48, 2
      $region164: #{sketch_inn_forward.1} parent=5 // pred_fallthru
        _
    $region6: #{sketch_inn_forward.1} parent=1 // loop_footer
      %s52 = sadd.s32 1, %s48
    $region7: #{sketch_inn_forward.1} parent=1 // loop_footer_branch
      %47 = sbr.rel target = $region3
    $region8: #{sketch_inn_forward.1} parent=1 // loop_exit
      _
    %4305 = vsyncpa [#allocation3], 1
    %s4306 = scalar_lea.sflag [#allocation3], 1
    %4307 = vsyncpa %s4306, 1
    %4308 = vsyncpa [#allocation5], 1
    %s4309 = scalar_lea.sflag [#allocation5], 1
    %4310 = vsyncpa %s4309, 1
    %4311 = vsyncpa [#allocation8], 1
    %s4312 = scalar_lea.sflag [#allocation8], 1
    %4313 = vsyncpa %s4312, 1
    %4314 = vsyncpa [#allocation11], 1
    %s4315 = scalar_lea.sflag [#allocation11], 1
    %4316 = vsyncpa %s4315, 1
    %4317 = vsyncpa [#allocation14], 1
    %s4318 = scalar_lea.sflag [#allocation14], 1
    %4319 = vsyncpa %s4318, 1
    %4320 = vsyncpa [#allocation17], 1
    %s4321 = scalar_lea.sflag [#allocation17], 1
    %4322 = vsyncpa %s4321, 1
    %4323 = vsyncpa [#allocation20], 1
    %s4324 = scalar_lea.sflag [#allocation20], 1
    %4325 = vsyncpa %s4324, 1
    %4326 = vsyncpa [#allocation23], 1
    %s4327 = scalar_lea.sflag [#allocation23], 1
    %4328 = vsyncpa %s4327, 1

</llo_original>
